<compile_context>
chip_gen: v5e
topology: v5e:2x2
jax: 0.10.0
libtpu: 0.0.40
codegen_flags: <defaults>
</compile_context>

<pallas_src>
import functools

import jax
import jax.numpy as jnp
from jax.experimental import pallas as pl
from jax.experimental.pallas import tpu as pltpu


# dot_general dimension numbers
_NN = (((1,), (0,)), ((), ()))                 # (M,K)   x (K,N)   -> (M,N)
_TN = (((0,), (0,)), ((), ()))                 # (K,M)^T x (K,N)   -> (M,N)
_BNT = (((2,), (2,)), ((0,), (0,)))            # (b,M,K) x (b,N,K) -> (b,M,N)
_BNN = (((2,), (1,)), ((0,), (0,)))            # (b,M,K) x (b,K,N) -> (b,M,N)


def _round_up(x, m):
    return (x + m - 1) // m * m


def prepare_av_mha_params(params, num_heads, mm_dtype=jnp.bfloat16):
    """One-time parameter prep (hoisted out of the forward pass).

    Transposes the PyTorch (out_features, in_features) weights, folds the
    attention `scale` into W_q, drops the unused `v` weights, zero-pads the SE
    weight's output columns to a lane-dense multiple of 128 and pre-casts all
    matmul operands to the MXU dtype.
    """
    w_qkv = jnp.asarray(params["w_qkv"])
    C = w_qkv.shape[1]
    assert C % num_heads == 0, "num_heads must divide dim"
    head_dim = C // num_heads
    scale = head_dim ** -0.5
    C_pad = _round_up(C, 128)

    cast = lambda w: w.astype(mm_dtype)
    wq = cast(jnp.transpose(w_qkv[:C]) * scale)          # (C, C), scale folded
    wk = cast(jnp.transpose(w_qkv[C:2 * C]))             # (C, C); v unused
    wlip = cast(jnp.transpose(jnp.asarray(params["w_lip"])))
    wproj = cast(jnp.transpose(jnp.asarray(params["w_proj"])))
    bproj = jnp.asarray(params["b_proj"], dtype=jnp.float32).reshape(1, C)
    wse = jnp.transpose(jnp.asarray(params["w_se"]))
    if C_pad != C:
        wse = jnp.pad(wse, ((0, 0), (0, C_pad - C)))
    wse = cast(wse)

    return dict(wq=wq, wk=wk, wlip=wlip, wproj=wproj, bproj=bproj, wse=wse,
                num_heads=num_heads, head_dim=head_dim, C=C, C_pad=C_pad,
                sig_scale=2.0 / (C ** 0.5), mm_dtype=mm_dtype)


def _pick_batch_block(B, N, C, C_pad, head_dim, vmem_limit, weights_bytes):
    """VMEM-budget-driven batches-per-grid-step.

    Caps the per-step unroll at 8, targets bt*N >= 256 MXU rows, and prefers an
    even grid length (v7x megacore) when that does not shrink the block.
    """
    # rough f32 working set per batch: double-buffered in/out blocks + temps
    per_b = 4 * (9 * N * C + 4 * N * C_pad + 3 * N * N + 6 * N * head_dim)
    budget = max(vmem_limit // 2 - weights_bytes, per_b)
    bt_cap = int(max(1, min(8, B, budget // per_b)))
    divs = [d for d in range(1, B + 1) if B % d == 0 and d <= bt_cap]
    maxd = max(divs)

    def score(d):
        rows_ok = (d * N >= 256) or (d == maxd)
        even_grid = (B // d) % 2 == 0
        return (rows_ok, even_grid, d)

    return max(divs, key=score)


def _make_kernel(bt, N, C, C_pad, num_heads, head_dim, sig_scale, mm_dtype,
                 approx_recip):
    hd = head_dim

    def mm(a, b, dims):
        if a.dtype != mm_dtype:
            a = a.astype(mm_dtype)
        if b.dtype != mm_dtype:
            b = b.astype(mm_dtype)
        return jax.lax.dot_general(a, b, dimension_numbers=dims,
                                   preferred_element_type=jnp.float32)

    def softmax_last(x):
        x = x - jnp.max(x, axis=-1, keepdims=True)
        e = jnp.exp(x)
        return e * pl.reciprocal(jnp.sum(e, axis=-1, keepdims=True),
                                 approx=approx_recip)

    def kernel(audia_ref, lip_ref, wq_ref, wk_ref, wlip_ref, wproj_ref,
               bproj_ref, wse_ref, out_ref):
        # Flatten the bt batches into the matmul M dimension so the input
        # projections run as single wide MXU matmuls (M = bt*N rows).
        a2 = audia_ref[...].reshape(bt * N, C)
        l2 = lip_ref[...].reshape(bt * N, C)

        # `scale` is already folded into wq; `v` of the qkv Linear is unused.
        q2 = mm(a2, wq_ref[...], _NN)          # (bt*N, C)
        k2 = mm(a2, wk_ref[...], _NN)          # (bt*N, C)
        lip2 = mm(l2, wlip_ref[...], _NN)      # (bt*N, C)
        se2 = mm(a2, wse_ref[...], _NN)        # (bt*N, C_pad)

        # Per-head attention, batched over the bt batches of this grid step.
        # TODO(synk): for very large N on v7x, convert this static unroll into
        # a fori_loop writing strips into a VMEM scratch to bound the live
        # (bt, N, N) score temporaries.
        strips = []
        for h in range(num_heads):
            lo = h * hd
            qh = q2[:, lo:lo + hd].reshape(bt, N, hd)
            kh = k2[:, lo:lo + hd].reshape(bt, N, hd)
            lh = lip2[:, lo:lo + hd].reshape(bt, N, hd)

            s = mm(qh, kh, _BNT)                     # (bt, N, N) = q k^T
            p = softmax_last(s)
            attn_qk = mm(p, kh, _BNN)                # (bt, N, hd)  (@ k!)
            gate = softmax_last(attn_qk * lh)        # softmax over head_dim
            strips.append(attn_qk * gate)

        # One full-K output projection on the concatenated strips.
        prod = jnp.concatenate(strips, axis=-1).reshape(bt * N, C)
        av2 = mm(prod, wproj_ref[...], _NN) + bproj_ref[...]     # (bt*N, C)
        av3 = av2.reshape(bt, N, C)
        se3 = se2.reshape(bt, N, C_pad)

        # SELayer + final bmm, per batch (bt <= 8 by construction).
        # Pools are identity => y = sigmoid((2/temp) * se[:, :C]^T @ se).
        # Only C real Gram rows are computed; padded output columns of out_ref
        # are garbage by design and are sliced off in the wrapper.
        for b in range(bt):
            se_b = se3[b]                                         # (N, C_pad)
            gram = mm(se_b[:, :C], se_b, _TN)                     # (C, C_pad)
            y = jax.nn.sigmoid(gram * sig_scale)
            out_ref[b] = mm(av3[b], y, _NN).astype(out_ref.dtype)  # lane-dense

    return kernel


def av_mha_pallas(audia, lip, prepped, *, batch_block=None, approx_recip=True,
                  out_dtype=jnp.float32, single_buffer_weights=True):
    B, N, C = audia.shape
    assert C == prepped["C"], "channel mismatch with prepared params"
    C_pad = prepped["C_pad"]
    H = prepped["num_heads"]
    hd = prepped["head_dim"]
    mm_dtype = prepped["mm_dtype"]

    # Generation-aware VMEM budget (v7x has 64 MiB/TC, v5e/v6e 128 MiB).
    try:
        vmem_cap = int(pltpu.get_tpu_info().vmem_capacity_bytes)
    except Exception:  # conservative (v7x-sized) fallback
        vmem_cap = 64 * 1024 * 1024
    vmem_limit = int(min((vmem_cap * 3) // 4, 100 * 1024 * 1024))

    wbytes = jnp.dtype(mm_dtype).itemsize
    weights_bytes = 2 * wbytes * (4 * C * C + C * C_pad) + 4 * C
    if batch_block is None:
        batch_block = _pick_batch_block(B, N, C, C_pad, hd, vmem_limit,
                                        weights_bytes)
    bt = int(batch_block)
    assert B % bt == 0, "batch_block must divide the batch size"

    kernel = _make_kernel(bt, N, C, C_pad, H, hd, prepped["sig_scale"],
                          mm_dtype, approx_recip)

    # Advisory cost estimate for the XLA scheduler.
    flops = B * (6 * N * C * C + 2 * N * C * C_pad      # q/k/lip/se projections
                 + 4 * N * N * C                        # per-head scores + PV
                 + 2 * N * C * C                        # output projection
                 + 4 * N * C * C_pad)                   # Gram + final bmm
    transcendentals = B * (H * N * N + N * C + C * C_pad)
    bytes_accessed = (4 * B * N * (2 * C + C_pad)
                      + wbytes * (4 * C * C + C * C_pad) + 4 * C)

    def run(single_buf):
        wkw = dict(pipeline_mode=pl.Buffered(1)) if single_buf else {}

        def wspec(shape):
            return pl.BlockSpec(shape, lambda i: (0, 0), **wkw)

        return pl.pallas_call(
            kernel,
            out_shape=jax.ShapeDtypeStruct((B, N, C_pad), out_dtype),
            grid=(B // bt,),
            in_specs=[
                pl.BlockSpec((bt, N, C), lambda i: (i, 0, 0)),     # audia
                pl.BlockSpec((bt, N, C), lambda i: (i, 0, 0)),     # lip
                wspec((C, C)),                                     # W_q^T*scale
                wspec((C, C)),                                     # W_k^T
                wspec((C, C)),                                     # W_lip^T
                wspec((C, C)),                                     # W_proj^T
                wspec((1, C)),                                     # b_proj
                wspec((C, C_pad)),                                 # W_se^T (pad)
            ],
            out_specs=pl.BlockSpec((bt, N, C_pad), lambda i: (i, 0, 0)),
            compiler_params=pltpu.CompilerParams(
                dimension_semantics=("parallel",),
                vmem_limit_bytes=vmem_limit),
            cost_estimate=pl.CostEstimate(flops=int(flops),
                                          transcendentals=int(transcendentals),
                                          bytes_accessed=int(bytes_accessed)),
        )(audia, lip, prepped["wq"], prepped["wk"], prepped["wlip"],
          prepped["wproj"], prepped["bproj"], prepped["wse"])

    if single_buffer_weights:
        try:
            out = run(True)
        except Exception:
            # jax build without BlockSpec.pipeline_mode / pl.Buffered(1):
            # fall back to default double-buffered weight blocks.
            out = run(False)
    else:
        out = run(False)

    # Padded columns are not zero (sigmoid(0)=0.5 mixes row sums into them);
    # they must always be sliced off.  No-op / no copy when C_pad == C.
    return out[..., :C] if C_pad != C else out


def ref_forward(audia, lip, params, num_heads):
    """Pure-JAX reference mirroring the PyTorch forward exactly."""
    ein = functools.partial(jnp.einsum, precision=jax.lax.Precision.HIGHEST)
    B, N, C = audia.shape
    hd = C // num_heads
    scale = hd ** -0.5
    temperature = C ** 0.5

    qkv = ein("bnc,oc->bno", audia, params["w_qkv"])                 # (B,N,3C)
    qkv = qkv.reshape(B, N, 3, num_heads, hd).transpose(2, 0, 3, 1, 4)
    lipv = ein("bnc,oc->bno", lip, params["w_lip"])
    lipv = lipv.reshape(B, N, num_heads, hd).transpose(0, 2, 1, 3)   # (B,H,N,hd)
    q, k, _v = qkv[0], qkv[1], qkv[2]

    attn = ein("bhnd,bhmd->bhnm", q, k) * scale
    attn_qk = ein("bhnm,bhmd->bhnd", jax.nn.softmax(attn, axis=-1), k)
    attn_av = jax.nn.softmax(attn_qk * lipv, axis=-1)
    av_out = (attn_qk * attn_av).transpose(0, 2, 1, 3).reshape(B, N, C)
    av_out = ein("bnc,oc->bno", av_out, params["w_proj"]) + params["b_proj"]

    # SELayer (linear1 for both args; adaptive pools are identity)
    se_q = ein("bnc,oc->bno", audia, params["w_se"])
    x = ein("bcn,bnd->bcd", se_q.transpose(0, 2, 1) / temperature, se_q)
    y = jax.nn.sigmoid(x + x)
    return ein("bnc,bcd->bnd", av_out, y)


if __name__ == "__main__":
    B, N, C = 2, 8, 32
    num_heads = 4

    key = jax.random.PRNGKey(0)
    k_a, k_l, k1, k2, k3, k4, k5 = jax.random.split(key, 7)

    audia = jax.random.normal(k_a, (B, N, C), dtype=jnp.float32)
    lip = jax.random.normal(k_l, (B, N, C), dtype=jnp.float32)

    # Deterministic synthetic parameters (PyTorch (out_features, in_features)).
    params = {
        "w_qkv": jax.random.normal(k1, (3 * C, C), dtype=jnp.float32) * 0.1,
        "w_lip": jax.random.normal(k2, (C, C), dtype=jnp.float32) * 0.1,
        "w_proj": jax.random.normal(k3, (C, C), dtype=jnp.float32) * 0.1,
        "b_proj": jax.random.normal(k4, (C,), dtype=jnp.float32) * 0.1,
        "w_se": jax.random.normal(k5, (C, C), dtype=jnp.float32) * 0.1,
    }

    ref = jax.block_until_ready(ref_forward(audia, lip, params, num_heads))

    # 1) exact-math validation path: f32 MXU operands, exact reciprocal.
    prepped_f32 = prepare_av_mha_params(params, num_heads,
                                        mm_dtype=jnp.float32)
    out_f32 = jax.block_until_ready(
        av_mha_pallas(audia, lip, prepped_f32, approx_recip=False))
    assert out_f32.shape == (B, N, C)
    err = float(jnp.max(jnp.abs(out_f32 - ref)))
    assert jnp.allclose(out_f32, ref, atol=1e-3, rtol=1e-3), (
        f"f32 path max abs err {err}")

    # 2) performance path: bf16 MXU operands (f32 accum) + approx EUP recip.
    prepped = prepare_av_mha_params(params, num_heads)        # bf16 default
    out = jax.block_until_ready(av_mha_pallas(audia, lip, prepped))
    assert out.shape == (B, N, C)
    err = float(jnp.max(jnp.abs(out - ref)))
    assert jnp.allclose(out, ref, atol=3e-2, rtol=3e-2), (
        f"bf16 path max abs err {err}")

    print("KERNEL_OK")
</pallas_src>

<mosaic_0001>
module attributes {stable_mosaic.version = 11 : i64} {
  func.func @kernel(%arg0: i32, %arg1: memref<2x8x32xf32, #tpu.memory_space<vmem>>, %arg2: memref<2x8x32xf32, #tpu.memory_space<vmem>>, %arg3: memref<32x32xf32, #tpu.memory_space<vmem>>, %arg4: memref<32x32xf32, #tpu.memory_space<vmem>>, %arg5: memref<32x32xf32, #tpu.memory_space<vmem>>, %arg6: memref<32x32xf32, #tpu.memory_space<vmem>>, %arg7: memref<1x32xf32, #tpu.memory_space<vmem>>, %arg8: memref<32x128xf32, #tpu.memory_space<vmem>>, %arg9: memref<2x8x128xf32, #tpu.memory_space<vmem>>) attributes {dimension_semantics = [#tpu.dimension_semantics<parallel>], iteration_bounds = array<i64: 1>, scalar_prefetch = 0 : i64, scratch_operands = 0 : i64, tpu.core_type = #tpu.core_type<tc>, window_params = [{transform_indices = @transform_0, window_bounds = array<i64: 2, 8, 32>}, {transform_indices = @transform_1, window_bounds = array<i64: 2, 8, 32>}, {pipeline_mode = #tpu.pipeline_mode<synchronous>, transform_indices = @transform_2, window_bounds = array<i64: 32, 32>}, {pipeline_mode = #tpu.pipeline_mode<synchronous>, transform_indices = @transform_3, window_bounds = array<i64: 32, 32>}, {pipeline_mode = #tpu.pipeline_mode<synchronous>, transform_indices = @transform_4, window_bounds = array<i64: 32, 32>}, {pipeline_mode = #tpu.pipeline_mode<synchronous>, transform_indices = @transform_5, window_bounds = array<i64: 32, 32>}, {pipeline_mode = #tpu.pipeline_mode<synchronous>, transform_indices = @transform_6, window_bounds = array<i64: 1, 32>}, {pipeline_mode = #tpu.pipeline_mode<synchronous>, transform_indices = @transform_7, window_bounds = array<i64: 32, 128>}, {transform_indices = @transform_8, window_bounds = array<i64: 2, 8, 128>}]} {
    %c0 = arith.constant 0 : index
    %c0_0 = arith.constant 0 : index
    %c0_1 = arith.constant 0 : index
    %0 = vector.load %arg1[%c0, %c0_0, %c0_1] : memref<2x8x32xf32, #tpu.memory_space<vmem>>, vector<2x8x32xf32>
    %1 = vector.shape_cast %0 : vector<2x8x32xf32> to vector<16x32xf32>
    %c0_2 = arith.constant 0 : index
    %c0_3 = arith.constant 0 : index
    %c0_4 = arith.constant 0 : index
    %2 = vector.load %arg2[%c0_2, %c0_3, %c0_4] : memref<2x8x32xf32, #tpu.memory_space<vmem>>, vector<2x8x32xf32>
    %3 = vector.shape_cast %2 : vector<2x8x32xf32> to vector<16x32xf32>
    %c0_5 = arith.constant 0 : index
    %c0_6 = arith.constant 0 : index
    %4 = vector.load %arg3[%c0_5, %c0_6] : memref<32x32xf32, #tpu.memory_space<vmem>>, vector<32x32xf32>
    %cst = arith.constant dense<0.000000e+00> : vector<16x32xf32>
    %5 = tpu.matmul %1, %4, %cst {dimension_numbers = #tpu.dot_dimension_numbers<[1], [0], [0], [1], [0, 0, 1, 1], [], []>} : vector<16x32xf32>, vector<32x32xf32>, vector<16x32xf32> -> vector<16x32xf32>
    %c0_7 = arith.constant 0 : index
    %c0_8 = arith.constant 0 : index
    %6 = vector.load %arg4[%c0_7, %c0_8] : memref<32x32xf32, #tpu.memory_space<vmem>>, vector<32x32xf32>
    %cst_9 = arith.constant dense<0.000000e+00> : vector<16x32xf32>
    %7 = tpu.matmul %1, %6, %cst_9 {dimension_numbers = #tpu.dot_dimension_numbers<[1], [0], [0], [1], [0, 0, 1, 1], [], []>} : vector<16x32xf32>, vector<32x32xf32>, vector<16x32xf32> -> vector<16x32xf32>
    %c0_10 = arith.constant 0 : index
    %c0_11 = arith.constant 0 : index
    %8 = vector.load %arg5[%c0_10, %c0_11] : memref<32x32xf32, #tpu.memory_space<vmem>>, vector<32x32xf32>
    %cst_12 = arith.constant dense<0.000000e+00> : vector<16x32xf32>
    %9 = tpu.matmul %3, %8, %cst_12 {dimension_numbers = #tpu.dot_dimension_numbers<[1], [0], [0], [1], [0, 0, 1, 1], [], []>} : vector<16x32xf32>, vector<32x32xf32>, vector<16x32xf32> -> vector<16x32xf32>
    %c0_13 = arith.constant 0 : index
    %c0_14 = arith.constant 0 : index
    %10 = vector.load %arg8[%c0_13, %c0_14] : memref<32x128xf32, #tpu.memory_space<vmem>>, vector<32x128xf32>
    %cst_15 = arith.constant dense<0.000000e+00> : vector<16x128xf32>
    %11 = tpu.matmul %1, %10, %cst_15 {dimension_numbers = #tpu.dot_dimension_numbers<[1], [0], [0], [1], [0, 0, 1, 1], [], []>} : vector<16x32xf32>, vector<32x128xf32>, vector<16x128xf32> -> vector<16x128xf32>
    %12 = vector.extract_strided_slice %5 {offsets = [0, 0], sizes = [16, 8], strides = [1, 1]} : vector<16x32xf32> to vector<16x8xf32>
    %13 = vector.shape_cast %12 : vector<16x8xf32> to vector<2x8x8xf32>
    %14 = vector.extract_strided_slice %7 {offsets = [0, 0], sizes = [16, 8], strides = [1, 1]} : vector<16x32xf32> to vector<16x8xf32>
    %15 = vector.shape_cast %14 : vector<16x8xf32> to vector<2x8x8xf32>
    %16 = vector.extract_strided_slice %9 {offsets = [0, 0], sizes = [16, 8], strides = [1, 1]} : vector<16x32xf32> to vector<16x8xf32>
    %17 = vector.shape_cast %16 : vector<16x8xf32> to vector<2x8x8xf32>
    %cst_16 = arith.constant dense<0.000000e+00> : vector<2x8x8xf32>
    %18 = tpu.matmul %13, %15, %cst_16 {dimension_numbers = #tpu.dot_dimension_numbers<[2], [2], [1], [1], [0, 0, 0, 1, 1, 1], [0], [0]>} : vector<2x8x8xf32>, vector<2x8x8xf32>, vector<2x8x8xf32> -> vector<2x8x8xf32>
    %cst_17 = arith.constant dense<0xFF800000> : vector<2x8xf32>
    %19 = vector.multi_reduction <maximumf>, %18, %cst_17 [2] : vector<2x8x8xf32> to vector<2x8xf32>
    %20 = vector.shape_cast %19 : vector<2x8xf32> to vector<2x8x1xf32>
    %21 = vector.broadcast %20 : vector<2x8x1xf32> to vector<2x8x8xf32>
    %22 = arith.subf %18, %21 : vector<2x8x8xf32>
    %23 = math.exp %22 : vector<2x8x8xf32>
    %cst_18 = arith.constant dense<0.000000e+00> : vector<2x8xf32>
    %24 = vector.multi_reduction <add>, %23, %cst_18 [2] : vector<2x8x8xf32> to vector<2x8xf32>
    %25 = vector.shape_cast %24 : vector<2x8xf32> to vector<2x8x1xf32>
    %26 = tpu.reciprocal %25 : vector<2x8x1xf32> -> vector<2x8x1xf32>
    %27 = vector.broadcast %26 : vector<2x8x1xf32> to vector<2x8x8xf32>
    %28 = arith.mulf %23, %27 : vector<2x8x8xf32>
    %cst_19 = arith.constant dense<0.000000e+00> : vector<2x8x8xf32>
    %29 = tpu.matmul %28, %15, %cst_19 {dimension_numbers = #tpu.dot_dimension_numbers<[2], [1], [1], [2], [0, 0, 0, 1, 1, 2], [0], [0]>} : vector<2x8x8xf32>, vector<2x8x8xf32>, vector<2x8x8xf32> -> vector<2x8x8xf32>
    %30 = arith.mulf %29, %17 : vector<2x8x8xf32>
    %cst_20 = arith.constant dense<0xFF800000> : vector<2x8xf32>
    %31 = vector.multi_reduction <maximumf>, %30, %cst_20 [2] : vector<2x8x8xf32> to vector<2x8xf32>
    %32 = vector.shape_cast %31 : vector<2x8xf32> to vector<2x8x1xf32>
    %33 = vector.broadcast %32 : vector<2x8x1xf32> to vector<2x8x8xf32>
    %34 = arith.subf %30, %33 : vector<2x8x8xf32>
    %35 = math.exp %34 : vector<2x8x8xf32>
    %cst_21 = arith.constant dense<0.000000e+00> : vector<2x8xf32>
    %36 = vector.multi_reduction <add>, %35, %cst_21 [2] : vector<2x8x8xf32> to vector<2x8xf32>
    %37 = vector.shape_cast %36 : vector<2x8xf32> to vector<2x8x1xf32>
    %38 = tpu.reciprocal %37 : vector<2x8x1xf32> -> vector<2x8x1xf32>
    %39 = vector.broadcast %38 : vector<2x8x1xf32> to vector<2x8x8xf32>
    %40 = arith.mulf %35, %39 : vector<2x8x8xf32>
    %41 = arith.mulf %29, %40 : vector<2x8x8xf32>
    %42 = vector.extract_strided_slice %5 {offsets = [0, 8], sizes = [16, 8], strides = [1, 1]} : vector<16x32xf32> to vector<16x8xf32>
    %43 = vector.shape_cast %42 : vector<16x8xf32> to vector<2x8x8xf32>
    %44 = vector.extract_strided_slice %7 {offsets = [0, 8], sizes = [16, 8], strides = [1, 1]} : vector<16x32xf32> to vector<16x8xf32>
    %45 = vector.shape_cast %44 : vector<16x8xf32> to vector<2x8x8xf32>
    %46 = vector.extract_strided_slice %9 {offsets = [0, 8], sizes = [16, 8], strides = [1, 1]} : vector<16x32xf32> to vector<16x8xf32>
    %47 = vector.shape_cast %46 : vector<16x8xf32> to vector<2x8x8xf32>
    %cst_22 = arith.constant dense<0.000000e+00> : vector<2x8x8xf32>
    %48 = tpu.matmul %43, %45, %cst_22 {dimension_numbers = #tpu.dot_dimension_numbers<[2], [2], [1], [1], [0, 0, 0, 1, 1, 1], [0], [0]>} : vector<2x8x8xf32>, vector<2x8x8xf32>, vector<2x8x8xf32> -> vector<2x8x8xf32>
    %cst_23 = arith.constant dense<0xFF800000> : vector<2x8xf32>
    %49 = vector.multi_reduction <maximumf>, %48, %cst_23 [2] : vector<2x8x8xf32> to vector<2x8xf32>
    %50 = vector.shape_cast %49 : vector<2x8xf32> to vector<2x8x1xf32>
    %51 = vector.broadcast %50 : vector<2x8x1xf32> to vector<2x8x8xf32>
    %52 = arith.subf %48, %51 : vector<2x8x8xf32>
    %53 = math.exp %52 : vector<2x8x8xf32>
    %cst_24 = arith.constant dense<0.000000e+00> : vector<2x8xf32>
    %54 = vector.multi_reduction <add>, %53, %cst_24 [2] : vector<2x8x8xf32> to vector<2x8xf32>
    %55 = vector.shape_cast %54 : vector<2x8xf32> to vector<2x8x1xf32>
    %56 = tpu.reciprocal %55 : vector<2x8x1xf32> -> vector<2x8x1xf32>
    %57 = vector.broadcast %56 : vector<2x8x1xf32> to vector<2x8x8xf32>
    %58 = arith.mulf %53, %57 : vector<2x8x8xf32>
    %cst_25 = arith.constant dense<0.000000e+00> : vector<2x8x8xf32>
    %59 = tpu.matmul %58, %45, %cst_25 {dimension_numbers = #tpu.dot_dimension_numbers<[2], [1], [1], [2], [0, 0, 0, 1, 1, 2], [0], [0]>} : vector<2x8x8xf32>, vector<2x8x8xf32>, vector<2x8x8xf32> -> vector<2x8x8xf32>
    %60 = arith.mulf %59, %47 : vector<2x8x8xf32>
    %cst_26 = arith.constant dense<0xFF800000> : vector<2x8xf32>
    %61 = vector.multi_reduction <maximumf>, %60, %cst_26 [2] : vector<2x8x8xf32> to vector<2x8xf32>
    %62 = vector.shape_cast %61 : vector<2x8xf32> to vector<2x8x1xf32>
    %63 = vector.broadcast %62 : vector<2x8x1xf32> to vector<2x8x8xf32>
    %64 = arith.subf %60, %63 : vector<2x8x8xf32>
    %65 = math.exp %64 : vector<2x8x8xf32>
    %cst_27 = arith.constant dense<0.000000e+00> : vector<2x8xf32>
    %66 = vector.multi_reduction <add>, %65, %cst_27 [2] : vector<2x8x8xf32> to vector<2x8xf32>
    %67 = vector.shape_cast %66 : vector<2x8xf32> to vector<2x8x1xf32>
    %68 = tpu.reciprocal %67 : vector<2x8x1xf32> -> vector<2x8x1xf32>
    %69 = vector.broadcast %68 : vector<2x8x1xf32> to vector<2x8x8xf32>
    %70 = arith.mulf %65, %69 : vector<2x8x8xf32>
    %71 = arith.mulf %59, %70 : vector<2x8x8xf32>
    %72 = vector.extract_strided_slice %5 {offsets = [0, 16], sizes = [16, 8], strides = [1, 1]} : vector<16x32xf32> to vector<16x8xf32>
    %73 = vector.shape_cast %72 : vector<16x8xf32> to vector<2x8x8xf32>
    %74 = vector.extract_strided_slice %7 {offsets = [0, 16], sizes = [16, 8], strides = [1, 1]} : vector<16x32xf32> to vector<16x8xf32>
    %75 = vector.shape_cast %74 : vector<16x8xf32> to vector<2x8x8xf32>
    %76 = vector.extract_strided_slice %9 {offsets = [0, 16], sizes = [16, 8], strides = [1, 1]} : vector<16x32xf32> to vector<16x8xf32>
    %77 = vector.shape_cast %76 : vector<16x8xf32> to vector<2x8x8xf32>
    %cst_28 = arith.constant dense<0.000000e+00> : vector<2x8x8xf32>
    %78 = tpu.matmul %73, %75, %cst_28 {dimension_numbers = #tpu.dot_dimension_numbers<[2], [2], [1], [1], [0, 0, 0, 1, 1, 1], [0], [0]>} : vector<2x8x8xf32>, vector<2x8x8xf32>, vector<2x8x8xf32> -> vector<2x8x8xf32>
    %cst_29 = arith.constant dense<0xFF800000> : vector<2x8xf32>
    %79 = vector.multi_reduction <maximumf>, %78, %cst_29 [2] : vector<2x8x8xf32> to vector<2x8xf32>
    %80 = vector.shape_cast %79 : vector<2x8xf32> to vector<2x8x1xf32>
    %81 = vector.broadcast %80 : vector<2x8x1xf32> to vector<2x8x8xf32>
    %82 = arith.subf %78, %81 : vector<2x8x8xf32>
    %83 = math.exp %82 : vector<2x8x8xf32>
    %cst_30 = arith.constant dense<0.000000e+00> : vector<2x8xf32>
    %84 = vector.multi_reduction <add>, %83, %cst_30 [2] : vector<2x8x8xf32> to vector<2x8xf32>
    %85 = vector.shape_cast %84 : vector<2x8xf32> to vector<2x8x1xf32>
    %86 = tpu.reciprocal %85 : vector<2x8x1xf32> -> vector<2x8x1xf32>
    %87 = vector.broadcast %86 : vector<2x8x1xf32> to vector<2x8x8xf32>
    %88 = arith.mulf %83, %87 : vector<2x8x8xf32>
    %cst_31 = arith.constant dense<0.000000e+00> : vector<2x8x8xf32>
    %89 = tpu.matmul %88, %75, %cst_31 {dimension_numbers = #tpu.dot_dimension_numbers<[2], [1], [1], [2], [0, 0, 0, 1, 1, 2], [0], [0]>} : vector<2x8x8xf32>, vector<2x8x8xf32>, vector<2x8x8xf32> -> vector<2x8x8xf32>
    %90 = arith.mulf %89, %77 : vector<2x8x8xf32>
    %cst_32 = arith.constant dense<0xFF800000> : vector<2x8xf32>
    %91 = vector.multi_reduction <maximumf>, %90, %cst_32 [2] : vector<2x8x8xf32> to vector<2x8xf32>
    %92 = vector.shape_cast %91 : vector<2x8xf32> to vector<2x8x1xf32>
    %93 = vector.broadcast %92 : vector<2x8x1xf32> to vector<2x8x8xf32>
    %94 = arith.subf %90, %93 : vector<2x8x8xf32>
    %95 = math.exp %94 : vector<2x8x8xf32>
    %cst_33 = arith.constant dense<0.000000e+00> : vector<2x8xf32>
    %96 = vector.multi_reduction <add>, %95, %cst_33 [2] : vector<2x8x8xf32> to vector<2x8xf32>
    %97 = vector.shape_cast %96 : vector<2x8xf32> to vector<2x8x1xf32>
    %98 = tpu.reciprocal %97 : vector<2x8x1xf32> -> vector<2x8x1xf32>
    %99 = vector.broadcast %98 : vector<2x8x1xf32> to vector<2x8x8xf32>
    %100 = arith.mulf %95, %99 : vector<2x8x8xf32>
    %101 = arith.mulf %89, %100 : vector<2x8x8xf32>
    %102 = vector.extract_strided_slice %5 {offsets = [0, 24], sizes = [16, 8], strides = [1, 1]} : vector<16x32xf32> to vector<16x8xf32>
    %103 = vector.shape_cast %102 : vector<16x8xf32> to vector<2x8x8xf32>
    %104 = vector.extract_strided_slice %7 {offsets = [0, 24], sizes = [16, 8], strides = [1, 1]} : vector<16x32xf32> to vector<16x8xf32>
    %105 = vector.shape_cast %104 : vector<16x8xf32> to vector<2x8x8xf32>
    %106 = vector.extract_strided_slice %9 {offsets = [0, 24], sizes = [16, 8], strides = [1, 1]} : vector<16x32xf32> to vector<16x8xf32>
    %107 = vector.shape_cast %106 : vector<16x8xf32> to vector<2x8x8xf32>
    %cst_34 = arith.constant dense<0.000000e+00> : vector<2x8x8xf32>
    %108 = tpu.matmul %103, %105, %cst_34 {dimension_numbers = #tpu.dot_dimension_numbers<[2], [2], [1], [1], [0, 0, 0, 1, 1, 1], [0], [0]>} : vector<2x8x8xf32>, vector<2x8x8xf32>, vector<2x8x8xf32> -> vector<2x8x8xf32>
    %cst_35 = arith.constant dense<0xFF800000> : vector<2x8xf32>
    %109 = vector.multi_reduction <maximumf>, %108, %cst_35 [2] : vector<2x8x8xf32> to vector<2x8xf32>
    %110 = vector.shape_cast %109 : vector<2x8xf32> to vector<2x8x1xf32>
    %111 = vector.broadcast %110 : vector<2x8x1xf32> to vector<2x8x8xf32>
    %112 = arith.subf %108, %111 : vector<2x8x8xf32>
    %113 = math.exp %112 : vector<2x8x8xf32>
    %cst_36 = arith.constant dense<0.000000e+00> : vector<2x8xf32>
    %114 = vector.multi_reduction <add>, %113, %cst_36 [2] : vector<2x8x8xf32> to vector<2x8xf32>
    %115 = vector.shape_cast %114 : vector<2x8xf32> to vector<2x8x1xf32>
    %116 = tpu.reciprocal %115 : vector<2x8x1xf32> -> vector<2x8x1xf32>
    %117 = vector.broadcast %116 : vector<2x8x1xf32> to vector<2x8x8xf32>
    %118 = arith.mulf %113, %117 : vector<2x8x8xf32>
    %cst_37 = arith.constant dense<0.000000e+00> : vector<2x8x8xf32>
    %119 = tpu.matmul %118, %105, %cst_37 {dimension_numbers = #tpu.dot_dimension_numbers<[2], [1], [1], [2], [0, 0, 0, 1, 1, 2], [0], [0]>} : vector<2x8x8xf32>, vector<2x8x8xf32>, vector<2x8x8xf32> -> vector<2x8x8xf32>
    %120 = arith.mulf %119, %107 : vector<2x8x8xf32>
    %cst_38 = arith.constant dense<0xFF800000> : vector<2x8xf32>
    %121 = vector.multi_reduction <maximumf>, %120, %cst_38 [2] : vector<2x8x8xf32> to vector<2x8xf32>
    %122 = vector.shape_cast %121 : vector<2x8xf32> to vector<2x8x1xf32>
    %123 = vector.broadcast %122 : vector<2x8x1xf32> to vector<2x8x8xf32>
    %124 = arith.subf %120, %123 : vector<2x8x8xf32>
    %125 = math.exp %124 : vector<2x8x8xf32>
    %cst_39 = arith.constant dense<0.000000e+00> : vector<2x8xf32>
    %126 = vector.multi_reduction <add>, %125, %cst_39 [2] : vector<2x8x8xf32> to vector<2x8xf32>
    %127 = vector.shape_cast %126 : vector<2x8xf32> to vector<2x8x1xf32>
    %128 = tpu.reciprocal %127 : vector<2x8x1xf32> -> vector<2x8x1xf32>
    %129 = vector.broadcast %128 : vector<2x8x1xf32> to vector<2x8x8xf32>
    %130 = arith.mulf %125, %129 : vector<2x8x8xf32>
    %131 = arith.mulf %119, %130 : vector<2x8x8xf32>
    %132 = tpu.concatenate %41, %71, %101, %131 in 2 : vector<2x8x8xf32>, vector<2x8x8xf32>, vector<2x8x8xf32>, vector<2x8x8xf32> -> vector<2x8x32xf32>
    %133 = vector.shape_cast %132 : vector<2x8x32xf32> to vector<16x32xf32>
    %c0_40 = arith.constant 0 : index
    %c0_41 = arith.constant 0 : index
    %134 = vector.load %arg6[%c0_40, %c0_41] : memref<32x32xf32, #tpu.memory_space<vmem>>, vector<32x32xf32>
    %cst_42 = arith.constant dense<0.000000e+00> : vector<16x32xf32>
    %135 = tpu.matmul %133, %134, %cst_42 {dimension_numbers = #tpu.dot_dimension_numbers<[1], [0], [0], [1], [0, 0, 1, 1], [], []>} : vector<16x32xf32>, vector<32x32xf32>, vector<16x32xf32> -> vector<16x32xf32>
    %c0_43 = arith.constant 0 : index
    %c0_44 = arith.constant 0 : index
    %136 = vector.load %arg7[%c0_43, %c0_44] : memref<1x32xf32, #tpu.memory_space<vmem>>, vector<1x32xf32>
    %137 = vector.broadcast %136 : vector<1x32xf32> to vector<16x32xf32>
    %138 = arith.addf %135, %137 : vector<16x32xf32>
    %139 = vector.shape_cast %138 : vector<16x32xf32> to vector<2x8x32xf32>
    %140 = vector.shape_cast %11 : vector<16x128xf32> to vector<2x8x128xf32>
    %141 = vector.extract_strided_slice %140 {offsets = [0, 0, 0], sizes = [1, 8, 128], strides = [1, 1, 1]} : vector<2x8x128xf32> to vector<1x8x128xf32>
    %142 = vector.shape_cast %141 : vector<1x8x128xf32> to vector<8x128xf32>
    %143 = vector.extract_strided_slice %142 {offsets = [0, 0], sizes = [8, 32], strides = [1, 1]} : vector<8x128xf32> to vector<8x32xf32>
    %cst_45 = arith.constant dense<0.000000e+00> : vector<32x128xf32>
    %144 = tpu.matmul %143, %142, %cst_45 {dimension_numbers = #tpu.dot_dimension_numbers<[0], [0], [1], [1], [0, 1, 1, 1], [], []>} : vector<8x32xf32>, vector<8x128xf32>, vector<32x128xf32> -> vector<32x128xf32>
    %cst_46 = arith.constant 0.353553385 : f32
    %145 = vector.broadcast %cst_46 : f32 to vector<32x128xf32>
    %146 = arith.mulf %144, %145 : vector<32x128xf32>
    %147 = arith.negf %146 : vector<32x128xf32>
    %148 = math.exp %147 : vector<32x128xf32>
    %cst_47 = arith.constant 1.000000e+00 : f32
    %149 = vector.broadcast %cst_47 : f32 to vector<32x128xf32>
    %150 = arith.addf %149, %148 : vector<32x128xf32>
    %151 = arith.divf %149, %150 : vector<32x128xf32>
    %152 = vector.extract_strided_slice %139 {offsets = [0, 0, 0], sizes = [1, 8, 32], strides = [1, 1, 1]} : vector<2x8x32xf32> to vector<1x8x32xf32>
    %153 = vector.shape_cast %152 : vector<1x8x32xf32> to vector<8x32xf32>
    %cst_48 = arith.constant dense<0.000000e+00> : vector<8x128xf32>
    %154 = tpu.matmul %153, %151, %cst_48 {dimension_numbers = #tpu.dot_dimension_numbers<[1], [0], [0], [1], [0, 0, 1, 1], [], []>} : vector<8x32xf32>, vector<32x128xf32>, vector<8x128xf32> -> vector<8x128xf32>
    %c0_49 = arith.constant 0 : index
    %c0_50 = arith.constant 0 : index
    %c0_51 = arith.constant 0 : index
    %155 = vector.load %arg9[%c0_49, %c0_50, %c0_51] : memref<2x8x128xf32, #tpu.memory_space<vmem>>, vector<1x8x128xf32>
    %156 = vector.shape_cast %155 : vector<1x8x128xf32> to vector<8x128xf32>
    %157 = vector.shape_cast %154 : vector<8x128xf32> to vector<1x8x128xf32>
    tpu.vector_store %arg9[%c0_49, %c0_50, %c0_51], %157 {strides = array<i32>} : memref<2x8x128xf32, #tpu.memory_space<vmem>>, vector<1x8x128xf32>,
    %158 = vector.extract_strided_slice %140 {offsets = [1, 0, 0], sizes = [1, 8, 128], strides = [1, 1, 1]} : vector<2x8x128xf32> to vector<1x8x128xf32>
    %159 = vector.shape_cast %158 : vector<1x8x128xf32> to vector<8x128xf32>
    %160 = vector.extract_strided_slice %159 {offsets = [0, 0], sizes = [8, 32], strides = [1, 1]} : vector<8x128xf32> to vector<8x32xf32>
    %cst_52 = arith.constant dense<0.000000e+00> : vector<32x128xf32>
    %161 = tpu.matmul %160, %159, %cst_52 {dimension_numbers = #tpu.dot_dimension_numbers<[0], [0], [1], [1], [0, 1, 1, 1], [], []>} : vector<8x32xf32>, vector<8x128xf32>, vector<32x128xf32> -> vector<32x128xf32>
    %cst_53 = arith.constant 0.353553385 : f32
    %162 = vector.broadcast %cst_53 : f32 to vector<32x128xf32>
    %163 = arith.mulf %161, %162 : vector<32x128xf32>
    %164 = arith.negf %163 : vector<32x128xf32>
    %165 = math.exp %164 : vector<32x128xf32>
    %cst_54 = arith.constant 1.000000e+00 : f32
    %166 = vector.broadcast %cst_54 : f32 to vector<32x128xf32>
    %167 = arith.addf %166, %165 : vector<32x128xf32>
    %168 = arith.divf %166, %167 : vector<32x128xf32>
    %169 = vector.extract_strided_slice %139 {offsets = [1, 0, 0], sizes = [1, 8, 32], strides = [1, 1, 1]} : vector<2x8x32xf32> to vector<1x8x32xf32>
    %170 = vector.shape_cast %169 : vector<1x8x32xf32> to vector<8x32xf32>
    %cst_55 = arith.constant dense<0.000000e+00> : vector<8x128xf32>
    %171 = tpu.matmul %170, %168, %cst_55 {dimension_numbers = #tpu.dot_dimension_numbers<[1], [0], [0], [1], [0, 0, 1, 1], [], []>} : vector<8x32xf32>, vector<32x128xf32>, vector<8x128xf32> -> vector<8x128xf32>
    %c1 = arith.constant 1 : index
    %c0_56 = arith.constant 0 : index
    %c0_57 = arith.constant 0 : index
    %172 = vector.load %arg9[%c1, %c0_56, %c0_57] : memref<2x8x128xf32, #tpu.memory_space<vmem>>, vector<1x8x128xf32>
    %173 = vector.shape_cast %172 : vector<1x8x128xf32> to vector<8x128xf32>
    %174 = vector.shape_cast %171 : vector<8x128xf32> to vector<1x8x128xf32>
    tpu.vector_store %arg9[%c1, %c0_56, %c0_57], %174 {strides = array<i32>} : memref<2x8x128xf32, #tpu.memory_space<vmem>>, vector<1x8x128xf32>,
    return
  }
  func.func @transform_0(%arg0: i32) -> (i32, i32, i32) {
    %c0_i32 = arith.constant 0 : i32
    %c0_i32_0 = arith.constant 0 : i32
    %c0_i32_1 = arith.constant 0 : i32
    return %arg0, %c0_i32, %c0_i32_0 : i32, i32, i32
  }
  func.func @transform_1(%arg0: i32) -> (i32, i32, i32) {
    %c0_i32 = arith.constant 0 : i32
    %c0_i32_0 = arith.constant 0 : i32
    %c0_i32_1 = arith.constant 0 : i32
    return %arg0, %c0_i32, %c0_i32_0 : i32, i32, i32
  }
  func.func @transform_2(%arg0: i32) -> (i32, i32) {
    %c0_i32 = arith.constant 0 : i32
    %c0_i32_0 = arith.constant 0 : i32
    %c0_i32_1 = arith.constant 0 : i32
    return %c0_i32, %c0_i32_0 : i32, i32
  }
  func.func @transform_3(%arg0: i32) -> (i32, i32) {
    %c0_i32 = arith.constant 0 : i32
    %c0_i32_0 = arith.constant 0 : i32
    %c0_i32_1 = arith.constant 0 : i32
    return %c0_i32, %c0_i32_0 : i32, i32
  }
  func.func @transform_4(%arg0: i32) -> (i32, i32) {
    %c0_i32 = arith.constant 0 : i32
    %c0_i32_0 = arith.constant 0 : i32
    %c0_i32_1 = arith.constant 0 : i32
    return %c0_i32, %c0_i32_0 : i32, i32
  }
  func.func @transform_5(%arg0: i32) -> (i32, i32) {
    %c0_i32 = arith.constant 0 : i32
    %c0_i32_0 = arith.constant 0 : i32
    %c0_i32_1 = arith.constant 0 : i32
    return %c0_i32, %c0_i32_0 : i32, i32
  }
  func.func @transform_6(%arg0: i32) -> (i32, i32) {
    %c0_i32 = arith.constant 0 : i32
    %c0_i32_0 = arith.constant 0 : i32
    %c0_i32_1 = arith.constant 0 : i32
    return %c0_i32, %c0_i32_0 : i32, i32
  }
  func.func @transform_7(%arg0: i32) -> (i32, i32) {
    %c0_i32 = arith.constant 0 : i32
    %c0_i32_0 = arith.constant 0 : i32
    %c0_i32_1 = arith.constant 0 : i32
    return %c0_i32, %c0_i32_0 : i32, i32
  }
  func.func @transform_8(%arg0: i32) -> (i32, i32, i32) {
    %c0_i32 = arith.constant 0 : i32
    %c0_i32_0 = arith.constant 0 : i32
    %c0_i32_1 = arith.constant 0 : i32
    return %arg0, %c0_i32, %c0_i32_0 : i32, i32, i32
  }
}

module attributes {stable_mosaic.version = 11 : i64} {
  func.func @kernel(%arg0: i32, %arg1: memref<2x8x32xf32, #tpu.memory_space<vmem>>, %arg2: memref<2x8x32xf32, #tpu.memory_space<vmem>>, %arg3: memref<32x32xf32, #tpu.memory_space<vmem>>, %arg4: memref<32x32xf32, #tpu.memory_space<vmem>>, %arg5: memref<32x32xf32, #tpu.memory_space<vmem>>, %arg6: memref<32x32xf32, #tpu.memory_space<vmem>>, %arg7: memref<1x32xf32, #tpu.memory_space<vmem>>, %arg8: memref<32x128xf32, #tpu.memory_space<vmem>>, %arg9: memref<2x8x128xf32, #tpu.memory_space<vmem>>) attributes {dimension_semantics = [#tpu.dimension_semantics<parallel>], iteration_bounds = array<i64: 1>, scalar_prefetch = 0 : i64, scratch_operands = 0 : i64, tpu.core_type = #tpu.core_type<tc>, window_params = [{transform_indices = @transform_0, window_bounds = array<i64: 2, 8, 32>}, {transform_indices = @transform_1, window_bounds = array<i64: 2, 8, 32>}, {pipeline_mode = #tpu.pipeline_mode<synchronous>, transform_indices = @transform_2, window_bounds = array<i64: 32, 32>}, {pipeline_mode = #tpu.pipeline_mode<synchronous>, transform_indices = @transform_3, window_bounds = array<i64: 32, 32>}, {pipeline_mode = #tpu.pipeline_mode<synchronous>, transform_indices = @transform_4, window_bounds = array<i64: 32, 32>}, {pipeline_mode = #tpu.pipeline_mode<synchronous>, transform_indices = @transform_5, window_bounds = array<i64: 32, 32>}, {pipeline_mode = #tpu.pipeline_mode<synchronous>, transform_indices = @transform_6, window_bounds = array<i64: 1, 32>}, {pipeline_mode = #tpu.pipeline_mode<synchronous>, transform_indices = @transform_7, window_bounds = array<i64: 32, 128>}, {transform_indices = @transform_8, window_bounds = array<i64: 2, 8, 128>}]} {
    %c0 = arith.constant 0 : index
    %c0_0 = arith.constant 0 : index
    %c0_1 = arith.constant 0 : index
    %0 = vector.load %arg1[%c0, %c0_0, %c0_1] : memref<2x8x32xf32, #tpu.memory_space<vmem>>, vector<2x8x32xf32>
    %1 = vector.shape_cast %0 : vector<2x8x32xf32> to vector<16x32xf32>
    %c0_2 = arith.constant 0 : index
    %c0_3 = arith.constant 0 : index
    %c0_4 = arith.constant 0 : index
    %2 = vector.load %arg2[%c0_2, %c0_3, %c0_4] : memref<2x8x32xf32, #tpu.memory_space<vmem>>, vector<2x8x32xf32>
    %3 = vector.shape_cast %2 : vector<2x8x32xf32> to vector<16x32xf32>
    %c0_5 = arith.constant 0 : index
    %c0_6 = arith.constant 0 : index
    %4 = vector.load %arg3[%c0_5, %c0_6] : memref<32x32xf32, #tpu.memory_space<vmem>>, vector<32x32xf32>
    %cst = arith.constant dense<0.000000e+00> : vector<16x32xf32>
    %5 = tpu.matmul %1, %4, %cst {dimension_numbers = #tpu.dot_dimension_numbers<[1], [0], [0], [1], [0, 0, 1, 1], [], []>} : vector<16x32xf32>, vector<32x32xf32>, vector<16x32xf32> -> vector<16x32xf32>
    %c0_7 = arith.constant 0 : index
    %c0_8 = arith.constant 0 : index
    %6 = vector.load %arg4[%c0_7, %c0_8] : memref<32x32xf32, #tpu.memory_space<vmem>>, vector<32x32xf32>
    %cst_9 = arith.constant dense<0.000000e+00> : vector<16x32xf32>
    %7 = tpu.matmul %1, %6, %cst_9 {dimension_numbers = #tpu.dot_dimension_numbers<[1], [0], [0], [1], [0, 0, 1, 1], [], []>} : vector<16x32xf32>, vector<32x32xf32>, vector<16x32xf32> -> vector<16x32xf32>
    %c0_10 = arith.constant 0 : index
    %c0_11 = arith.constant 0 : index
    %8 = vector.load %arg5[%c0_10, %c0_11] : memref<32x32xf32, #tpu.memory_space<vmem>>, vector<32x32xf32>
    %cst_12 = arith.constant dense<0.000000e+00> : vector<16x32xf32>
    %9 = tpu.matmul %3, %8, %cst_12 {dimension_numbers = #tpu.dot_dimension_numbers<[1], [0], [0], [1], [0, 0, 1, 1], [], []>} : vector<16x32xf32>, vector<32x32xf32>, vector<16x32xf32> -> vector<16x32xf32>
    %c0_13 = arith.constant 0 : index
    %c0_14 = arith.constant 0 : index
    %10 = vector.load %arg8[%c0_13, %c0_14] : memref<32x128xf32, #tpu.memory_space<vmem>>, vector<32x128xf32>
    %cst_15 = arith.constant dense<0.000000e+00> : vector<16x128xf32>
    %11 = tpu.matmul %1, %10, %cst_15 {dimension_numbers = #tpu.dot_dimension_numbers<[1], [0], [0], [1], [0, 0, 1, 1], [], []>} : vector<16x32xf32>, vector<32x128xf32>, vector<16x128xf32> -> vector<16x128xf32>
    %12 = vector.extract_strided_slice %5 {offsets = [0, 0], sizes = [16, 8], strides = [1, 1]} : vector<16x32xf32> to vector<16x8xf32>
    %13 = vector.shape_cast %12 : vector<16x8xf32> to vector<2x8x8xf32>
    %14 = vector.extract_strided_slice %7 {offsets = [0, 0], sizes = [16, 8], strides = [1, 1]} : vector<16x32xf32> to vector<16x8xf32>
    %15 = vector.shape_cast %14 : vector<16x8xf32> to vector<2x8x8xf32>
    %16 = vector.extract_strided_slice %9 {offsets = [0, 0], sizes = [16, 8], strides = [1, 1]} : vector<16x32xf32> to vector<16x8xf32>
    %17 = vector.shape_cast %16 : vector<16x8xf32> to vector<2x8x8xf32>
    %cst_16 = arith.constant dense<0.000000e+00> : vector<2x8x8xf32>
    %18 = tpu.matmul %13, %15, %cst_16 {dimension_numbers = #tpu.dot_dimension_numbers<[2], [2], [1], [1], [0, 0, 0, 1, 1, 1], [0], [0]>} : vector<2x8x8xf32>, vector<2x8x8xf32>, vector<2x8x8xf32> -> vector<2x8x8xf32>
    %cst_17 = arith.constant dense<0xFF800000> : vector<2x8xf32>
    %19 = vector.multi_reduction <maximumf>, %18, %cst_17 [2] : vector<2x8x8xf32> to vector<2x8xf32>
    %20 = vector.shape_cast %19 : vector<2x8xf32> to vector<2x8x1xf32>
    %21 = vector.broadcast %20 : vector<2x8x1xf32> to vector<2x8x8xf32>
    %22 = arith.subf %18, %21 : vector<2x8x8xf32>
    %23 = math.exp %22 : vector<2x8x8xf32>
    %cst_18 = arith.constant dense<0.000000e+00> : vector<2x8xf32>
    %24 = vector.multi_reduction <add>, %23, %cst_18 [2] : vector<2x8x8xf32> to vector<2x8xf32>
    %25 = vector.shape_cast %24 : vector<2x8xf32> to vector<2x8x1xf32>
    %26 = tpu.reciprocal %25 : vector<2x8x1xf32> -> vector<2x8x1xf32>
    %27 = vector.broadcast %26 : vector<2x8x1xf32> to vector<2x8x8xf32>
    %28 = arith.mulf %23, %27 : vector<2x8x8xf32>
    %cst_19 = arith.constant dense<0.000000e+00> : vector<2x8x8xf32>
    %29 = tpu.matmul %28, %15, %cst_19 {dimension_numbers = #tpu.dot_dimension_numbers<[2], [1], [1], [2], [0, 0, 0, 1, 1, 2], [0], [0]>} : vector<2x8x8xf32>, vector<2x8x8xf32>, vector<2x8x8xf32> -> vector<2x8x8xf32>
    %30 = arith.mulf %29, %17 : vector<2x8x8xf32>
    %cst_20 = arith.constant dense<0xFF800000> : vector<2x8xf32>
    %31 = vector.multi_reduction <maximumf>, %30, %cst_20 [2] : vector<2x8x8xf32> to vector<2x8xf32>
    %32 = vector.shape_cast %31 : vector<2x8xf32> to vector<2x8x1xf32>
    %33 = vector.broadcast %32 : vector<2x8x1xf32> to vector<2x8x8xf32>
    %34 = arith.subf %30, %33 : vector<2x8x8xf32>
    %35 = math.exp %34 : vector<2x8x8xf32>
    %cst_21 = arith.constant dense<0.000000e+00> : vector<2x8xf32>
    %36 = vector.multi_reduction <add>, %35, %cst_21 [2] : vector<2x8x8xf32> to vector<2x8xf32>
    %37 = vector.shape_cast %36 : vector<2x8xf32> to vector<2x8x1xf32>
    %38 = tpu.reciprocal %37 : vector<2x8x1xf32> -> vector<2x8x1xf32>
    %39 = vector.broadcast %38 : vector<2x8x1xf32> to vector<2x8x8xf32>
    %40 = arith.mulf %35, %39 : vector<2x8x8xf32>
    %41 = arith.mulf %29, %40 : vector<2x8x8xf32>
    %42 = vector.extract_strided_slice %5 {offsets = [0, 8], sizes = [16, 8], strides = [1, 1]} : vector<16x32xf32> to vector<16x8xf32>
    %43 = vector.shape_cast %42 : vector<16x8xf32> to vector<2x8x8xf32>
    %44 = vector.extract_strided_slice %7 {offsets = [0, 8], sizes = [16, 8], strides = [1, 1]} : vector<16x32xf32> to vector<16x8xf32>
    %45 = vector.shape_cast %44 : vector<16x8xf32> to vector<2x8x8xf32>
    %46 = vector.extract_strided_slice %9 {offsets = [0, 8], sizes = [16, 8], strides = [1, 1]} : vector<16x32xf32> to vector<16x8xf32>
    %47 = vector.shape_cast %46 : vector<16x8xf32> to vector<2x8x8xf32>
    %cst_22 = arith.constant dense<0.000000e+00> : vector<2x8x8xf32>
    %48 = tpu.matmul %43, %45, %cst_22 {dimension_numbers = #tpu.dot_dimension_numbers<[2], [2], [1], [1], [0, 0, 0, 1, 1, 1], [0], [0]>} : vector<2x8x8xf32>, vector<2x8x8xf32>, vector<2x8x8xf32> -> vector<2x8x8xf32>
    %cst_23 = arith.constant dense<0xFF800000> : vector<2x8xf32>
    %49 = vector.multi_reduction <maximumf>, %48, %cst_23 [2] : vector<2x8x8xf32> to vector<2x8xf32>
    %50 = vector.shape_cast %49 : vector<2x8xf32> to vector<2x8x1xf32>
    %51 = vector.broadcast %50 : vector<2x8x1xf32> to vector<2x8x8xf32>
    %52 = arith.subf %48, %51 : vector<2x8x8xf32>
    %53 = math.exp %52 : vector<2x8x8xf32>
    %cst_24 = arith.constant dense<0.000000e+00> : vector<2x8xf32>
    %54 = vector.multi_reduction <add>, %53, %cst_24 [2] : vector<2x8x8xf32> to vector<2x8xf32>
    %55 = vector.shape_cast %54 : vector<2x8xf32> to vector<2x8x1xf32>
    %56 = tpu.reciprocal %55 : vector<2x8x1xf32> -> vector<2x8x1xf32>
    %57 = vector.broadcast %56 : vector<2x8x1xf32> to vector<2x8x8xf32>
    %58 = arith.mulf %53, %57 : vector<2x8x8xf32>
    %cst_25 = arith.constant dense<0.000000e+00> : vector<2x8x8xf32>
    %59 = tpu.matmul %58, %45, %cst_25 {dimension_numbers = #tpu.dot_dimension_numbers<[2], [1], [1], [2], [0, 0, 0, 1, 1, 2], [0], [0]>} : vector<2x8x8xf32>, vector<2x8x8xf32>, vector<2x8x8xf32> -> vector<2x8x8xf32>
    %60 = arith.mulf %59, %47 : vector<2x8x8xf32>
    %cst_26 = arith.constant dense<0xFF800000> : vector<2x8xf32>
    %61 = vector.multi_reduction <maximumf>, %60, %cst_26 [2] : vector<2x8x8xf32> to vector<2x8xf32>
    %62 = vector.shape_cast %61 : vector<2x8xf32> to vector<2x8x1xf32>
    %63 = vector.broadcast %62 : vector<2x8x1xf32> to vector<2x8x8xf32>
    %64 = arith.subf %60, %63 : vector<2x8x8xf32>
    %65 = math.exp %64 : vector<2x8x8xf32>
    %cst_27 = arith.constant dense<0.000000e+00> : vector<2x8xf32>
    %66 = vector.multi_reduction <add>, %65, %cst_27 [2] : vector<2x8x8xf32> to vector<2x8xf32>
    %67 = vector.shape_cast %66 : vector<2x8xf32> to vector<2x8x1xf32>
    %68 = tpu.reciprocal %67 : vector<2x8x1xf32> -> vector<2x8x1xf32>
    %69 = vector.broadcast %68 : vector<2x8x1xf32> to vector<2x8x8xf32>
    %70 = arith.mulf %65, %69 : vector<2x8x8xf32>
    %71 = arith.mulf %59, %70 : vector<2x8x8xf32>
    %72 = vector.extract_strided_slice %5 {offsets = [0, 16], sizes = [16, 8], strides = [1, 1]} : vector<16x32xf32> to vector<16x8xf32>
    %73 = vector.shape_cast %72 : vector<16x8xf32> to vector<2x8x8xf32>
    %74 = vector.extract_strided_slice %7 {offsets = [0, 16], sizes = [16, 8], strides = [1, 1]} : vector<16x32xf32> to vector<16x8xf32>
    %75 = vector.shape_cast %74 : vector<16x8xf32> to vector<2x8x8xf32>
    %76 = vector.extract_strided_slice %9 {offsets = [0, 16], sizes = [16, 8], strides = [1, 1]} : vector<16x32xf32> to vector<16x8xf32>
    %77 = vector.shape_cast %76 : vector<16x8xf32> to vector<2x8x8xf32>
    %cst_28 = arith.constant dense<0.000000e+00> : vector<2x8x8xf32>
    %78 = tpu.matmul %73, %75, %cst_28 {dimension_numbers = #tpu.dot_dimension_numbers<[2], [2], [1], [1], [0, 0, 0, 1, 1, 1], [0], [0]>} : vector<2x8x8xf32>, vector<2x8x8xf32>, vector<2x8x8xf32> -> vector<2x8x8xf32>
    %cst_29 = arith.constant dense<0xFF800000> : vector<2x8xf32>
    %79 = vector.multi_reduction <maximumf>, %78, %cst_29 [2] : vector<2x8x8xf32> to vector<2x8xf32>
    %80 = vector.shape_cast %79 : vector<2x8xf32> to vector<2x8x1xf32>
    %81 = vector.broadcast %80 : vector<2x8x1xf32> to vector<2x8x8xf32>
    %82 = arith.subf %78, %81 : vector<2x8x8xf32>
    %83 = math.exp %82 : vector<2x8x8xf32>
    %cst_30 = arith.constant dense<0.000000e+00> : vector<2x8xf32>
    %84 = vector.multi_reduction <add>, %83, %cst_30 [2] : vector<2x8x8xf32> to vector<2x8xf32>
    %85 = vector.shape_cast %84 : vector<2x8xf32> to vector<2x8x1xf32>
    %86 = tpu.reciprocal %85 : vector<2x8x1xf32> -> vector<2x8x1xf32>
    %87 = vector.broadcast %86 : vector<2x8x1xf32> to vector<2x8x8xf32>
    %88 = arith.mulf %83, %87 : vector<2x8x8xf32>
    %cst_31 = arith.constant dense<0.000000e+00> : vector<2x8x8xf32>
    %89 = tpu.matmul %88, %75, %cst_31 {dimension_numbers = #tpu.dot_dimension_numbers<[2], [1], [1], [2], [0, 0, 0, 1, 1, 2], [0], [0]>} : vector<2x8x8xf32>, vector<2x8x8xf32>, vector<2x8x8xf32> -> vector<2x8x8xf32>
    %90 = arith.mulf %89, %77 : vector<2x8x8xf32>
    %cst_32 = arith.constant dense<0xFF800000> : vector<2x8xf32>
    %91 = vector.multi_reduction <maximumf>, %90, %cst_32 [2] : vector<2x8x8xf32> to vector<2x8xf32>
    %92 = vector.shape_cast %91 : vector<2x8xf32> to vector<2x8x1xf32>
    %93 = vector.broadcast %92 : vector<2x8x1xf32> to vector<2x8x8xf32>
    %94 = arith.subf %90, %93 : vector<2x8x8xf32>
    %95 = math.exp %94 : vector<2x8x8xf32>
    %cst_33 = arith.constant dense<0.000000e+00> : vector<2x8xf32>
    %96 = vector.multi_reduction <add>, %95, %cst_33 [2] : vector<2x8x8xf32> to vector<2x8xf32>
    %97 = vector.shape_cast %96 : vector<2x8xf32> to vector<2x8x1xf32>
    %98 = tpu.reciprocal %97 : vector<2x8x1xf32> -> vector<2x8x1xf32>
    %99 = vector.broadcast %98 : vector<2x8x1xf32> to vector<2x8x8xf32>
    %100 = arith.mulf %95, %99 : vector<2x8x8xf32>
    %101 = arith.mulf %89, %100 : vector<2x8x8xf32>
    %102 = vector.extract_strided_slice %5 {offsets = [0, 24], sizes = [16, 8], strides = [1, 1]} : vector<16x32xf32> to vector<16x8xf32>
    %103 = vector.shape_cast %102 : vector<16x8xf32> to vector<2x8x8xf32>
    %104 = vector.extract_strided_slice %7 {offsets = [0, 24], sizes = [16, 8], strides = [1, 1]} : vector<16x32xf32> to vector<16x8xf32>
    %105 = vector.shape_cast %104 : vector<16x8xf32> to vector<2x8x8xf32>
    %106 = vector.extract_strided_slice %9 {offsets = [0, 24], sizes = [16, 8], strides = [1, 1]} : vector<16x32xf32> to vector<16x8xf32>
    %107 = vector.shape_cast %106 : vector<16x8xf32> to vector<2x8x8xf32>
    %cst_34 = arith.constant dense<0.000000e+00> : vector<2x8x8xf32>
    %108 = tpu.matmul %103, %105, %cst_34 {dimension_numbers = #tpu.dot_dimension_numbers<[2], [2], [1], [1], [0, 0, 0, 1, 1, 1], [0], [0]>} : vector<2x8x8xf32>, vector<2x8x8xf32>, vector<2x8x8xf32> -> vector<2x8x8xf32>
    %cst_35 = arith.constant dense<0xFF800000> : vector<2x8xf32>
    %109 = vector.multi_reduction <maximumf>, %108, %cst_35 [2] : vector<2x8x8xf32> to vector<2x8xf32>
    %110 = vector.shape_cast %109 : vector<2x8xf32> to vector<2x8x1xf32>
    %111 = vector.broadcast %110 : vector<2x8x1xf32> to vector<2x8x8xf32>
    %112 = arith.subf %108, %111 : vector<2x8x8xf32>
    %113 = math.exp %112 : vector<2x8x8xf32>
    %cst_36 = arith.constant dense<0.000000e+00> : vector<2x8xf32>
    %114 = vector.multi_reduction <add>, %113, %cst_36 [2] : vector<2x8x8xf32> to vector<2x8xf32>
    %115 = vector.shape_cast %114 : vector<2x8xf32> to vector<2x8x1xf32>
    %116 = tpu.reciprocal %115 : vector<2x8x1xf32> -> vector<2x8x1xf32>
    %117 = vector.broadcast %116 : vector<2x8x1xf32> to vector<2x8x8xf32>
    %118 = arith.mulf %113, %117 : vector<2x8x8xf32>
    %cst_37 = arith.constant dense<0.000000e+00> : vector<2x8x8xf32>
    %119 = tpu.matmul %118, %105, %cst_37 {dimension_numbers = #tpu.dot_dimension_numbers<[2], [1], [1], [2], [0, 0, 0, 1, 1, 2], [0], [0]>} : vector<2x8x8xf32>, vector<2x8x8xf32>, vector<2x8x8xf32> -> vector<2x8x8xf32>
    %120 = arith.mulf %119, %107 : vector<2x8x8xf32>
    %cst_38 = arith.constant dense<0xFF800000> : vector<2x8xf32>
    %121 = vector.multi_reduction <maximumf>, %120, %cst_38 [2] : vector<2x8x8xf32> to vector<2x8xf32>
    %122 = vector.shape_cast %121 : vector<2x8xf32> to vector<2x8x1xf32>
    %123 = vector.broadcast %122 : vector<2x8x1xf32> to vector<2x8x8xf32>
    %124 = arith.subf %120, %123 : vector<2x8x8xf32>
    %125 = math.exp %124 : vector<2x8x8xf32>
    %cst_39 = arith.constant dense<0.000000e+00> : vector<2x8xf32>
    %126 = vector.multi_reduction <add>, %125, %cst_39 [2] : vector<2x8x8xf32> to vector<2x8xf32>
    %127 = vector.shape_cast %126 : vector<2x8xf32> to vector<2x8x1xf32>
    %128 = tpu.reciprocal %127 : vector<2x8x1xf32> -> vector<2x8x1xf32>
    %129 = vector.broadcast %128 : vector<2x8x1xf32> to vector<2x8x8xf32>
    %130 = arith.mulf %125, %129 : vector<2x8x8xf32>
    %131 = arith.mulf %119, %130 : vector<2x8x8xf32>
    %132 = tpu.concatenate %41, %71, %101, %131 in 2 : vector<2x8x8xf32>, vector<2x8x8xf32>, vector<2x8x8xf32>, vector<2x8x8xf32> -> vector<2x8x32xf32>
    %133 = vector.shape_cast %132 : vector<2x8x32xf32> to vector<16x32xf32>
    %c0_40 = arith.constant 0 : index
    %c0_41 = arith.constant 0 : index
    %134 = vector.load %arg6[%c0_40, %c0_41] : memref<32x32xf32, #tpu.memory_space<vmem>>, vector<32x32xf32>
    %cst_42 = arith.constant dense<0.000000e+00> : vector<16x32xf32>
    %135 = tpu.matmul %133, %134, %cst_42 {dimension_numbers = #tpu.dot_dimension_numbers<[1], [0], [0], [1], [0, 0, 1, 1], [], []>} : vector<16x32xf32>, vector<32x32xf32>, vector<16x32xf32> -> vector<16x32xf32>
    %c0_43 = arith.constant 0 : index
    %c0_44 = arith.constant 0 : index
    %136 = vector.load %arg7[%c0_43, %c0_44] : memref<1x32xf32, #tpu.memory_space<vmem>>, vector<1x32xf32>
    %137 = vector.broadcast %136 : vector<1x32xf32> to vector<16x32xf32>
    %138 = arith.addf %135, %137 : vector<16x32xf32>
    %139 = vector.shape_cast %138 : vector<16x32xf32> to vector<2x8x32xf32>
    %140 = vector.shape_cast %11 : vector<16x128xf32> to vector<2x8x128xf32>
    %141 = vector.extract_strided_slice %140 {offsets = [0, 0, 0], sizes = [1, 8, 128], strides = [1, 1, 1]} : vector<2x8x128xf32> to vector<1x8x128xf32>
    %142 = vector.shape_cast %141 : vector<1x8x128xf32> to vector<8x128xf32>
    %143 = vector.extract_strided_slice %142 {offsets = [0, 0], sizes = [8, 32], strides = [1, 1]} : vector<8x128xf32> to vector<8x32xf32>
    %cst_45 = arith.constant dense<0.000000e+00> : vector<32x128xf32>
    %144 = tpu.matmul %143, %142, %cst_45 {dimension_numbers = #tpu.dot_dimension_numbers<[0], [0], [1], [1], [0, 1, 1, 1], [], []>} : vector<8x32xf32>, vector<8x128xf32>, vector<32x128xf32> -> vector<32x128xf32>
    %cst_46 = arith.constant 0.353553385 : f32
    %145 = vector.broadcast %cst_46 : f32 to vector<32x128xf32>
    %146 = arith.mulf %144, %145 : vector<32x128xf32>
    %147 = arith.negf %146 : vector<32x128xf32>
    %148 = math.exp %147 : vector<32x128xf32>
    %cst_47 = arith.constant 1.000000e+00 : f32
    %149 = vector.broadcast %cst_47 : f32 to vector<32x128xf32>
    %150 = arith.addf %149, %148 : vector<32x128xf32>
    %151 = arith.divf %149, %150 : vector<32x128xf32>
    %152 = vector.extract_strided_slice %139 {offsets = [0, 0, 0], sizes = [1, 8, 32], strides = [1, 1, 1]} : vector<2x8x32xf32> to vector<1x8x32xf32>
    %153 = vector.shape_cast %152 : vector<1x8x32xf32> to vector<8x32xf32>
    %cst_48 = arith.constant dense<0.000000e+00> : vector<8x128xf32>
    %154 = tpu.matmul %153, %151, %cst_48 {dimension_numbers = #tpu.dot_dimension_numbers<[1], [0], [0], [1], [0, 0, 1, 1], [], []>} : vector<8x32xf32>, vector<32x128xf32>, vector<8x128xf32> -> vector<8x128xf32>
    %c0_49 = arith.constant 0 : index
    %c0_50 = arith.constant 0 : index
    %c0_51 = arith.constant 0 : index
    %155 = vector.load %arg9[%c0_49, %c0_50, %c0_51] : memref<2x8x128xf32, #tpu.memory_space<vmem>>, vector<1x8x128xf32>
    %156 = vector.shape_cast %155 : vector<1x8x128xf32> to vector<8x128xf32>
    %157 = vector.shape_cast %154 : vector<8x128xf32> to vector<1x8x128xf32>
    tpu.vector_store %arg9[%c0_49, %c0_50, %c0_51], %157 {strides = array<i32>} : memref<2x8x128xf32, #tpu.memory_space<vmem>>, vector<1x8x128xf32>,
    %158 = vector.extract_strided_slice %140 {offsets = [1, 0, 0], sizes = [1, 8, 128], strides = [1, 1, 1]} : vector<2x8x128xf32> to vector<1x8x128xf32>
    %159 = vector.shape_cast %158 : vector<1x8x128xf32> to vector<8x128xf32>
    %160 = vector.extract_strided_slice %159 {offsets = [0, 0], sizes = [8, 32], strides = [1, 1]} : vector<8x128xf32> to vector<8x32xf32>
    %cst_52 = arith.constant dense<0.000000e+00> : vector<32x128xf32>
    %161 = tpu.matmul %160, %159, %cst_52 {dimension_numbers = #tpu.dot_dimension_numbers<[0], [0], [1], [1], [0, 1, 1, 1], [], []>} : vector<8x32xf32>, vector<8x128xf32>, vector<32x128xf32> -> vector<32x128xf32>
    %cst_53 = arith.constant 0.353553385 : f32
    %162 = vector.broadcast %cst_53 : f32 to vector<32x128xf32>
    %163 = arith.mulf %161, %162 : vector<32x128xf32>
    %164 = arith.negf %163 : vector<32x128xf32>
    %165 = math.exp %164 : vector<32x128xf32>
    %cst_54 = arith.constant 1.000000e+00 : f32
    %166 = vector.broadcast %cst_54 : f32 to vector<32x128xf32>
    %167 = arith.addf %166, %165 : vector<32x128xf32>
    %168 = arith.divf %166, %167 : vector<32x128xf32>
    %169 = vector.extract_strided_slice %139 {offsets = [1, 0, 0], sizes = [1, 8, 32], strides = [1, 1, 1]} : vector<2x8x32xf32> to vector<1x8x32xf32>
    %170 = vector.shape_cast %169 : vector<1x8x32xf32> to vector<8x32xf32>
    %cst_55 = arith.constant dense<0.000000e+00> : vector<8x128xf32>
    %171 = tpu.matmul %170, %168, %cst_55 {dimension_numbers = #tpu.dot_dimension_numbers<[1], [0], [0], [1], [0, 0, 1, 1], [], []>} : vector<8x32xf32>, vector<32x128xf32>, vector<8x128xf32> -> vector<8x128xf32>
    %c1 = arith.constant 1 : index
    %c0_56 = arith.constant 0 : index
    %c0_57 = arith.constant 0 : index
    %172 = vector.load %arg9[%c1, %c0_56, %c0_57] : memref<2x8x128xf32, #tpu.memory_space<vmem>>, vector<1x8x128xf32>
    %173 = vector.shape_cast %172 : vector<1x8x128xf32> to vector<8x128xf32>
    %174 = vector.shape_cast %171 : vector<8x128xf32> to vector<1x8x128xf32>
    tpu.vector_store %arg9[%c1, %c0_56, %c0_57], %174 {strides = array<i32>} : memref<2x8x128xf32, #tpu.memory_space<vmem>>, vector<1x8x128xf32>,
    return
  }
  func.func @transform_0(%arg0: i32) -> (i32, i32, i32) {
    %c0_i32 = arith.constant 0 : i32
    %c0_i32_0 = arith.constant 0 : i32
    %c0_i32_1 = arith.constant 0 : i32
    return %arg0, %c0_i32, %c0_i32_0 : i32, i32, i32
  }
  func.func @transform_1(%arg0: i32) -> (i32, i32, i32) {
    %c0_i32 = arith.constant 0 : i32
    %c0_i32_0 = arith.constant 0 : i32
    %c0_i32_1 = arith.constant 0 : i32
    return %arg0, %c0_i32, %c0_i32_0 : i32, i32, i32
  }
  func.func @transform_2(%arg0: i32) -> (i32, i32) {
    %c0_i32 = arith.constant 0 : i32
    %c0_i32_0 = arith.constant 0 : i32
    %c0_i32_1 = arith.constant 0 : i32
    return %c0_i32, %c0_i32_0 : i32, i32
  }
  func.func @transform_3(%arg0: i32) -> (i32, i32) {
    %c0_i32 = arith.constant 0 : i32
    %c0_i32_0 = arith.constant 0 : i32
    %c0_i32_1 = arith.constant 0 : i32
    return %c0_i32, %c0_i32_0 : i32, i32
  }
  func.func @transform_4(%arg0: i32) -> (i32, i32) {
    %c0_i32 = arith.constant 0 : i32
    %c0_i32_0 = arith.constant 0 : i32
    %c0_i32_1 = arith.constant 0 : i32
    return %c0_i32, %c0_i32_0 : i32, i32
  }
  func.func @transform_5(%arg0: i32) -> (i32, i32) {
    %c0_i32 = arith.constant 0 : i32
    %c0_i32_0 = arith.constant 0 : i32
    %c0_i32_1 = arith.constant 0 : i32
    return %c0_i32, %c0_i32_0 : i32, i32
  }
  func.func @transform_6(%arg0: i32) -> (i32, i32) {
    %c0_i32 = arith.constant 0 : i32
    %c0_i32_0 = arith.constant 0 : i32
    %c0_i32_1 = arith.constant 0 : i32
    return %c0_i32, %c0_i32_0 : i32, i32
  }
  func.func @transform_7(%arg0: i32) -> (i32, i32) {
    %c0_i32 = arith.constant 0 : i32
    %c0_i32_0 = arith.constant 0 : i32
    %c0_i32_1 = arith.constant 0 : i32
    return %c0_i32, %c0_i32_0 : i32, i32
  }
  func.func @transform_8(%arg0: i32) -> (i32, i32, i32) {
    %c0_i32 = arith.constant 0 : i32
    %c0_i32_0 = arith.constant 0 : i32
    %c0_i32_1 = arith.constant 0 : i32
    return %arg0, %c0_i32, %c0_i32_0 : i32, i32, i32
  }
}

</mosaic_0001>

<llo_original>
// kernel: tpu_custom_call.1
$region0: #{tpu_custom_call.1}
  #allocation0 [shape = 'u32[]', space=smem, size = 0x4, offset = 0x4, fixed_abs, tag = 'smem constant byte address 0x4 - core index']
  #allocation1 [shape = 'u32[72,128]{1,0:T(1,128)}', space=vmem, size = 0x9000, scoped, tag = 'internal scratch']
  %s0 = inlined_call_operand.hbm [shape: f32[2,8,32], index: 0, kind: input, shape index: {}]
  %s1 = inlined_call_operand.hbm [shape: f32[2,8,32], index: 1, kind: input, shape index: {}]
  %s2 = inlined_call_operand.hbm [shape: f32[32,32], index: 2, kind: input, shape index: {}]
  %s3 = inlined_call_operand.hbm [shape: f32[32,32], index: 3, kind: input, shape index: {}]
  %s4 = inlined_call_operand.hbm [shape: f32[32,32], index: 4, kind: input, shape index: {}]
  %s5 = inlined_call_operand.hbm [shape: f32[32,32], index: 5, kind: input, shape index: {}]
  %s6 = inlined_call_operand.vmem [shape: f32[1,32], index: 6, kind: input, shape index: {}]
  %s7 = inlined_call_operand.hbm [shape: f32[32,128], index: 7, kind: input, shape index: {}]
  %s8 = inlined_call_operand.hbm [shape: f32[2,8,128], index: 8, kind: output, shape index: {}]
  %s9 = sld [smem:[#allocation0]]
  $region70: #{tpu_custom_call.1} parent=0
    _
  %s11 = ssub.s32 1, %s9
  %s12 = scalar_select 0, %s11, %s9
  $region1: #{tpu_custom_call.1} parent=0
    #allocation2 [shape = 'u8[8192]{0}', space=vmem, size = 0x2000, scoped, tag = 'input window, operand 0, single buffered']
    #allocation3 [shape = 's32[1]{0}', space=sflag, size = 0x4, scoped, tag = 'scoped memory for tpu_custom_call.1']
    #allocation4 [shape = 's32[1]{0}', space=sflag, size = 0x4, scoped, tag = 'scoped memory for tpu_custom_call.1']
    #allocation5 [shape = 'u8[8192]{0}', space=vmem, size = 0x2000, scoped, tag = 'input window, operand 1, single buffered']
    #allocation6 [shape = 's32[1]{0}', space=sflag, size = 0x4, scoped, tag = 'scoped memory for tpu_custom_call.1']
    #allocation7 [shape = 'u8[16384]{0}', space=vmem, size = 0x4000, scoped, tag = 'input window, operand 2, single buffered']
    #allocation8 [shape = 'u8[16384]{0}', space=vmem, size = 0x4000, scoped, tag = 'input window, operand 3, single buffered']
    #allocation9 [shape = 's32[1]{0}', space=sflag, size = 0x4, scoped, tag = 'scoped memory for tpu_custom_call.1']
    #allocation10 [shape = 'u8[16384]{0}', space=vmem, size = 0x4000, scoped, tag = 'input window, operand 4, single buffered']
    #allocation11 [shape = 'u8[16384]{0}', space=vmem, size = 0x4000, scoped, tag = 'input window, operand 5, single buffered']
    #allocation12 [shape = 's32[1]{0}', space=sflag, size = 0x4, scoped, tag = 'scoped memory for tpu_custom_call.1']
    #allocation13 [shape = 'u8[16384]{0}', space=vmem, size = 0x4000, scoped, tag = 'input window, operand 7, single buffered']
    #allocation14 [shape = 'u8[8192]{0}', space=vmem, size = 0x2000, scoped, tag = 'output window, operand 0, single buffered']
    %13 = vsyncpa [#allocation3], 0
    %14 = vsyncpa [#allocation6], 0
    %15 = vsyncpa [#allocation9], 0
    %16 = vsyncpa [#allocation12], 0
    %17 = vsyncpa [#allocation4], 0
    // Predicated region
    $region2: #{tpu_custom_call.1} parent=1 // pred_check
      _
    $region3: #{tpu_custom_call.1} parent=1 // pred_check_branch
      %19 = sbr.rel (0) target = $region5
    $region4: #{tpu_custom_call.1} parent=1 // pred_region
      %21 = vsyncadd [#allocation3], 0
      %s22 = sshll.u32 %s0, 4
      %s23 = int_to_ptr.hbm [resolvable:$true] %s22
      %s24 = sshll.u32 [#allocation2], 4
      %s25 = int_to_ptr.vmem [resolvable:$true] %s24
      %30 = dma.hbm_to_vmem [thread:$0]  %s23, 256, %s25, [#allocation3], 128, 128, 8
    $region5: #{tpu_custom_call.1} parent=1 // pred_fallthru
      _
    // Predicated region
    $region6: #{tpu_custom_call.1} parent=1 // pred_check
      _
    $region7: #{tpu_custom_call.1} parent=1 // pred_check_branch
      %32 = sbr.rel (0) target = $region9
    $region8: #{tpu_custom_call.1} parent=1 // pred_region
      %34 = vsyncadd [#allocation6], 0
      %s35 = sshll.u32 %s1, 4
      %s36 = int_to_ptr.hbm [resolvable:$true] %s35
      %s37 = sshll.u32 [#allocation5], 4
      %s38 = int_to_ptr.vmem [resolvable:$true] %s37
      %43 = dma.hbm_to_vmem [thread:$0]  %s36, 256, %s38, [#allocation6], 128, 128, 8
    $region9: #{tpu_custom_call.1} parent=1 // pred_fallthru
      _
    // Predicated region
    $region10: #{tpu_custom_call.1} parent=1 // pred_check
      _
    $region11: #{tpu_custom_call.1} parent=1 // pred_check_branch
      %45 = sbr.rel (0) target = $region13
    $region12: #{tpu_custom_call.1} parent=1 // pred_region
      %47 = vsyncadd [#allocation6], 0
      %s48 = sshll.u32 %s2, 4
      %s49 = int_to_ptr.hbm [resolvable:$true] %s48
      %s50 = sshll.u32 [#allocation7], 4
      %s51 = int_to_ptr.vmem [resolvable:$true] %s50
      %56 = dma.hbm_to_vmem [thread:$0]  %s49, 512, %s51, [#allocation6], 128, 128, 8
    $region13: #{tpu_custom_call.1} parent=1 // pred_fallthru
      _
    // Predicated region
    $region14: #{tpu_custom_call.1} parent=1 // pred_check
      _
    $region15: #{tpu_custom_call.1} parent=1 // pred_check_branch
      %58 = sbr.rel (0) target = $region17
    $region16: #{tpu_custom_call.1} parent=1 // pred_region
      %60 = vsyncadd [#allocation9], 0
      %s61 = sshll.u32 %s3, 4
      %s62 = int_to_ptr.hbm [resolvable:$true] %s61
      %s63 = sshll.u32 [#allocation8], 4
      %s64 = int_to_ptr.vmem [resolvable:$true] %s63
      %69 = dma.hbm_to_vmem [thread:$0]  %s62, 512, %s64, [#allocation9], 128, 128, 8
    $region17: #{tpu_custom_call.1} parent=1 // pred_fallthru
      _
    // Predicated region
    $region18: #{tpu_custom_call.1} parent=1 // pred_check
      _
    $region19: #{tpu_custom_call.1} parent=1 // pred_check_branch
      %71 = sbr.rel (0) target = $region21
    $region20: #{tpu_custom_call.1} parent=1 // pred_region
      %73 = vsyncadd [#allocation9], 0
      %s74 = sshll.u32 %s4, 4
      %s75 = int_to_ptr.hbm [resolvable:$true] %s74
      %s76 = sshll.u32 [#allocation10], 4
      %s77 = int_to_ptr.vmem [resolvable:$true] %s76
      %82 = dma.hbm_to_vmem [thread:$0]  %s75, 512, %s77, [#allocation9], 128, 128, 8
    $region21: #{tpu_custom_call.1} parent=1 // pred_fallthru
      _
    // Predicated region
    $region22: #{tpu_custom_call.1} parent=1 // pred_check
      _
    $region23: #{tpu_custom_call.1} parent=1 // pred_check_branch
      %84 = sbr.rel (0) target = $region25
    $region24: #{tpu_custom_call.1} parent=1 // pred_region
      %86 = vsyncadd [#allocation12], 0
      %s87 = sshll.u32 %s5, 4
      %s88 = int_to_ptr.hbm [resolvable:$true] %s87
      %s89 = sshll.u32 [#allocation11], 4
      %s90 = int_to_ptr.vmem [resolvable:$true] %s89
      %95 = dma.hbm_to_vmem [thread:$0]  %s88, 512, %s90, [#allocation12], 128, 128, 8
    $region25: #{tpu_custom_call.1} parent=1 // pred_fallthru
      _
    // Predicated region
    $region26: #{tpu_custom_call.1} parent=1 // pred_check
      _
    $region27: #{tpu_custom_call.1} parent=1 // pred_check_branch
      %97 = sbr.rel (0) target = $region29
    $region28: #{tpu_custom_call.1} parent=1 // pred_region
      _
    $region29: #{tpu_custom_call.1} parent=1 // pred_fallthru
      _
    // Predicated region
    $region30: #{tpu_custom_call.1} parent=1 // pred_check
      _
    $region31: #{tpu_custom_call.1} parent=1 // pred_check_branch
      %99 = sbr.rel (0) target = $region33
    $region32: #{tpu_custom_call.1} parent=1 // pred_region
      %101 = vsyncadd [#allocation12], 0
      %s102 = sshll.u32 %s7, 4
      %s103 = int_to_ptr.hbm [resolvable:$true] %s102
      %s104 = sshll.u32 [#allocation13], 4
      %s105 = int_to_ptr.vmem [resolvable:$true] %s104
      %110 = dma.hbm_to_vmem [thread:$0]  %s103, 512, %s105, [#allocation12], 128, 128, 8
    $region33: #{tpu_custom_call.1} parent=1 // pred_fallthru
      _
    // Predicated region
    $region34: #{tpu_custom_call.1} parent=1 // pred_check
      _
    $region35: #{tpu_custom_call.1} parent=1 // pred_check_branch
      %112 = sbr.rel (0) target = $region37
    $region36: #{tpu_custom_call.1} parent=1 // pred_region
      %114 = dma.done [#allocation3], 256
    $region37: #{tpu_custom_call.1} parent=1 // pred_fallthru
      _
    // Predicated region
    $region38: #{tpu_custom_call.1} parent=1 // pred_check
      _
    $region39: #{tpu_custom_call.1} parent=1 // pred_check_branch
      %116 = sbr.rel (0) target = $region41
    $region40: #{tpu_custom_call.1} parent=1 // pred_region
      %118 = dma.done [#allocation6], 256
    $region41: #{tpu_custom_call.1} parent=1 // pred_fallthru
      _
    // Predicated region
    $region42: #{tpu_custom_call.1} parent=1 // pred_check
      _
    $region43: #{tpu_custom_call.1} parent=1 // pred_check_branch
      %120 = sbr.rel (0) target = $region45
    $region44: #{tpu_custom_call.1} parent=1 // pred_region
      %122 = dma.done [#allocation6], 512
    $region45: #{tpu_custom_call.1} parent=1 // pred_fallthru
      _
    // Predicated region
    $region46: #{tpu_custom_call.1} parent=1 // pred_check
      _
    $region47: #{tpu_custom_call.1} parent=1 // pred_check_branch
      %124 = sbr.rel (0) target = $region49
    $region48: #{tpu_custom_call.1} parent=1 // pred_region
      %126 = dma.done [#allocation9], 512
    $region49: #{tpu_custom_call.1} parent=1 // pred_fallthru
      _
    // Predicated region
    $region50: #{tpu_custom_call.1} parent=1 // pred_check
      _
    $region51: #{tpu_custom_call.1} parent=1 // pred_check_branch
      %128 = sbr.rel (0) target = $region53
    $region52: #{tpu_custom_call.1} parent=1 // pred_region
      %130 = dma.done [#allocation9], 512
    $region53: #{tpu_custom_call.1} parent=1 // pred_fallthru
      _
    // Predicated region
    $region54: #{tpu_custom_call.1} parent=1 // pred_check
      _
    $region55: #{tpu_custom_call.1} parent=1 // pred_check_branch
      %132 = sbr.rel (0) target = $region57
    $region56: #{tpu_custom_call.1} parent=1 // pred_region
      %134 = dma.done [#allocation12], 512
    $region57: #{tpu_custom_call.1} parent=1 // pred_fallthru
      _
    // Predicated region
    $region58: #{tpu_custom_call.1} parent=1 // pred_check
      _
    $region59: #{tpu_custom_call.1} parent=1 // pred_check_branch
      %136 = sbr.rel (0) target = $region61
    $region60: #{tpu_custom_call.1} parent=1 // pred_region
      %138 = dma.done [#allocation12], 512
    $region61: #{tpu_custom_call.1} parent=1 // pred_fallthru
      _
    %v139 = vld [vmem:[#allocation2] sm:$0xff]
    %v140 = vld [vmem:[#allocation2 + $0x8] sm:$0xff]
    %v141 = vld [vmem:[#allocation5] sm:$0xff]
    %v142 = vld [vmem:[#allocation5 + $0x8] sm:$0xff]
    %v143 = vld [vmem:[#allocation7] sm:$0xff]
    %v144 = vld [vmem:[#allocation7 + $0x8] sm:$0xff]
    %v145 = vld [vmem:[#allocation7 + $0x10] sm:$0xff]
    %v146 = vld [vmem:[#allocation7 + $0x18] sm:$0xff]
    %vm147 = vcmask 261120
    %v149 = vsel %vm147, %v139, 0
    %v152 = vsel %vm147, %v140, 0
    %154 = vmatpush.msra.mxu0 0.0
    %155 = vmatpush.msra.mxu0 0.0
    %156 = vmatpush.msra.mxu0 0.0
    %157 = vmatpush.msra.mxu0 0.0
    %158 = vmatpush.msra.mxu0 0.0
    %159 = vmatpush.msra.mxu0 0.0
    %160 = vmatpush.msra.mxu0 0.0
    %161 = vmatpush.msra.mxu0 0.0
    %162 = vmatpush.msra.mxu0 0.0
    %163 = vmatpush.msra.mxu0 0.0
    %164 = vmatpush.msra.mxu0 0.0
    %165 = vmatpush.msra.mxu0 0.0
    %166 = vmatpush.msra.mxu0 %v146
    %167 = vmatpush.msra.mxu0 %v145
    %168 = vmatpush.msra.mxu0 %v144
    %169 = vmatpush.msra.mxu0 %v143
    %170 = vmatmul.f32.gmra.mxu0 %v149
    %v171 = vpop.f32.mrf.mxu0
    %v172 = vadd.f32 0.0, %v171
    %173 = vmatmul.f32.gmra.mxu0 %v152
    %v174 = vpop.f32.mrf.mxu0
    %v175 = vadd.f32 0.0, %v174
    %176 = vdwg.mxu0
    %v177 = vld [vmem:[#allocation8] sm:$0xff]
    %v178 = vld [vmem:[#allocation8 + $0x8] sm:$0xff]
    %v179 = vld [vmem:[#allocation8 + $0x10] sm:$0xff]
    %v180 = vld [vmem:[#allocation8 + $0x18] sm:$0xff]
    %181 = vmatpush.msra.mxu0 0.0
    %182 = vmatpush.msra.mxu0 0.0
    %183 = vmatpush.msra.mxu0 0.0
    %184 = vmatpush.msra.mxu0 0.0
    %185 = vmatpush.msra.mxu0 0.0
    %186 = vmatpush.msra.mxu0 0.0
    %187 = vmatpush.msra.mxu0 0.0
    %188 = vmatpush.msra.mxu0 0.0
    %189 = vmatpush.msra.mxu0 0.0
    %190 = vmatpush.msra.mxu0 0.0
    %191 = vmatpush.msra.mxu0 0.0
    %192 = vmatpush.msra.mxu0 0.0
    %193 = vmatpush.msra.mxu0 %v180
    %194 = vmatpush.msra.mxu0 %v179
    %195 = vmatpush.msra.mxu0 %v178
    %196 = vmatpush.msra.mxu0 %v177
    %197 = vmatmul.f32.gmra.mxu0 %v149
    %v198 = vpop.f32.mrf.mxu0
    %v199 = vadd.f32 0.0, %v198
    %200 = vmatmul.f32.gmra.mxu0 %v152
    %v201 = vpop.f32.mrf.mxu0
    %v202 = vadd.f32 0.0, %v201
    %203 = vdwg.mxu0
    %v204 = vld [vmem:[#allocation10] sm:$0xff]
    %v205 = vld [vmem:[#allocation10 + $0x8] sm:$0xff]
    %v206 = vld [vmem:[#allocation10 + $0x10] sm:$0xff]
    %v207 = vld [vmem:[#allocation10 + $0x18] sm:$0xff]
    %v209 = vsel %vm147, %v141, 0
    %v212 = vsel %vm147, %v142, 0
    %214 = vmatpush.msra.mxu0 0.0
    %215 = vmatpush.msra.mxu0 0.0
    %216 = vmatpush.msra.mxu0 0.0
    %217 = vmatpush.msra.mxu0 0.0
    %218 = vmatpush.msra.mxu0 0.0
    %219 = vmatpush.msra.mxu0 0.0
    %220 = vmatpush.msra.mxu0 0.0
    %221 = vmatpush.msra.mxu0 0.0
    %222 = vmatpush.msra.mxu0 0.0
    %223 = vmatpush.msra.mxu0 0.0
    %224 = vmatpush.msra.mxu0 0.0
    %225 = vmatpush.msra.mxu0 0.0
    %226 = vmatpush.msra.mxu0 %v207
    %227 = vmatpush.msra.mxu0 %v206
    %228 = vmatpush.msra.mxu0 %v205
    %229 = vmatpush.msra.mxu0 %v204
    %230 = vmatmul.f32.gmra.mxu0 %v209
    %v231 = vpop.f32.mrf.mxu0
    %v232 = vadd.f32 0.0, %v231
    %233 = vmatmul.f32.gmra.mxu0 %v212
    %v234 = vpop.f32.mrf.mxu0
    %v235 = vadd.f32 0.0, %v234
    %236 = vdwg.mxu0
    %v237 = vld [vmem:[#allocation13] sm:$0xff]
    %v238 = vld [vmem:[#allocation13 + $0x8] sm:$0xff]
    %v239 = vld [vmem:[#allocation13 + $0x10] sm:$0xff]
    %v240 = vld [vmem:[#allocation13 + $0x18] sm:$0xff]
    %241 = vmatpush.msra.mxu0 0.0
    %242 = vmatpush.msra.mxu0 0.0
    %243 = vmatpush.msra.mxu0 0.0
    %244 = vmatpush.msra.mxu0 0.0
    %245 = vmatpush.msra.mxu0 0.0
    %246 = vmatpush.msra.mxu0 0.0
    %247 = vmatpush.msra.mxu0 0.0
    %248 = vmatpush.msra.mxu0 0.0
    %249 = vmatpush.msra.mxu0 0.0
    %250 = vmatpush.msra.mxu0 0.0
    %251 = vmatpush.msra.mxu0 0.0
    %252 = vmatpush.msra.mxu0 0.0
    %253 = vmatpush.msra.mxu0 %v240
    %254 = vmatpush.msra.mxu0 %v239
    %255 = vmatpush.msra.mxu0 %v238
    %256 = vmatpush.msra.mxu0 %v237
    %257 = vmatmul.f32.gmra.mxu0 %v149
    %v258 = vpop.f32.mrf.mxu0
    %v259 = vadd.f32 0.0, %v258
    %260 = vmatmul.f32.gmra.mxu0 %v152
    %v261 = vpop.f32.mrf.mxu0
    %v262 = vadd.f32 0.0, %v261
    %263 = vdwg.mxu0
    %vm264 = vcmask 64512
    %v266 = vsel %vm264, %v172, 0
    %v269 = vsel %vm264, %v199, 0
    %271 = vmatpush.xpose.msra.mxu0 0.0
    %272 = vmatpush.xpose.msra.mxu0 0.0
    %273 = vmatpush.xpose.msra.mxu0 0.0
    %274 = vmatpush.xpose.msra.mxu0 0.0
    %275 = vmatpush.xpose.msra.mxu0 0.0
    %276 = vmatpush.xpose.msra.mxu0 0.0
    %277 = vmatpush.xpose.msra.mxu0 0.0
    %278 = vmatpush.xpose.msra.mxu0 0.0
    %279 = vmatpush.xpose.msra.mxu0 0.0
    %280 = vmatpush.xpose.msra.mxu0 0.0
    %281 = vmatpush.xpose.msra.mxu0 0.0
    %282 = vmatpush.xpose.msra.mxu0 0.0
    %283 = vmatpush.xpose.msra.mxu0 0.0
    %284 = vmatpush.xpose.msra.mxu0 0.0
    %285 = vmatpush.xpose.msra.mxu0 0.0
    %286 = vmatpush.xpose.msra.mxu0 %v269
    %287 = vmatmul.f32.gmra.mxu0 %v266
    %v288 = vpop.f32.mrf.mxu0
    %v289 = vadd.f32 0.0, %v288
    %290 = vdwg.mxu0
    %v292 = vsel %vm264, %v175, 0
    %v295 = vsel %vm264, %v202, 0
    %297 = vmatpush.xpose.msra.mxu0 0.0
    %298 = vmatpush.xpose.msra.mxu0 0.0
    %299 = vmatpush.xpose.msra.mxu0 0.0
    %300 = vmatpush.xpose.msra.mxu0 0.0
    %301 = vmatpush.xpose.msra.mxu0 0.0
    %302 = vmatpush.xpose.msra.mxu0 0.0
    %303 = vmatpush.xpose.msra.mxu0 0.0
    %304 = vmatpush.xpose.msra.mxu0 0.0
    %305 = vmatpush.xpose.msra.mxu0 0.0
    %306 = vmatpush.xpose.msra.mxu0 0.0
    %307 = vmatpush.xpose.msra.mxu0 0.0
    %308 = vmatpush.xpose.msra.mxu0 0.0
    %309 = vmatpush.xpose.msra.mxu0 0.0
    %310 = vmatpush.xpose.msra.mxu0 0.0
    %311 = vmatpush.xpose.msra.mxu0 0.0
    %312 = vmatpush.xpose.msra.mxu0 %v295
    %313 = vmatmul.f32.gmra.mxu0 %v292
    %v314 = vpop.f32.mrf.mxu0
    %v315 = vadd.f32 0.0, %v314
    %316 = vdwg.mxu0
    %v317 = vsel %vm264, %v289, -inf
    %318 = vmax.xlane.f32.xlu0 %v317
    %v319 = vpop.xlane.xlu0 %318
    %v320 = vsel %vm264, %v315, -inf
    %321 = vmax.xlane.f32.xlu0 %v320
    %v322 = vpop.xlane.xlu0 %321
    %v323 = vsub.f32 %v289, %v319
    %v324 = vsub.f32 %v315, %v322
    %v325 = vmul.f32 %v323, 1.442695
    %v326 = vpow.pop %v325
    %v327 = vmul.f32 %v324, 1.442695
    %v328 = vpow.pop %v327
    %v329 = vsel %vm264, %v326, 0.0
    %330 = vadd.xlane.f32.xlu0 %v329
    %v331 = vpop.xlane.xlu0 %330
    %v332 = vsel %vm264, %v328, 0.0
    %333 = vadd.xlane.f32.xlu0 %v332
    %v334 = vpop.xlane.xlu0 %333
    %v335 = vrcp.pop %v331
    %v336 = vmul.f32 %v331, %v335
    %v337 = vsub.f32 1.0, %v336
    %v338 = vmul.f32 %v335, %v337
    %v339 = vadd.f32 %v335, %v338
    %vm340 = vweird.f32 %v331
    %vm341 = vweird.f32 %v335
    %vm342 = vmor %vm340, %vm341
    %v343 = vsel %vm342, %v335, %v339
    %v344 = vand.u32 2147483647, %v331
    %vm345 = vcmp.eq.f32.partialorder %v344, 8.507059e+37
    %v346 = vand.u32 %v331, 2147483648
    %v347 = vor.u32 1.1754944e-38, %v346
    %v348 = vsel %vm345, %v347, %v343
    %v349 = vrcp.pop %v334
    %v350 = vmul.f32 %v334, %v349
    %v351 = vsub.f32 1.0, %v350
    %v352 = vmul.f32 %v349, %v351
    %v353 = vadd.f32 %v349, %v352
    %vm354 = vweird.f32 %v334
    %vm355 = vweird.f32 %v349
    %vm356 = vmor %vm354, %vm355
    %v357 = vsel %vm356, %v349, %v353
    %v358 = vand.u32 2147483647, %v334
    %vm359 = vcmp.eq.f32.partialorder %v358, 8.507059e+37
    %v360 = vand.u32 %v334, 2147483648
    %v361 = vor.u32 1.1754944e-38, %v360
    %v362 = vsel %vm359, %v361, %v357
    %v363 = vmul.f32 %v326, %v348
    %v364 = vmul.f32 %v328, %v362
    %v366 = vsel %vm264, %v363, 0
    %368 = vmatpush.msra.mxu0 0.0
    %369 = vmatpush.msra.mxu0 0.0
    %370 = vmatpush.msra.mxu0 0.0
    %371 = vmatpush.msra.mxu0 0.0
    %372 = vmatpush.msra.mxu0 0.0
    %373 = vmatpush.msra.mxu0 0.0
    %374 = vmatpush.msra.mxu0 0.0
    %375 = vmatpush.msra.mxu0 0.0
    %376 = vmatpush.msra.mxu0 0.0
    %377 = vmatpush.msra.mxu0 0.0
    %378 = vmatpush.msra.mxu0 0.0
    %379 = vmatpush.msra.mxu0 0.0
    %380 = vmatpush.msra.mxu0 0.0
    %381 = vmatpush.msra.mxu0 0.0
    %382 = vmatpush.msra.mxu0 0.0
    %383 = vmatpush.msra.mxu0 %v199
    %384 = vmatmul.f32.gmra.mxu0 %v366
    %v385 = vpop.f32.mrf.mxu0
    %v386 = vadd.f32 0.0, %v385
    %387 = vdwg.mxu0
    %v389 = vsel %vm264, %v364, 0
    %391 = vmatpush.msra.mxu0 0.0
    %392 = vmatpush.msra.mxu0 0.0
    %393 = vmatpush.msra.mxu0 0.0
    %394 = vmatpush.msra.mxu0 0.0
    %395 = vmatpush.msra.mxu0 0.0
    %396 = vmatpush.msra.mxu0 0.0
    %397 = vmatpush.msra.mxu0 0.0
    %398 = vmatpush.msra.mxu0 0.0
    %399 = vmatpush.msra.mxu0 0.0
    %400 = vmatpush.msra.mxu0 0.0
    %401 = vmatpush.msra.mxu0 0.0
    %402 = vmatpush.msra.mxu0 0.0
    %403 = vmatpush.msra.mxu0 0.0
    %404 = vmatpush.msra.mxu0 0.0
    %405 = vmatpush.msra.mxu0 0.0
    %406 = vmatpush.msra.mxu0 %v202
    %407 = vmatmul.f32.gmra.mxu0 %v389
    %v408 = vpop.f32.mrf.mxu0
    %v409 = vadd.f32 0.0, %v408
    %410 = vdwg.mxu0
    %v411 = vmul.f32 %v386, %v232
    %v412 = vmul.f32 %v409, %v235
    %v413 = vsel %vm264, %v411, -inf
    %414 = vmax.xlane.f32.xlu0 %v413
    %v415 = vpop.xlane.xlu0 %414
    %v416 = vsel %vm264, %v412, -inf
    %417 = vmax.xlane.f32.xlu0 %v416
    %v418 = vpop.xlane.xlu0 %417
    %v419 = vsub.f32 %v411, %v415
    %v420 = vsub.f32 %v412, %v418
    %v421 = vmul.f32 %v419, 1.442695
    %v422 = vpow.pop %v421
    %v423 = vmul.f32 %v420, 1.442695
    %v424 = vpow.pop %v423
    %v425 = vsel %vm264, %v422, 0.0
    %426 = vadd.xlane.f32.xlu0 %v425
    %v427 = vpop.xlane.xlu0 %426
    %v428 = vsel %vm264, %v424, 0.0
    %429 = vadd.xlane.f32.xlu0 %v428
    %v430 = vpop.xlane.xlu0 %429
    %v431 = vrcp.pop %v427
    %v432 = vmul.f32 %v427, %v431
    %v433 = vsub.f32 1.0, %v432
    %v434 = vmul.f32 %v431, %v433
    %v435 = vadd.f32 %v431, %v434
    %vm436 = vweird.f32 %v427
    %vm437 = vweird.f32 %v431
    %vm438 = vmor %vm436, %vm437
    %v439 = vsel %vm438, %v431, %v435
    %v440 = vand.u32 2147483647, %v427
    %vm441 = vcmp.eq.f32.partialorder %v440, 8.507059e+37
    %v442 = vand.u32 %v427, 2147483648
    %v443 = vor.u32 1.1754944e-38, %v442
    %v444 = vsel %vm441, %v443, %v439
    %v445 = vrcp.pop %v430
    %v446 = vmul.f32 %v430, %v445
    %v447 = vsub.f32 1.0, %v446
    %v448 = vmul.f32 %v445, %v447
    %v449 = vadd.f32 %v445, %v448
    %vm450 = vweird.f32 %v430
    %vm451 = vweird.f32 %v445
    %vm452 = vmor %vm450, %vm451
    %v453 = vsel %vm452, %v445, %v449
    %v454 = vand.u32 2147483647, %v430
    %vm455 = vcmp.eq.f32.partialorder %v454, 8.507059e+37
    %v456 = vand.u32 %v430, 2147483648
    %v457 = vor.u32 1.1754944e-38, %v456
    %v458 = vsel %vm455, %v457, %v453
    %v459 = vmul.f32 %v422, %v444
    %v460 = vmul.f32 %v424, %v458
    %v461 = vmul.f32 %v386, %v459
    %v462 = vmul.f32 %v409, %v460
    %463 = vrot.lane.b32.xlu0 %v172, 120
    %v464 = vpop.permute.xlu0 %463
    %465 = vrot.lane.b32.xlu0 %v199, 120
    %v466 = vpop.permute.xlu0 %465
    %v467 = vsel %vm264, %v464, 0
    %v469 = vsel %vm264, %v466, 0
    %471 = vmatpush.xpose.msra.mxu0 0.0
    %472 = vmatpush.xpose.msra.mxu0 0.0
    %473 = vmatpush.xpose.msra.mxu0 0.0
    %474 = vmatpush.xpose.msra.mxu0 0.0
    %475 = vmatpush.xpose.msra.mxu0 0.0
    %476 = vmatpush.xpose.msra.mxu0 0.0
    %477 = vmatpush.xpose.msra.mxu0 0.0
    %478 = vmatpush.xpose.msra.mxu0 0.0
    %479 = vmatpush.xpose.msra.mxu0 0.0
    %480 = vmatpush.xpose.msra.mxu0 0.0
    %481 = vmatpush.xpose.msra.mxu0 0.0
    %482 = vmatpush.xpose.msra.mxu0 0.0
    %483 = vmatpush.xpose.msra.mxu0 0.0
    %484 = vmatpush.xpose.msra.mxu0 0.0
    %485 = vmatpush.xpose.msra.mxu0 0.0
    %486 = vmatpush.xpose.msra.mxu0 %v469
    %487 = vmatmul.f32.gmra.mxu0 %v467
    %v488 = vpop.f32.mrf.mxu0
    %v489 = vadd.f32 0.0, %v488
    %490 = vdwg.mxu0
    %491 = vrot.lane.b32.xlu0 %v175, 120
    %v492 = vpop.permute.xlu0 %491
    %493 = vrot.lane.b32.xlu0 %v202, 120
    %v494 = vpop.permute.xlu0 %493
    %v495 = vsel %vm264, %v492, 0
    %v497 = vsel %vm264, %v494, 0
    %499 = vmatpush.xpose.msra.mxu0 0.0
    %500 = vmatpush.xpose.msra.mxu0 0.0
    %501 = vmatpush.xpose.msra.mxu0 0.0
    %502 = vmatpush.xpose.msra.mxu0 0.0
    %503 = vmatpush.xpose.msra.mxu0 0.0
    %504 = vmatpush.xpose.msra.mxu0 0.0
    %505 = vmatpush.xpose.msra.mxu0 0.0
    %506 = vmatpush.xpose.msra.mxu0 0.0
    %507 = vmatpush.xpose.msra.mxu0 0.0
    %508 = vmatpush.xpose.msra.mxu0 0.0
    %509 = vmatpush.xpose.msra.mxu0 0.0
    %510 = vmatpush.xpose.msra.mxu0 0.0
    %511 = vmatpush.xpose.msra.mxu0 0.0
    %512 = vmatpush.xpose.msra.mxu0 0.0
    %513 = vmatpush.xpose.msra.mxu0 0.0
    %514 = vmatpush.xpose.msra.mxu0 %v497
    %515 = vmatmul.f32.gmra.mxu0 %v495
    %v516 = vpop.f32.mrf.mxu0
    %v517 = vadd.f32 0.0, %v516
    %518 = vdwg.mxu0
    %v519 = vsel %vm264, %v489, -inf
    %520 = vmax.xlane.f32.xlu0 %v519
    %v521 = vpop.xlane.xlu0 %520
    %v522 = vsel %vm264, %v517, -inf
    %523 = vmax.xlane.f32.xlu0 %v522
    %v524 = vpop.xlane.xlu0 %523
    %v525 = vsub.f32 %v489, %v521
    %v526 = vsub.f32 %v517, %v524
    %v527 = vmul.f32 %v525, 1.442695
    %v528 = vpow.pop %v527
    %v529 = vmul.f32 %v526, 1.442695
    %v530 = vpow.pop %v529
    %v531 = vsel %vm264, %v528, 0.0
    %532 = vadd.xlane.f32.xlu0 %v531
    %v533 = vpop.xlane.xlu0 %532
    %v534 = vsel %vm264, %v530, 0.0
    %535 = vadd.xlane.f32.xlu0 %v534
    %v536 = vpop.xlane.xlu0 %535
    %v537 = vrcp.pop %v533
    %v538 = vmul.f32 %v533, %v537
    %v539 = vsub.f32 1.0, %v538
    %v540 = vmul.f32 %v537, %v539
    %v541 = vadd.f32 %v537, %v540
    %vm542 = vweird.f32 %v533
    %vm543 = vweird.f32 %v537
    %vm544 = vmor %vm542, %vm543
    %v545 = vsel %vm544, %v537, %v541
    %v546 = vand.u32 2147483647, %v533
    %vm547 = vcmp.eq.f32.partialorder %v546, 8.507059e+37
    %v548 = vand.u32 %v533, 2147483648
    %v549 = vor.u32 1.1754944e-38, %v548
    %v550 = vsel %vm547, %v549, %v545
    %v551 = vrcp.pop %v536
    %v552 = vmul.f32 %v536, %v551
    %v553 = vsub.f32 1.0, %v552
    %v554 = vmul.f32 %v551, %v553
    %v555 = vadd.f32 %v551, %v554
    %vm556 = vweird.f32 %v536
    %vm557 = vweird.f32 %v551
    %vm558 = vmor %vm556, %vm557
    %v559 = vsel %vm558, %v551, %v555
    %v560 = vand.u32 2147483647, %v536
    %vm561 = vcmp.eq.f32.partialorder %v560, 8.507059e+37
    %v562 = vand.u32 %v536, 2147483648
    %v563 = vor.u32 1.1754944e-38, %v562
    %v564 = vsel %vm561, %v563, %v559
    %v565 = vmul.f32 %v528, %v550
    %v566 = vmul.f32 %v530, %v564
    %v569 = vsel %vm264, %v565, 0
    %571 = vmatpush.msra.mxu0 0.0
    %572 = vmatpush.msra.mxu0 0.0
    %573 = vmatpush.msra.mxu0 0.0
    %574 = vmatpush.msra.mxu0 0.0
    %575 = vmatpush.msra.mxu0 0.0
    %576 = vmatpush.msra.mxu0 0.0
    %577 = vmatpush.msra.mxu0 0.0
    %578 = vmatpush.msra.mxu0 0.0
    %579 = vmatpush.msra.mxu0 0.0
    %580 = vmatpush.msra.mxu0 0.0
    %581 = vmatpush.msra.mxu0 0.0
    %582 = vmatpush.msra.mxu0 0.0
    %583 = vmatpush.msra.mxu0 0.0
    %584 = vmatpush.msra.mxu0 0.0
    %585 = vmatpush.msra.mxu0 0.0
    %586 = vmatpush.msra.mxu0 %v466
    %587 = vmatmul.f32.gmra.mxu0 %v569
    %v588 = vpop.f32.mrf.mxu0
    %v589 = vadd.f32 0.0, %v588
    %590 = vdwg.mxu0
    %v593 = vsel %vm264, %v566, 0
    %595 = vmatpush.msra.mxu0 0.0
    %596 = vmatpush.msra.mxu0 0.0
    %597 = vmatpush.msra.mxu0 0.0
    %598 = vmatpush.msra.mxu0 0.0
    %599 = vmatpush.msra.mxu0 0.0
    %600 = vmatpush.msra.mxu0 0.0
    %601 = vmatpush.msra.mxu0 0.0
    %602 = vmatpush.msra.mxu0 0.0
    %603 = vmatpush.msra.mxu0 0.0
    %604 = vmatpush.msra.mxu0 0.0
    %605 = vmatpush.msra.mxu0 0.0
    %606 = vmatpush.msra.mxu0 0.0
    %607 = vmatpush.msra.mxu0 0.0
    %608 = vmatpush.msra.mxu0 0.0
    %609 = vmatpush.msra.mxu0 0.0
    %610 = vmatpush.msra.mxu0 %v494
    %611 = vmatmul.f32.gmra.mxu0 %v593
    %v612 = vpop.f32.mrf.mxu0
    %v613 = vadd.f32 0.0, %v612
    %614 = vdwg.mxu0
    %617 = vrot.lane.b32.xlu0 %v232, 120
    %v618 = vpop.permute.xlu0 %617
    %619 = vrot.lane.b32.xlu0 %v235, 120
    %v620 = vpop.permute.xlu0 %619
    %v623 = vmul.f32 %v589, %v618
    %v624 = vmul.f32 %v613, %v620
    %v625 = vsel %vm264, %v623, -inf
    %626 = vmax.xlane.f32.xlu0 %v625
    %v627 = vpop.xlane.xlu0 %626
    %v628 = vsel %vm264, %v624, -inf
    %629 = vmax.xlane.f32.xlu0 %v628
    %v630 = vpop.xlane.xlu0 %629
    %v631 = vsub.f32 %v623, %v627
    %v632 = vsub.f32 %v624, %v630
    %v633 = vmul.f32 %v631, 1.442695
    %v634 = vpow.pop %v633
    %v635 = vmul.f32 %v632, 1.442695
    %v636 = vpow.pop %v635
    %v637 = vsel %vm264, %v634, 0.0
    %638 = vadd.xlane.f32.xlu0 %v637
    %v639 = vpop.xlane.xlu0 %638
    %v640 = vsel %vm264, %v636, 0.0
    %641 = vadd.xlane.f32.xlu0 %v640
    %v642 = vpop.xlane.xlu0 %641
    %v643 = vrcp.pop %v639
    %v644 = vmul.f32 %v639, %v643
    %v645 = vsub.f32 1.0, %v644
    %v646 = vmul.f32 %v643, %v645
    %v647 = vadd.f32 %v643, %v646
    %vm648 = vweird.f32 %v639
    %vm649 = vweird.f32 %v643
    %vm650 = vmor %vm648, %vm649
    %v651 = vsel %vm650, %v643, %v647
    %v652 = vand.u32 2147483647, %v639
    %vm653 = vcmp.eq.f32.partialorder %v652, 8.507059e+37
    %v654 = vand.u32 %v639, 2147483648
    %v655 = vor.u32 1.1754944e-38, %v654
    %v656 = vsel %vm653, %v655, %v651
    %v657 = vrcp.pop %v642
    %v658 = vmul.f32 %v642, %v657
    %v659 = vsub.f32 1.0, %v658
    %v660 = vmul.f32 %v657, %v659
    %v661 = vadd.f32 %v657, %v660
    %vm662 = vweird.f32 %v642
    %vm663 = vweird.f32 %v657
    %vm664 = vmor %vm662, %vm663
    %v665 = vsel %vm664, %v657, %v661
    %v666 = vand.u32 2147483647, %v642
    %vm667 = vcmp.eq.f32.partialorder %v666, 8.507059e+37
    %v668 = vand.u32 %v642, 2147483648
    %v669 = vor.u32 1.1754944e-38, %v668
    %v670 = vsel %vm667, %v669, %v665
    %v671 = vmul.f32 %v634, %v656
    %v672 = vmul.f32 %v636, %v670
    %v673 = vmul.f32 %v589, %v671
    %v674 = vmul.f32 %v613, %v672
    %675 = vrot.lane.b32.xlu0 %v172, 112
    %v676 = vpop.permute.xlu0 %675
    %677 = vrot.lane.b32.xlu0 %v199, 112
    %v678 = vpop.permute.xlu0 %677
    %v679 = vsel %vm264, %v676, 0
    %v681 = vsel %vm264, %v678, 0
    %683 = vmatpush.xpose.msra.mxu0 0.0
    %684 = vmatpush.xpose.msra.mxu0 0.0
    %685 = vmatpush.xpose.msra.mxu0 0.0
    %686 = vmatpush.xpose.msra.mxu0 0.0
    %687 = vmatpush.xpose.msra.mxu0 0.0
    %688 = vmatpush.xpose.msra.mxu0 0.0
    %689 = vmatpush.xpose.msra.mxu0 0.0
    %690 = vmatpush.xpose.msra.mxu0 0.0
    %691 = vmatpush.xpose.msra.mxu0 0.0
    %692 = vmatpush.xpose.msra.mxu0 0.0
    %693 = vmatpush.xpose.msra.mxu0 0.0
    %694 = vmatpush.xpose.msra.mxu0 0.0
    %695 = vmatpush.xpose.msra.mxu0 0.0
    %696 = vmatpush.xpose.msra.mxu0 0.0
    %697 = vmatpush.xpose.msra.mxu0 0.0
    %698 = vmatpush.xpose.msra.mxu0 %v681
    %699 = vmatmul.f32.gmra.mxu0 %v679
    %v700 = vpop.f32.mrf.mxu0
    %v701 = vadd.f32 0.0, %v700
    %702 = vdwg.mxu0
    %703 = vrot.lane.b32.xlu0 %v175, 112
    %v704 = vpop.permute.xlu0 %703
    %705 = vrot.lane.b32.xlu0 %v202, 112
    %v706 = vpop.permute.xlu0 %705
    %v707 = vsel %vm264, %v704, 0
    %v709 = vsel %vm264, %v706, 0
    %711 = vmatpush.xpose.msra.mxu0 0.0
    %712 = vmatpush.xpose.msra.mxu0 0.0
    %713 = vmatpush.xpose.msra.mxu0 0.0
    %714 = vmatpush.xpose.msra.mxu0 0.0
    %715 = vmatpush.xpose.msra.mxu0 0.0
    %716 = vmatpush.xpose.msra.mxu0 0.0
    %717 = vmatpush.xpose.msra.mxu0 0.0
    %718 = vmatpush.xpose.msra.mxu0 0.0
    %719 = vmatpush.xpose.msra.mxu0 0.0
    %720 = vmatpush.xpose.msra.mxu0 0.0
    %721 = vmatpush.xpose.msra.mxu0 0.0
    %722 = vmatpush.xpose.msra.mxu0 0.0
    %723 = vmatpush.xpose.msra.mxu0 0.0
    %724 = vmatpush.xpose.msra.mxu0 0.0
    %725 = vmatpush.xpose.msra.mxu0 0.0
    %726 = vmatpush.xpose.msra.mxu0 %v709
    %727 = vmatmul.f32.gmra.mxu0 %v707
    %v728 = vpop.f32.mrf.mxu0
    %v729 = vadd.f32 0.0, %v728
    %730 = vdwg.mxu0
    %v731 = vsel %vm264, %v701, -inf
    %732 = vmax.xlane.f32.xlu0 %v731
    %v733 = vpop.xlane.xlu0 %732
    %v734 = vsel %vm264, %v729, -inf
    %735 = vmax.xlane.f32.xlu0 %v734
    %v736 = vpop.xlane.xlu0 %735
    %v737 = vsub.f32 %v701, %v733
    %v738 = vsub.f32 %v729, %v736
    %v739 = vmul.f32 %v737, 1.442695
    %v740 = vpow.pop %v739
    %v741 = vmul.f32 %v738, 1.442695
    %v742 = vpow.pop %v741
    %v743 = vsel %vm264, %v740, 0.0
    %744 = vadd.xlane.f32.xlu0 %v743
    %v745 = vpop.xlane.xlu0 %744
    %v746 = vsel %vm264, %v742, 0.0
    %747 = vadd.xlane.f32.xlu0 %v746
    %v748 = vpop.xlane.xlu0 %747
    %v749 = vrcp.pop %v745
    %v750 = vmul.f32 %v745, %v749
    %v751 = vsub.f32 1.0, %v750
    %v752 = vmul.f32 %v749, %v751
    %v753 = vadd.f32 %v749, %v752
    %vm754 = vweird.f32 %v745
    %vm755 = vweird.f32 %v749
    %vm756 = vmor %vm754, %vm755
    %v757 = vsel %vm756, %v749, %v753
    %v758 = vand.u32 2147483647, %v745
    %vm759 = vcmp.eq.f32.partialorder %v758, 8.507059e+37
    %v760 = vand.u32 %v745, 2147483648
    %v761 = vor.u32 1.1754944e-38, %v760
    %v762 = vsel %vm759, %v761, %v757
    %v763 = vrcp.pop %v748
    %v764 = vmul.f32 %v748, %v763
    %v765 = vsub.f32 1.0, %v764
    %v766 = vmul.f32 %v763, %v765
    %v767 = vadd.f32 %v763, %v766
    %vm768 = vweird.f32 %v748
    %vm769 = vweird.f32 %v763
    %vm770 = vmor %vm768, %vm769
    %v771 = vsel %vm770, %v763, %v767
    %v772 = vand.u32 2147483647, %v748
    %vm773 = vcmp.eq.f32.partialorder %v772, 8.507059e+37
    %v774 = vand.u32 %v748, 2147483648
    %v775 = vor.u32 1.1754944e-38, %v774
    %v776 = vsel %vm773, %v775, %v771
    %v777 = vmul.f32 %v740, %v762
    %v778 = vmul.f32 %v742, %v776
    %v781 = vsel %vm264, %v777, 0
    %783 = vmatpush.msra.mxu0 0.0
    %784 = vmatpush.msra.mxu0 0.0
    %785 = vmatpush.msra.mxu0 0.0
    %786 = vmatpush.msra.mxu0 0.0
    %787 = vmatpush.msra.mxu0 0.0
    %788 = vmatpush.msra.mxu0 0.0
    %789 = vmatpush.msra.mxu0 0.0
    %790 = vmatpush.msra.mxu0 0.0
    %791 = vmatpush.msra.mxu0 0.0
    %792 = vmatpush.msra.mxu0 0.0
    %793 = vmatpush.msra.mxu0 0.0
    %794 = vmatpush.msra.mxu0 0.0
    %795 = vmatpush.msra.mxu0 0.0
    %796 = vmatpush.msra.mxu0 0.0
    %797 = vmatpush.msra.mxu0 0.0
    %798 = vmatpush.msra.mxu0 %v678
    %799 = vmatmul.f32.gmra.mxu0 %v781
    %v800 = vpop.f32.mrf.mxu0
    %v801 = vadd.f32 0.0, %v800
    %802 = vdwg.mxu0
    %v805 = vsel %vm264, %v778, 0
    %807 = vmatpush.msra.mxu0 0.0
    %808 = vmatpush.msra.mxu0 0.0
    %809 = vmatpush.msra.mxu0 0.0
    %810 = vmatpush.msra.mxu0 0.0
    %811 = vmatpush.msra.mxu0 0.0
    %812 = vmatpush.msra.mxu0 0.0
    %813 = vmatpush.msra.mxu0 0.0
    %814 = vmatpush.msra.mxu0 0.0
    %815 = vmatpush.msra.mxu0 0.0
    %816 = vmatpush.msra.mxu0 0.0
    %817 = vmatpush.msra.mxu0 0.0
    %818 = vmatpush.msra.mxu0 0.0
    %819 = vmatpush.msra.mxu0 0.0
    %820 = vmatpush.msra.mxu0 0.0
    %821 = vmatpush.msra.mxu0 0.0
    %822 = vmatpush.msra.mxu0 %v706
    %823 = vmatmul.f32.gmra.mxu0 %v805
    %v824 = vpop.f32.mrf.mxu0
    %v825 = vadd.f32 0.0, %v824
    %826 = vdwg.mxu0
    %827 = vrot.lane.b32.xlu0 %v232, 112
    %v828 = vpop.permute.xlu0 %827
    %829 = vrot.lane.b32.xlu0 %v235, 112
    %v830 = vpop.permute.xlu0 %829
    %v833 = vmul.f32 %v801, %v828
    %v834 = vmul.f32 %v825, %v830
    %v835 = vsel %vm264, %v833, -inf
    %836 = vmax.xlane.f32.xlu0 %v835
    %v837 = vpop.xlane.xlu0 %836
    %v838 = vsel %vm264, %v834, -inf
    %839 = vmax.xlane.f32.xlu0 %v838
    %v840 = vpop.xlane.xlu0 %839
    %v841 = vsub.f32 %v833, %v837
    %v842 = vsub.f32 %v834, %v840
    %v843 = vmul.f32 %v841, 1.442695
    %v844 = vpow.pop %v843
    %v845 = vmul.f32 %v842, 1.442695
    %v846 = vpow.pop %v845
    %v847 = vsel %vm264, %v844, 0.0
    %848 = vadd.xlane.f32.xlu0 %v847
    %v849 = vpop.xlane.xlu0 %848
    %v850 = vsel %vm264, %v846, 0.0
    %851 = vadd.xlane.f32.xlu0 %v850
    %v852 = vpop.xlane.xlu0 %851
    %v853 = vrcp.pop %v849
    %v854 = vmul.f32 %v849, %v853
    %v855 = vsub.f32 1.0, %v854
    %v856 = vmul.f32 %v853, %v855
    %v857 = vadd.f32 %v853, %v856
    %vm858 = vweird.f32 %v849
    %vm859 = vweird.f32 %v853
    %vm860 = vmor %vm858, %vm859
    %v861 = vsel %vm860, %v853, %v857
    %v862 = vand.u32 2147483647, %v849
    %vm863 = vcmp.eq.f32.partialorder %v862, 8.507059e+37
    %v864 = vand.u32 %v849, 2147483648
    %v865 = vor.u32 1.1754944e-38, %v864
    %v866 = vsel %vm863, %v865, %v861
    %v867 = vrcp.pop %v852
    %v868 = vmul.f32 %v852, %v867
    %v869 = vsub.f32 1.0, %v868
    %v870 = vmul.f32 %v867, %v869
    %v871 = vadd.f32 %v867, %v870
    %vm872 = vweird.f32 %v852
    %vm873 = vweird.f32 %v867
    %vm874 = vmor %vm872, %vm873
    %v875 = vsel %vm874, %v867, %v871
    %v876 = vand.u32 2147483647, %v852
    %vm877 = vcmp.eq.f32.partialorder %v876, 8.507059e+37
    %v878 = vand.u32 %v852, 2147483648
    %v879 = vor.u32 1.1754944e-38, %v878
    %v880 = vsel %vm877, %v879, %v875
    %v881 = vmul.f32 %v844, %v866
    %v882 = vmul.f32 %v846, %v880
    %v883 = vmul.f32 %v801, %v881
    %v884 = vmul.f32 %v825, %v882
    %885 = vrot.lane.b32.xlu0 %v172, 104
    %v886 = vpop.permute.xlu0 %885
    %887 = vrot.lane.b32.xlu0 %v199, 104
    %v888 = vpop.permute.xlu0 %887
    %v889 = vsel %vm264, %v886, 0
    %v891 = vsel %vm264, %v888, 0
    %893 = vmatpush.xpose.msra.mxu0 0.0
    %894 = vmatpush.xpose.msra.mxu0 0.0
    %895 = vmatpush.xpose.msra.mxu0 0.0
    %896 = vmatpush.xpose.msra.mxu0 0.0
    %897 = vmatpush.xpose.msra.mxu0 0.0
    %898 = vmatpush.xpose.msra.mxu0 0.0
    %899 = vmatpush.xpose.msra.mxu0 0.0
    %900 = vmatpush.xpose.msra.mxu0 0.0
    %901 = vmatpush.xpose.msra.mxu0 0.0
    %902 = vmatpush.xpose.msra.mxu0 0.0
    %903 = vmatpush.xpose.msra.mxu0 0.0
    %904 = vmatpush.xpose.msra.mxu0 0.0
    %905 = vmatpush.xpose.msra.mxu0 0.0
    %906 = vmatpush.xpose.msra.mxu0 0.0
    %907 = vmatpush.xpose.msra.mxu0 0.0
    %908 = vmatpush.xpose.msra.mxu0 %v891
    %909 = vmatmul.f32.gmra.mxu0 %v889
    %v910 = vpop.f32.mrf.mxu0
    %v911 = vadd.f32 0.0, %v910
    %912 = vdwg.mxu0
    %913 = vrot.lane.b32.xlu0 %v175, 104
    %v914 = vpop.permute.xlu0 %913
    %915 = vrot.lane.b32.xlu0 %v202, 104
    %v916 = vpop.permute.xlu0 %915
    %v917 = vsel %vm264, %v914, 0
    %v919 = vsel %vm264, %v916, 0
    %921 = vmatpush.xpose.msra.mxu0 0.0
    %922 = vmatpush.xpose.msra.mxu0 0.0
    %923 = vmatpush.xpose.msra.mxu0 0.0
    %924 = vmatpush.xpose.msra.mxu0 0.0
    %925 = vmatpush.xpose.msra.mxu0 0.0
    %926 = vmatpush.xpose.msra.mxu0 0.0
    %927 = vmatpush.xpose.msra.mxu0 0.0
    %928 = vmatpush.xpose.msra.mxu0 0.0
    %929 = vmatpush.xpose.msra.mxu0 0.0
    %930 = vmatpush.xpose.msra.mxu0 0.0
    %931 = vmatpush.xpose.msra.mxu0 0.0
    %932 = vmatpush.xpose.msra.mxu0 0.0
    %933 = vmatpush.xpose.msra.mxu0 0.0
    %934 = vmatpush.xpose.msra.mxu0 0.0
    %935 = vmatpush.xpose.msra.mxu0 0.0
    %936 = vmatpush.xpose.msra.mxu0 %v919
    %937 = vmatmul.f32.gmra.mxu0 %v917
    %v938 = vpop.f32.mrf.mxu0
    %v939 = vadd.f32 0.0, %v938
    %940 = vdwg.mxu0
    %v941 = vsel %vm264, %v911, -inf
    %942 = vmax.xlane.f32.xlu0 %v941
    %v943 = vpop.xlane.xlu0 %942
    %v944 = vsel %vm264, %v939, -inf
    %945 = vmax.xlane.f32.xlu0 %v944
    %v946 = vpop.xlane.xlu0 %945
    %v947 = vsub.f32 %v911, %v943
    %v948 = vsub.f32 %v939, %v946
    %v949 = vmul.f32 %v947, 1.442695
    %v950 = vpow.pop %v949
    %v951 = vmul.f32 %v948, 1.442695
    %v952 = vpow.pop %v951
    %v953 = vsel %vm264, %v950, 0.0
    %954 = vadd.xlane.f32.xlu0 %v953
    %v955 = vpop.xlane.xlu0 %954
    %v956 = vsel %vm264, %v952, 0.0
    %957 = vadd.xlane.f32.xlu0 %v956
    %v958 = vpop.xlane.xlu0 %957
    %v959 = vrcp.pop %v955
    %v960 = vmul.f32 %v955, %v959
    %v961 = vsub.f32 1.0, %v960
    %v962 = vmul.f32 %v959, %v961
    %v963 = vadd.f32 %v959, %v962
    %vm964 = vweird.f32 %v955
    %vm965 = vweird.f32 %v959
    %vm966 = vmor %vm964, %vm965
    %v967 = vsel %vm966, %v959, %v963
    %v968 = vand.u32 2147483647, %v955
    %vm969 = vcmp.eq.f32.partialorder %v968, 8.507059e+37
    %v970 = vand.u32 %v955, 2147483648
    %v971 = vor.u32 1.1754944e-38, %v970
    %v972 = vsel %vm969, %v971, %v967
    %v973 = vrcp.pop %v958
    %v974 = vmul.f32 %v958, %v973
    %v975 = vsub.f32 1.0, %v974
    %v976 = vmul.f32 %v973, %v975
    %v977 = vadd.f32 %v973, %v976
    %vm978 = vweird.f32 %v958
    %vm979 = vweird.f32 %v973
    %vm980 = vmor %vm978, %vm979
    %v981 = vsel %vm980, %v973, %v977
    %v982 = vand.u32 2147483647, %v958
    %vm983 = vcmp.eq.f32.partialorder %v982, 8.507059e+37
    %v984 = vand.u32 %v958, 2147483648
    %v985 = vor.u32 1.1754944e-38, %v984
    %v986 = vsel %vm983, %v985, %v981
    %v987 = vmul.f32 %v950, %v972
    %v988 = vmul.f32 %v952, %v986
    %v991 = vsel %vm264, %v987, 0
    %993 = vmatpush.msra.mxu0 0.0
    %994 = vmatpush.msra.mxu0 0.0
    %995 = vmatpush.msra.mxu0 0.0
    %996 = vmatpush.msra.mxu0 0.0
    %997 = vmatpush.msra.mxu0 0.0
    %998 = vmatpush.msra.mxu0 0.0
    %999 = vmatpush.msra.mxu0 0.0
    %1000 = vmatpush.msra.mxu0 0.0
    %1001 = vmatpush.msra.mxu0 0.0
    %1002 = vmatpush.msra.mxu0 0.0
    %1003 = vmatpush.msra.mxu0 0.0
    %1004 = vmatpush.msra.mxu0 0.0
    %1005 = vmatpush.msra.mxu0 0.0
    %1006 = vmatpush.msra.mxu0 0.0
    %1007 = vmatpush.msra.mxu0 0.0
    %1008 = vmatpush.msra.mxu0 %v888
    %1009 = vmatmul.f32.gmra.mxu0 %v991
    %v1010 = vpop.f32.mrf.mxu0
    %v1011 = vadd.f32 0.0, %v1010
    %1012 = vdwg.mxu0
    %v1015 = vsel %vm264, %v988, 0
    %1017 = vmatpush.msra.mxu0 0.0
    %1018 = vmatpush.msra.mxu0 0.0
    %1019 = vmatpush.msra.mxu0 0.0
    %1020 = vmatpush.msra.mxu0 0.0
    %1021 = vmatpush.msra.mxu0 0.0
    %1022 = vmatpush.msra.mxu0 0.0
    %1023 = vmatpush.msra.mxu0 0.0
    %1024 = vmatpush.msra.mxu0 0.0
    %1025 = vmatpush.msra.mxu0 0.0
    %1026 = vmatpush.msra.mxu0 0.0
    %1027 = vmatpush.msra.mxu0 0.0
    %1028 = vmatpush.msra.mxu0 0.0
    %1029 = vmatpush.msra.mxu0 0.0
    %1030 = vmatpush.msra.mxu0 0.0
    %1031 = vmatpush.msra.mxu0 0.0
    %1032 = vmatpush.msra.mxu0 %v916
    %1033 = vmatmul.f32.gmra.mxu0 %v1015
    %v1034 = vpop.f32.mrf.mxu0
    %v1035 = vadd.f32 0.0, %v1034
    %1036 = vdwg.mxu0
    %1037 = vrot.lane.b32.xlu0 %v232, 104
    %v1038 = vpop.permute.xlu0 %1037
    %1039 = vrot.lane.b32.xlu0 %v235, 104
    %v1040 = vpop.permute.xlu0 %1039
    %v1043 = vmul.f32 %v1011, %v1038
    %v1044 = vmul.f32 %v1035, %v1040
    %v1045 = vsel %vm264, %v1043, -inf
    %1046 = vmax.xlane.f32.xlu0 %v1045
    %v1047 = vpop.xlane.xlu0 %1046
    %v1048 = vsel %vm264, %v1044, -inf
    %1049 = vmax.xlane.f32.xlu0 %v1048
    %v1050 = vpop.xlane.xlu0 %1049
    %v1051 = vsub.f32 %v1043, %v1047
    %v1052 = vsub.f32 %v1044, %v1050
    %v1053 = vmul.f32 %v1051, 1.442695
    %v1054 = vpow.pop %v1053
    %v1055 = vmul.f32 %v1052, 1.442695
    %v1056 = vpow.pop %v1055
    %v1057 = vsel %vm264, %v1054, 0.0
    %1058 = vadd.xlane.f32.xlu0 %v1057
    %v1059 = vpop.xlane.xlu0 %1058
    %v1060 = vsel %vm264, %v1056, 0.0
    %1061 = vadd.xlane.f32.xlu0 %v1060
    %v1062 = vpop.xlane.xlu0 %1061
    %v1063 = vrcp.pop %v1059
    %v1064 = vmul.f32 %v1059, %v1063
    %v1065 = vsub.f32 1.0, %v1064
    %v1066 = vmul.f32 %v1063, %v1065
    %v1067 = vadd.f32 %v1063, %v1066
    %vm1068 = vweird.f32 %v1059
    %vm1069 = vweird.f32 %v1063
    %vm1070 = vmor %vm1068, %vm1069
    %v1071 = vsel %vm1070, %v1063, %v1067
    %v1072 = vand.u32 2147483647, %v1059
    %vm1073 = vcmp.eq.f32.partialorder %v1072, 8.507059e+37
    %v1074 = vand.u32 %v1059, 2147483648
    %v1075 = vor.u32 1.1754944e-38, %v1074
    %v1076 = vsel %vm1073, %v1075, %v1071
    %v1077 = vrcp.pop %v1062
    %v1078 = vmul.f32 %v1062, %v1077
    %v1079 = vsub.f32 1.0, %v1078
    %v1080 = vmul.f32 %v1077, %v1079
    %v1081 = vadd.f32 %v1077, %v1080
    %vm1082 = vweird.f32 %v1062
    %vm1083 = vweird.f32 %v1077
    %vm1084 = vmor %vm1082, %vm1083
    %v1085 = vsel %vm1084, %v1077, %v1081
    %v1086 = vand.u32 2147483647, %v1062
    %vm1087 = vcmp.eq.f32.partialorder %v1086, 8.507059e+37
    %v1088 = vand.u32 %v1062, 2147483648
    %v1089 = vor.u32 1.1754944e-38, %v1088
    %v1090 = vsel %vm1087, %v1089, %v1085
    %v1091 = vmul.f32 %v1054, %v1076
    %v1092 = vmul.f32 %v1056, %v1090
    %v1093 = vmul.f32 %v1011, %v1091
    %v1094 = vmul.f32 %v1035, %v1092
    %1097 = vrot.lane.b32.xlu0 %v673, 8
    %v1098 = vpop.permute.xlu0 %1097
    %1099 = vrot.lane.b32.xlu0 %v674, 8
    %v1100 = vpop.permute.xlu0 %1099
    %1105 = vrot.lane.b32.xlu0 %v883, 16
    %v1106 = vpop.permute.xlu0 %1105
    %1107 = vrot.lane.b32.xlu0 %v884, 16
    %v1108 = vpop.permute.xlu0 %1107
    %1113 = vrot.lane.b32.xlu0 %v1093, 24
    %v1114 = vpop.permute.xlu0 %1113
    %1115 = vrot.lane.b32.xlu0 %v1094, 24
    %v1116 = vpop.permute.xlu0 %1115
    %v1119 = vsel %vm264, %v461, %v1098
    %v1120 = vsel %vm264, %v462, %v1100
    %vm1121 = vcmask 130048
    %v1122 = vsel %vm1121, %v1119, %v1106
    %v1123 = vsel %vm1121, %v1120, %v1108
    %vm1124 = vcmask 195584
    %v1125 = vsel %vm1124, %v1122, %v1114
    %v1126 = vsel %vm1124, %v1123, %v1116
    %v1127 = vld [vmem:[#allocation11] sm:$0xff]
    %v1128 = vld [vmem:[#allocation11 + $0x8] sm:$0xff]
    %v1129 = vld [vmem:[#allocation11 + $0x10] sm:$0xff]
    %v1130 = vld [vmem:[#allocation11 + $0x18] sm:$0xff]
    %v1131 = vld [vmem:[%s6] sm:$0x1]
    %v1133 = vperm.slane %v1131, 0
    %v1136 = vsel %vm147, %v1125, 0
    %v1139 = vsel %vm147, %v1126, 0
    %1141 = vmatpush.msra.mxu0 0.0
    %1142 = vmatpush.msra.mxu0 0.0
    %1143 = vmatpush.msra.mxu0 0.0
    %1144 = vmatpush.msra.mxu0 0.0
    %1145 = vmatpush.msra.mxu0 0.0
    %1146 = vmatpush.msra.mxu0 0.0
    %1147 = vmatpush.msra.mxu0 0.0
    %1148 = vmatpush.msra.mxu0 0.0
    %1149 = vmatpush.msra.mxu0 0.0
    %1150 = vmatpush.msra.mxu0 0.0
    %1151 = vmatpush.msra.mxu0 0.0
    %1152 = vmatpush.msra.mxu0 0.0
    %1153 = vmatpush.msra.mxu0 %v1130
    %1154 = vmatpush.msra.mxu0 %v1129
    %1155 = vmatpush.msra.mxu0 %v1128
    %1156 = vmatpush.msra.mxu0 %v1127
    %1157 = vmatmul.f32.gmra.mxu0 %v1136
    %v1158 = vpop.f32.mrf.mxu0
    %v1159 = vadd.f32 %v1133, %v1158
    %1160 = vmatmul.f32.gmra.mxu0 %v1139
    %v1161 = vpop.f32.mrf.mxu0
    %v1162 = vadd.f32 %v1133, %v1161
    %1163 = vdwg.mxu0
    %1164 = vxpose.xlu0.b32.start [1/16] %v259, 128
    %1165 = vxpose.xlu0.b32.cont [2/16] 0.0, 128
    %1166 = vxpose.xlu0.b32.cont [3/16] 0.0, 128
    %1167 = vxpose.xlu0.b32.cont [4/16] 0.0, 128
    %1168 = vxpose.xlu0.b32.cont [5/16] 0.0, 128
    %1169 = vxpose.xlu0.b32.cont [6/16] 0.0, 128
    %1170 = vxpose.xlu0.b32.cont [7/16] 0.0, 128
    %1171 = vxpose.xlu0.b32.cont [8/16] 0.0, 128
    %1172 = vxpose.xlu0.b32.cont [9/16] 0.0, 128
    %1173 = vxpose.xlu0.b32.cont [10/16] 0.0, 128
    %1174 = vxpose.xlu0.b32.cont [11/16] 0.0, 128
    %1175 = vxpose.xlu0.b32.cont [12/16] 0.0, 128
    %1176 = vxpose.xlu0.b32.cont [13/16] 0.0, 128
    %1177 = vxpose.xlu0.b32.cont [14/16] 0.0, 128
    %1178 = vxpose.xlu0.b32.cont [15/16] 0.0, 128
    %1179 = vxpose.xlu0.b32.end [16/16] 0.0, 128
    %v1180 = vpop.trf.xlu0
    %v1181 = vpop.trf.xlu0
    %v1182 = vpop.trf.xlu0
    %v1183 = vpop.trf.xlu0
    %v1184 = vpop.trf.xlu0
    %v1185 = vpop.trf.xlu0
    %v1186 = vpop.trf.xlu0
    %v1187 = vpop.trf.xlu0
    %v1188 = vpop.trf.xlu0
    %v1189 = vpop.trf.xlu0
    %v1190 = vpop.trf.xlu0
    %v1191 = vpop.trf.xlu0
    %v1192 = vpop.trf.xlu0
    %v1193 = vpop.trf.xlu0
    %v1194 = vpop.trf.xlu0
    %v1195 = vpop.trf.xlu0
    %v1197 = vsel %vm264, %v1180, 0
    %v1200 = vsel %vm264, %v1181, 0
    %v1203 = vsel %vm264, %v1182, 0
    %v1206 = vsel %vm264, %v1183, 0
    %1208 = vmatpush.msra.mxu0 0.0
    %1209 = vmatpush.msra.mxu0 0.0
    %1210 = vmatpush.msra.mxu0 0.0
    %1211 = vmatpush.msra.mxu0 0.0
    %1212 = vmatpush.msra.mxu0 0.0
    %1213 = vmatpush.msra.mxu0 0.0
    %1214 = vmatpush.msra.mxu0 0.0
    %1215 = vmatpush.msra.mxu0 0.0
    %1216 = vmatpush.msra.mxu0 0.0
    %1217 = vmatpush.msra.mxu0 0.0
    %1218 = vmatpush.msra.mxu0 0.0
    %1219 = vmatpush.msra.mxu0 0.0
    %1220 = vmatpush.msra.mxu0 0.0
    %1221 = vmatpush.msra.mxu0 0.0
    %1222 = vmatpush.msra.mxu0 0.0
    %1223 = vmatpush.msra.mxu0 %v259
    %1224 = vmatmul.f32.gmra.mxu0 %v1197
    %v1225 = vpop.f32.mrf.mxu0
    %v1226 = vadd.f32 0.0, %v1225
    %1227 = vmatmul.f32.gmra.mxu0 %v1200
    %v1228 = vpop.f32.mrf.mxu0
    %v1229 = vadd.f32 0.0, %v1228
    %1230 = vmatmul.f32.gmra.mxu0 %v1203
    %v1231 = vpop.f32.mrf.mxu0
    %v1232 = vadd.f32 0.0, %v1231
    %1233 = vmatmul.f32.gmra.mxu0 %v1206
    %v1234 = vpop.f32.mrf.mxu0
    %v1235 = vadd.f32 0.0, %v1234
    %1236 = vdwg.mxu0
    %v1237 = vmul.f32 %v1226, 0.35355338
    %v1238 = vmul.f32 %v1229, 0.35355338
    %v1239 = vmul.f32 %v1232, 0.35355338
    %v1240 = vmul.f32 %v1235, 0.35355338
    %v1241 = vxor.u32 %v1237, 2147483648
    %v1242 = vxor.u32 %v1238, 2147483648
    %v1243 = vxor.u32 %v1239, 2147483648
    %v1244 = vxor.u32 %v1240, 2147483648
    %v1245 = vmul.f32 %v1241, 1.442695
    %v1246 = vpow.pop %v1245
    %v1247 = vmul.f32 %v1242, 1.442695
    %v1248 = vpow.pop %v1247
    %v1249 = vmul.f32 %v1243, 1.442695
    %v1250 = vpow.pop %v1249
    %v1251 = vmul.f32 %v1244, 1.442695
    %v1252 = vpow.pop %v1251
    %v1253 = vadd.f32 %v1246, 1.0
    %v1254 = vadd.f32 %v1248, 1.0
    %v1255 = vadd.f32 %v1250, 1.0
    %v1256 = vadd.f32 %v1252, 1.0
    %v1257 = vrcp.pop %v1253
    %v1258 = vmul.f32 %v1253, %v1257
    %v1259 = vsub.f32 1.0, %v1258
    %v1260 = vmul.f32 %v1257, %v1259
    %v1261 = vadd.f32 %v1257, %v1260
    %vm1262 = vweird.f32 %v1253
    %vm1263 = vweird.f32 %v1257
    %vm1264 = vmor %vm1262, %vm1263
    %v1265 = vsel %vm1264, %v1257, %v1261
    %v1266 = vand.u32 2147483647, %v1253
    %vm1267 = vcmp.eq.f32.partialorder %v1266, 8.507059e+37
    %v1268 = vand.u32 %v1253, 2147483648
    %v1269 = vor.u32 1.1754944e-38, %v1268
    %v1270 = vsel %vm1267, %v1269, %v1265
    %v1271 = vmul.f32 1.0, %v1270
    %v1272 = vrcp.pop %v1254
    %v1273 = vmul.f32 %v1254, %v1272
    %v1274 = vsub.f32 1.0, %v1273
    %v1275 = vmul.f32 %v1272, %v1274
    %v1276 = vadd.f32 %v1272, %v1275
    %vm1277 = vweird.f32 %v1254
    %vm1278 = vweird.f32 %v1272
    %vm1279 = vmor %vm1277, %vm1278
    %v1280 = vsel %vm1279, %v1272, %v1276
    %v1281 = vand.u32 2147483647, %v1254
    %vm1282 = vcmp.eq.f32.partialorder %v1281, 8.507059e+37
    %v1283 = vand.u32 %v1254, 2147483648
    %v1284 = vor.u32 1.1754944e-38, %v1283
    %v1285 = vsel %vm1282, %v1284, %v1280
    %v1286 = vmul.f32 1.0, %v1285
    %v1287 = vrcp.pop %v1255
    %v1288 = vmul.f32 %v1255, %v1287
    %v1289 = vsub.f32 1.0, %v1288
    %v1290 = vmul.f32 %v1287, %v1289
    %v1291 = vadd.f32 %v1287, %v1290
    %vm1292 = vweird.f32 %v1255
    %vm1293 = vweird.f32 %v1287
    %vm1294 = vmor %vm1292, %vm1293
    %v1295 = vsel %vm1294, %v1287, %v1291
    %v1296 = vand.u32 2147483647, %v1255
    %vm1297 = vcmp.eq.f32.partialorder %v1296, 8.507059e+37
    %v1298 = vand.u32 %v1255, 2147483648
    %v1299 = vor.u32 1.1754944e-38, %v1298
    %v1300 = vsel %vm1297, %v1299, %v1295
    %v1301 = vmul.f32 1.0, %v1300
    %v1302 = vrcp.pop %v1256
    %v1303 = vmul.f32 %v1256, %v1302
    %v1304 = vsub.f32 1.0, %v1303
    %v1305 = vmul.f32 %v1302, %v1304
    %v1306 = vadd.f32 %v1302, %v1305
    %vm1307 = vweird.f32 %v1256
    %vm1308 = vweird.f32 %v1302
    %vm1309 = vmor %vm1307, %vm1308
    %v1310 = vsel %vm1309, %v1302, %v1306
    %v1311 = vand.u32 2147483647, %v1256
    %vm1312 = vcmp.eq.f32.partialorder %v1311, 8.507059e+37
    %v1313 = vand.u32 %v1256, 2147483648
    %v1314 = vor.u32 1.1754944e-38, %v1313
    %v1315 = vsel %vm1312, %v1314, %v1310
    %v1316 = vmul.f32 1.0, %v1315
    %v1318 = vsel %vm147, %v1159, 0
    %1320 = vmatpush.msra.mxu0 0.0
    %1321 = vmatpush.msra.mxu0 0.0
    %1322 = vmatpush.msra.mxu0 0.0
    %1323 = vmatpush.msra.mxu0 0.0
    %1324 = vmatpush.msra.mxu0 0.0
    %1325 = vmatpush.msra.mxu0 0.0
    %1326 = vmatpush.msra.mxu0 0.0
    %1327 = vmatpush.msra.mxu0 0.0
    %1328 = vmatpush.msra.mxu0 0.0
    %1329 = vmatpush.msra.mxu0 0.0
    %1330 = vmatpush.msra.mxu0 0.0
    %1331 = vmatpush.msra.mxu0 0.0
    %1332 = vmatpush.msra.mxu0 %v1316
    %1333 = vmatpush.msra.mxu0 %v1301
    %1334 = vmatpush.msra.mxu0 %v1286
    %1335 = vmatpush.msra.mxu0 %v1271
    %1336 = vmatmul.f32.gmra.mxu0 %v1318
    %v1337 = vpop.f32.mrf.mxu0
    %v1338 = vadd.f32 0.0, %v1337
    %1339 = vdwg.mxu0
    %1340 = vst [vmem:[#allocation14] sm:$0xff] %v1338
    %1341 = vxpose.xlu0.b32.start [1/16] %v262, 128
    %1342 = vxpose.xlu0.b32.cont [2/16] 0.0, 128
    %1343 = vxpose.xlu0.b32.cont [3/16] 0.0, 128
    %1344 = vxpose.xlu0.b32.cont [4/16] 0.0, 128
    %1345 = vxpose.xlu0.b32.cont [5/16] 0.0, 128
    %1346 = vxpose.xlu0.b32.cont [6/16] 0.0, 128
    %1347 = vxpose.xlu0.b32.cont [7/16] 0.0, 128
    %1348 = vxpose.xlu0.b32.cont [8/16] 0.0, 128
    %1349 = vxpose.xlu0.b32.cont [9/16] 0.0, 128
    %1350 = vxpose.xlu0.b32.cont [10/16] 0.0, 128
    %1351 = vxpose.xlu0.b32.cont [11/16] 0.0, 128
    %1352 = vxpose.xlu0.b32.cont [12/16] 0.0, 128
    %1353 = vxpose.xlu0.b32.cont [13/16] 0.0, 128
    %1354 = vxpose.xlu0.b32.cont [14/16] 0.0, 128
    %1355 = vxpose.xlu0.b32.cont [15/16] 0.0, 128
    %1356 = vxpose.xlu0.b32.end [16/16] 0.0, 128
    %v1357 = vpop.trf.xlu0
    %v1358 = vpop.trf.xlu0
    %v1359 = vpop.trf.xlu0
    %v1360 = vpop.trf.xlu0
    %v1361 = vpop.trf.xlu0
    %v1362 = vpop.trf.xlu0
    %v1363 = vpop.trf.xlu0
    %v1364 = vpop.trf.xlu0
    %v1365 = vpop.trf.xlu0
    %v1366 = vpop.trf.xlu0
    %v1367 = vpop.trf.xlu0
    %v1368 = vpop.trf.xlu0
    %v1369 = vpop.trf.xlu0
    %v1370 = vpop.trf.xlu0
    %v1371 = vpop.trf.xlu0
    %v1372 = vpop.trf.xlu0
    %v1374 = vsel %vm264, %v1357, 0
    %v1377 = vsel %vm264, %v1358, 0
    %v1380 = vsel %vm264, %v1359, 0
    %v1383 = vsel %vm264, %v1360, 0
    %1385 = vmatpush.msra.mxu0 0.0
    %1386 = vmatpush.msra.mxu0 0.0
    %1387 = vmatpush.msra.mxu0 0.0
    %1388 = vmatpush.msra.mxu0 0.0
    %1389 = vmatpush.msra.mxu0 0.0
    %1390 = vmatpush.msra.mxu0 0.0
    %1391 = vmatpush.msra.mxu0 0.0
    %1392 = vmatpush.msra.mxu0 0.0
    %1393 = vmatpush.msra.mxu0 0.0
    %1394 = vmatpush.msra.mxu0 0.0
    %1395 = vmatpush.msra.mxu0 0.0
    %1396 = vmatpush.msra.mxu0 0.0
    %1397 = vmatpush.msra.mxu0 0.0
    %1398 = vmatpush.msra.mxu0 0.0
    %1399 = vmatpush.msra.mxu0 0.0
    %1400 = vmatpush.msra.mxu0 %v262
    %1401 = vmatmul.f32.gmra.mxu0 %v1374
    %v1402 = vpop.f32.mrf.mxu0
    %v1403 = vadd.f32 0.0, %v1402
    %1404 = vmatmul.f32.gmra.mxu0 %v1377
    %v1405 = vpop.f32.mrf.mxu0
    %v1406 = vadd.f32 0.0, %v1405
    %1407 = vmatmul.f32.gmra.mxu0 %v1380
    %v1408 = vpop.f32.mrf.mxu0
    %v1409 = vadd.f32 0.0, %v1408
    %1410 = vmatmul.f32.gmra.mxu0 %v1383
    %v1411 = vpop.f32.mrf.mxu0
    %v1412 = vadd.f32 0.0, %v1411
    %1413 = vdwg.mxu0
    %v1414 = vmul.f32 %v1403, 0.35355338
    %v1415 = vmul.f32 %v1406, 0.35355338
    %v1416 = vmul.f32 %v1409, 0.35355338
    %v1417 = vmul.f32 %v1412, 0.35355338
    %v1418 = vxor.u32 %v1414, 2147483648
    %v1419 = vxor.u32 %v1415, 2147483648
    %v1420 = vxor.u32 %v1416, 2147483648
    %v1421 = vxor.u32 %v1417, 2147483648
    %v1422 = vmul.f32 %v1418, 1.442695
    %v1423 = vpow.pop %v1422
    %v1424 = vmul.f32 %v1419, 1.442695
    %v1425 = vpow.pop %v1424
    %v1426 = vmul.f32 %v1420, 1.442695
    %v1427 = vpow.pop %v1426
    %v1428 = vmul.f32 %v1421, 1.442695
    %v1429 = vpow.pop %v1428
    %v1430 = vadd.f32 %v1423, 1.0
    %v1431 = vadd.f32 %v1425, 1.0
    %v1432 = vadd.f32 %v1427, 1.0
    %v1433 = vadd.f32 %v1429, 1.0
    %v1434 = vrcp.pop %v1430
    %v1435 = vmul.f32 %v1430, %v1434
    %v1436 = vsub.f32 1.0, %v1435
    %v1437 = vmul.f32 %v1434, %v1436
    %v1438 = vadd.f32 %v1434, %v1437
    %vm1439 = vweird.f32 %v1430
    %vm1440 = vweird.f32 %v1434
    %vm1441 = vmor %vm1439, %vm1440
    %v1442 = vsel %vm1441, %v1434, %v1438
    %v1443 = vand.u32 2147483647, %v1430
    %vm1444 = vcmp.eq.f32.partialorder %v1443, 8.507059e+37
    %v1445 = vand.u32 %v1430, 2147483648
    %v1446 = vor.u32 1.1754944e-38, %v1445
    %v1447 = vsel %vm1444, %v1446, %v1442
    %v1448 = vmul.f32 1.0, %v1447
    %v1449 = vrcp.pop %v1431
    %v1450 = vmul.f32 %v1431, %v1449
    %v1451 = vsub.f32 1.0, %v1450
    %v1452 = vmul.f32 %v1449, %v1451
    %v1453 = vadd.f32 %v1449, %v1452
    %vm1454 = vweird.f32 %v1431
    %vm1455 = vweird.f32 %v1449
    %vm1456 = vmor %vm1454, %vm1455
    %v1457 = vsel %vm1456, %v1449, %v1453
    %v1458 = vand.u32 2147483647, %v1431
    %vm1459 = vcmp.eq.f32.partialorder %v1458, 8.507059e+37
    %v1460 = vand.u32 %v1431, 2147483648
    %v1461 = vor.u32 1.1754944e-38, %v1460
    %v1462 = vsel %vm1459, %v1461, %v1457
    %v1463 = vmul.f32 1.0, %v1462
    %v1464 = vrcp.pop %v1432
    %v1465 = vmul.f32 %v1432, %v1464
    %v1466 = vsub.f32 1.0, %v1465
    %v1467 = vmul.f32 %v1464, %v1466
    %v1468 = vadd.f32 %v1464, %v1467
    %vm1469 = vweird.f32 %v1432
    %vm1470 = vweird.f32 %v1464
    %vm1471 = vmor %vm1469, %vm1470
    %v1472 = vsel %vm1471, %v1464, %v1468
    %v1473 = vand.u32 2147483647, %v1432
    %vm1474 = vcmp.eq.f32.partialorder %v1473, 8.507059e+37
    %v1475 = vand.u32 %v1432, 2147483648
    %v1476 = vor.u32 1.1754944e-38, %v1475
    %v1477 = vsel %vm1474, %v1476, %v1472
    %v1478 = vmul.f32 1.0, %v1477
    %v1479 = vrcp.pop %v1433
    %v1480 = vmul.f32 %v1433, %v1479
    %v1481 = vsub.f32 1.0, %v1480
    %v1482 = vmul.f32 %v1479, %v1481
    %v1483 = vadd.f32 %v1479, %v1482
    %vm1484 = vweird.f32 %v1433
    %vm1485 = vweird.f32 %v1479
    %vm1486 = vmor %vm1484, %vm1485
    %v1487 = vsel %vm1486, %v1479, %v1483
    %v1488 = vand.u32 2147483647, %v1433
    %vm1489 = vcmp.eq.f32.partialorder %v1488, 8.507059e+37
    %v1490 = vand.u32 %v1433, 2147483648
    %v1491 = vor.u32 1.1754944e-38, %v1490
    %v1492 = vsel %vm1489, %v1491, %v1487
    %v1493 = vmul.f32 1.0, %v1492
    %v1495 = vsel %vm147, %v1162, 0
    %1497 = vmatpush.msra.mxu0 0.0
    %1498 = vmatpush.msra.mxu0 0.0
    %1499 = vmatpush.msra.mxu0 0.0
    %1500 = vmatpush.msra.mxu0 0.0
    %1501 = vmatpush.msra.mxu0 0.0
    %1502 = vmatpush.msra.mxu0 0.0
    %1503 = vmatpush.msra.mxu0 0.0
    %1504 = vmatpush.msra.mxu0 0.0
    %1505 = vmatpush.msra.mxu0 0.0
    %1506 = vmatpush.msra.mxu0 0.0
    %1507 = vmatpush.msra.mxu0 0.0
    %1508 = vmatpush.msra.mxu0 0.0
    %1509 = vmatpush.msra.mxu0 %v1493
    %1510 = vmatpush.msra.mxu0 %v1478
    %1511 = vmatpush.msra.mxu0 %v1463
    %1512 = vmatpush.msra.mxu0 %v1448
    %1513 = vmatmul.f32.gmra.mxu0 %v1495
    %v1514 = vpop.f32.mrf.mxu0
    %v1515 = vadd.f32 0.0, %v1514
    %1516 = vdwg.mxu0
    %s1517 = scalar_lea.vmem [#allocation14], 8
    %1518 = vst [vmem:[%s1517] sm:$0xff] %v1515
    // Predicated region
    $region62: #{tpu_custom_call.1} parent=1 // pred_check
      _
    $region63: #{tpu_custom_call.1} parent=1 // pred_check_branch
      %1520 = sbr.rel (0) target = $region65
    $region64: #{tpu_custom_call.1} parent=1 // pred_region
      %1522 = vsyncadd [#allocation4], 0
      %s1523 = sshll.u32 [#allocation14], 4
      %s1524 = int_to_ptr.vmem [resolvable:$true] %s1523
      %s1525 = sshll.u32 %s8, 4
      %s1526 = int_to_ptr.hbm [resolvable:$true] %s1525
      %1531 = dma.vmem_to_hbm [thread:$0]  %s1524, 256, %s1526, [#allocation4], 128, 128, 8
    $region65: #{tpu_custom_call.1} parent=1 // pred_fallthru
      _
    // Predicated region
    $region66: #{tpu_custom_call.1} parent=1 // pred_check
      _
    $region67: #{tpu_custom_call.1} parent=1 // pred_check_branch
      %1533 = sbr.rel (0) target = $region69
    $region68: #{tpu_custom_call.1} parent=1 // pred_region
      %1535 = dma.done [#allocation4], 256
    $region69: #{tpu_custom_call.1} parent=1 // pred_fallthru
      _
    %1536 = vsyncpa [#allocation3], 1
    %1537 = vsyncpa [#allocation6], 1
    %1538 = vsyncpa [#allocation9], 1
    %1539 = vsyncpa [#allocation12], 1
    %1540 = vsyncpa [#allocation4], 1

// kernel: tpu_custom_call.1
$region0: #{tpu_custom_call.1}
  #allocation0 [shape = 'u32[]', space=smem, size = 0x4, offset = 0x4, fixed_abs, tag = 'smem constant byte address 0x4 - core index']
  #allocation1 [shape = 'u32[72,128]{1,0:T(1,128)}', space=vmem, size = 0x9000, scoped, tag = 'internal scratch']
  %s0 = inlined_call_operand.hbm [shape: f32[2,8,32], index: 0, kind: input, shape index: {}]
  %s1 = inlined_call_operand.hbm [shape: f32[2,8,32], index: 1, kind: input, shape index: {}]
  %s2 = inlined_call_operand.hbm [shape: f32[32,32], index: 2, kind: input, shape index: {}]
  %s3 = inlined_call_operand.hbm [shape: f32[32,32], index: 3, kind: input, shape index: {}]
  %s4 = inlined_call_operand.hbm [shape: f32[32,32], index: 4, kind: input, shape index: {}]
  %s5 = inlined_call_operand.hbm [shape: f32[32,32], index: 5, kind: input, shape index: {}]
  %s6 = inlined_call_operand.vmem [shape: f32[1,32], index: 6, kind: input, shape index: {}]
  %s7 = inlined_call_operand.hbm [shape: f32[32,128], index: 7, kind: input, shape index: {}]
  %s8 = inlined_call_operand.hbm [shape: f32[2,8,128], index: 8, kind: output, shape index: {}]
  %s9 = sld [smem:[#allocation0]]
  $region70: #{tpu_custom_call.1} parent=0
    _
  %s11 = ssub.s32 1, %s9
  %s12 = scalar_select 0, %s11, %s9
  $region1: #{tpu_custom_call.1} parent=0
    #allocation2 [shape = 'u8[8192]{0}', space=vmem, size = 0x2000, scoped, tag = 'input window, operand 0, single buffered']
    #allocation3 [shape = 's32[1]{0}', space=sflag, size = 0x4, scoped, tag = 'scoped memory for tpu_custom_call.1']
    #allocation4 [shape = 's32[1]{0}', space=sflag, size = 0x4, scoped, tag = 'scoped memory for tpu_custom_call.1']
    #allocation5 [shape = 'u8[8192]{0}', space=vmem, size = 0x2000, scoped, tag = 'input window, operand 1, single buffered']
    #allocation6 [shape = 's32[1]{0}', space=sflag, size = 0x4, scoped, tag = 'scoped memory for tpu_custom_call.1']
    #allocation7 [shape = 'u8[16384]{0}', space=vmem, size = 0x4000, scoped, tag = 'input window, operand 2, single buffered']
    #allocation8 [shape = 'u8[16384]{0}', space=vmem, size = 0x4000, scoped, tag = 'input window, operand 3, single buffered']
    #allocation9 [shape = 's32[1]{0}', space=sflag, size = 0x4, scoped, tag = 'scoped memory for tpu_custom_call.1']
    #allocation10 [shape = 'u8[16384]{0}', space=vmem, size = 0x4000, scoped, tag = 'input window, operand 4, single buffered']
    #allocation11 [shape = 'u8[16384]{0}', space=vmem, size = 0x4000, scoped, tag = 'input window, operand 5, single buffered']
    #allocation12 [shape = 's32[1]{0}', space=sflag, size = 0x4, scoped, tag = 'scoped memory for tpu_custom_call.1']
    #allocation13 [shape = 'u8[16384]{0}', space=vmem, size = 0x4000, scoped, tag = 'input window, operand 7, single buffered']
    #allocation14 [shape = 'u8[8192]{0}', space=vmem, size = 0x2000, scoped, tag = 'output window, operand 0, single buffered']
    %13 = vsyncpa [#allocation3], 0
    %14 = vsyncpa [#allocation6], 0
    %15 = vsyncpa [#allocation9], 0
    %16 = vsyncpa [#allocation12], 0
    %17 = vsyncpa [#allocation4], 0
    // Predicated region
    $region2: #{tpu_custom_call.1} parent=1 // pred_check
      _
    $region3: #{tpu_custom_call.1} parent=1 // pred_check_branch
      %19 = sbr.rel (0) target = $region5
    $region4: #{tpu_custom_call.1} parent=1 // pred_region
      %21 = vsyncadd [#allocation3], 0
      %s22 = sshll.u32 %s0, 4
      %s23 = int_to_ptr.hbm [resolvable:$true] %s22
      %s24 = sshll.u32 [#allocation2], 4
      %s25 = int_to_ptr.vmem [resolvable:$true] %s24
      %30 = dma.hbm_to_vmem [thread:$0]  %s23, 256, %s25, [#allocation3], 128, 128, 8
    $region5: #{tpu_custom_call.1} parent=1 // pred_fallthru
      _
    // Predicated region
    $region6: #{tpu_custom_call.1} parent=1 // pred_check
      _
    $region7: #{tpu_custom_call.1} parent=1 // pred_check_branch
      %32 = sbr.rel (0) target = $region9
    $region8: #{tpu_custom_call.1} parent=1 // pred_region
      %34 = vsyncadd [#allocation6], 0
      %s35 = sshll.u32 %s1, 4
      %s36 = int_to_ptr.hbm [resolvable:$true] %s35
      %s37 = sshll.u32 [#allocation5], 4
      %s38 = int_to_ptr.vmem [resolvable:$true] %s37
      %43 = dma.hbm_to_vmem [thread:$0]  %s36, 256, %s38, [#allocation6], 128, 128, 8
    $region9: #{tpu_custom_call.1} parent=1 // pred_fallthru
      _
    // Predicated region
    $region10: #{tpu_custom_call.1} parent=1 // pred_check
      _
    $region11: #{tpu_custom_call.1} parent=1 // pred_check_branch
      %45 = sbr.rel (0) target = $region13
    $region12: #{tpu_custom_call.1} parent=1 // pred_region
      %47 = vsyncadd [#allocation6], 0
      %s48 = sshll.u32 %s2, 4
      %s49 = int_to_ptr.hbm [resolvable:$true] %s48
      %s50 = sshll.u32 [#allocation7], 4
      %s51 = int_to_ptr.vmem [resolvable:$true] %s50
      %56 = dma.hbm_to_vmem [thread:$0]  %s49, 512, %s51, [#allocation6], 128, 128, 8
    $region13: #{tpu_custom_call.1} parent=1 // pred_fallthru
      _
    // Predicated region
    $region14: #{tpu_custom_call.1} parent=1 // pred_check
      _
    $region15: #{tpu_custom_call.1} parent=1 // pred_check_branch
      %58 = sbr.rel (0) target = $region17
    $region16: #{tpu_custom_call.1} parent=1 // pred_region
      %60 = vsyncadd [#allocation9], 0
      %s61 = sshll.u32 %s3, 4
      %s62 = int_to_ptr.hbm [resolvable:$true] %s61
      %s63 = sshll.u32 [#allocation8], 4
      %s64 = int_to_ptr.vmem [resolvable:$true] %s63
      %69 = dma.hbm_to_vmem [thread:$0]  %s62, 512, %s64, [#allocation9], 128, 128, 8
    $region17: #{tpu_custom_call.1} parent=1 // pred_fallthru
      _
    // Predicated region
    $region18: #{tpu_custom_call.1} parent=1 // pred_check
      _
    $region19: #{tpu_custom_call.1} parent=1 // pred_check_branch
      %71 = sbr.rel (0) target = $region21
    $region20: #{tpu_custom_call.1} parent=1 // pred_region
      %73 = vsyncadd [#allocation9], 0
      %s74 = sshll.u32 %s4, 4
      %s75 = int_to_ptr.hbm [resolvable:$true] %s74
      %s76 = sshll.u32 [#allocation10], 4
      %s77 = int_to_ptr.vmem [resolvable:$true] %s76
      %82 = dma.hbm_to_vmem [thread:$0]  %s75, 512, %s77, [#allocation9], 128, 128, 8
    $region21: #{tpu_custom_call.1} parent=1 // pred_fallthru
      _
    // Predicated region
    $region22: #{tpu_custom_call.1} parent=1 // pred_check
      _
    $region23: #{tpu_custom_call.1} parent=1 // pred_check_branch
      %84 = sbr.rel (0) target = $region25
    $region24: #{tpu_custom_call.1} parent=1 // pred_region
      %86 = vsyncadd [#allocation12], 0
      %s87 = sshll.u32 %s5, 4
      %s88 = int_to_ptr.hbm [resolvable:$true] %s87
      %s89 = sshll.u32 [#allocation11], 4
      %s90 = int_to_ptr.vmem [resolvable:$true] %s89
      %95 = dma.hbm_to_vmem [thread:$0]  %s88, 512, %s90, [#allocation12], 128, 128, 8
    $region25: #{tpu_custom_call.1} parent=1 // pred_fallthru
      _
    // Predicated region
    $region26: #{tpu_custom_call.1} parent=1 // pred_check
      _
    $region27: #{tpu_custom_call.1} parent=1 // pred_check_branch
      %97 = sbr.rel (0) target = $region29
    $region28: #{tpu_custom_call.1} parent=1 // pred_region
      _
    $region29: #{tpu_custom_call.1} parent=1 // pred_fallthru
      _
    // Predicated region
    $region30: #{tpu_custom_call.1} parent=1 // pred_check
      _
    $region31: #{tpu_custom_call.1} parent=1 // pred_check_branch
      %99 = sbr.rel (0) target = $region33
    $region32: #{tpu_custom_call.1} parent=1 // pred_region
      %101 = vsyncadd [#allocation12], 0
      %s102 = sshll.u32 %s7, 4
      %s103 = int_to_ptr.hbm [resolvable:$true] %s102
      %s104 = sshll.u32 [#allocation13], 4
      %s105 = int_to_ptr.vmem [resolvable:$true] %s104
      %110 = dma.hbm_to_vmem [thread:$0]  %s103, 512, %s105, [#allocation12], 128, 128, 8
    $region33: #{tpu_custom_call.1} parent=1 // pred_fallthru
      _
    // Predicated region
    $region34: #{tpu_custom_call.1} parent=1 // pred_check
      _
    $region35: #{tpu_custom_call.1} parent=1 // pred_check_branch
      %112 = sbr.rel (0) target = $region37
    $region36: #{tpu_custom_call.1} parent=1 // pred_region
      %114 = dma.done [#allocation3], 256
    $region37: #{tpu_custom_call.1} parent=1 // pred_fallthru
      _
    // Predicated region
    $region38: #{tpu_custom_call.1} parent=1 // pred_check
      _
    $region39: #{tpu_custom_call.1} parent=1 // pred_check_branch
      %116 = sbr.rel (0) target = $region41
    $region40: #{tpu_custom_call.1} parent=1 // pred_region
      %118 = dma.done [#allocation6], 256
    $region41: #{tpu_custom_call.1} parent=1 // pred_fallthru
      _
    // Predicated region
    $region42: #{tpu_custom_call.1} parent=1 // pred_check
      _
    $region43: #{tpu_custom_call.1} parent=1 // pred_check_branch
      %120 = sbr.rel (0) target = $region45
    $region44: #{tpu_custom_call.1} parent=1 // pred_region
      %122 = dma.done [#allocation6], 512
    $region45: #{tpu_custom_call.1} parent=1 // pred_fallthru
      _
    // Predicated region
    $region46: #{tpu_custom_call.1} parent=1 // pred_check
      _
    $region47: #{tpu_custom_call.1} parent=1 // pred_check_branch
      %124 = sbr.rel (0) target = $region49
    $region48: #{tpu_custom_call.1} parent=1 // pred_region
      %126 = dma.done [#allocation9], 512
    $region49: #{tpu_custom_call.1} parent=1 // pred_fallthru
      _
    // Predicated region
    $region50: #{tpu_custom_call.1} parent=1 // pred_check
      _
    $region51: #{tpu_custom_call.1} parent=1 // pred_check_branch
      %128 = sbr.rel (0) target = $region53
    $region52: #{tpu_custom_call.1} parent=1 // pred_region
      %130 = dma.done [#allocation9], 512
    $region53: #{tpu_custom_call.1} parent=1 // pred_fallthru
      _
    // Predicated region
    $region54: #{tpu_custom_call.1} parent=1 // pred_check
      _
    $region55: #{tpu_custom_call.1} parent=1 // pred_check_branch
      %132 = sbr.rel (0) target = $region57
    $region56: #{tpu_custom_call.1} parent=1 // pred_region
      %134 = dma.done [#allocation12], 512
    $region57: #{tpu_custom_call.1} parent=1 // pred_fallthru
      _
    // Predicated region
    $region58: #{tpu_custom_call.1} parent=1 // pred_check
      _
    $region59: #{tpu_custom_call.1} parent=1 // pred_check_branch
      %136 = sbr.rel (0) target = $region61
    $region60: #{tpu_custom_call.1} parent=1 // pred_region
      %138 = dma.done [#allocation12], 512
    $region61: #{tpu_custom_call.1} parent=1 // pred_fallthru
      _
    %v139 = vld [vmem:[#allocation2] sm:$0xff]
    %v140 = vld [vmem:[#allocation2 + $0x8] sm:$0xff]
    %v141 = vld [vmem:[#allocation5] sm:$0xff]
    %v142 = vld [vmem:[#allocation5 + $0x8] sm:$0xff]
    %v143 = vld [vmem:[#allocation7] sm:$0xff]
    %v144 = vld [vmem:[#allocation7 + $0x8] sm:$0xff]
    %v145 = vld [vmem:[#allocation7 + $0x10] sm:$0xff]
    %v146 = vld [vmem:[#allocation7 + $0x18] sm:$0xff]
    %vm147 = vcmask 261120
    %v149 = vsel %vm147, %v139, 0
    %v152 = vsel %vm147, %v140, 0
    %154 = vmatpush.msra.mxu0 0.0
    %155 = vmatpush.msra.mxu0 0.0
    %156 = vmatpush.msra.mxu0 0.0
    %157 = vmatpush.msra.mxu0 0.0
    %158 = vmatpush.msra.mxu0 0.0
    %159 = vmatpush.msra.mxu0 0.0
    %160 = vmatpush.msra.mxu0 0.0
    %161 = vmatpush.msra.mxu0 0.0
    %162 = vmatpush.msra.mxu0 0.0
    %163 = vmatpush.msra.mxu0 0.0
    %164 = vmatpush.msra.mxu0 0.0
    %165 = vmatpush.msra.mxu0 0.0
    %166 = vmatpush.msra.mxu0 %v146
    %167 = vmatpush.msra.mxu0 %v145
    %168 = vmatpush.msra.mxu0 %v144
    %169 = vmatpush.msra.mxu0 %v143
    %170 = vmatmul.f32.gmra.mxu0 %v149
    %v171 = vpop.f32.mrf.mxu0
    %v172 = vadd.f32 0.0, %v171
    %173 = vmatmul.f32.gmra.mxu0 %v152
    %v174 = vpop.f32.mrf.mxu0
    %v175 = vadd.f32 0.0, %v174
    %176 = vdwg.mxu0
    %v177 = vld [vmem:[#allocation8] sm:$0xff]
    %v178 = vld [vmem:[#allocation8 + $0x8] sm:$0xff]
    %v179 = vld [vmem:[#allocation8 + $0x10] sm:$0xff]
    %v180 = vld [vmem:[#allocation8 + $0x18] sm:$0xff]
    %181 = vmatpush.msra.mxu0 0.0
    %182 = vmatpush.msra.mxu0 0.0
    %183 = vmatpush.msra.mxu0 0.0
    %184 = vmatpush.msra.mxu0 0.0
    %185 = vmatpush.msra.mxu0 0.0
    %186 = vmatpush.msra.mxu0 0.0
    %187 = vmatpush.msra.mxu0 0.0
    %188 = vmatpush.msra.mxu0 0.0
    %189 = vmatpush.msra.mxu0 0.0
    %190 = vmatpush.msra.mxu0 0.0
    %191 = vmatpush.msra.mxu0 0.0
    %192 = vmatpush.msra.mxu0 0.0
    %193 = vmatpush.msra.mxu0 %v180
    %194 = vmatpush.msra.mxu0 %v179
    %195 = vmatpush.msra.mxu0 %v178
    %196 = vmatpush.msra.mxu0 %v177
    %197 = vmatmul.f32.gmra.mxu0 %v149
    %v198 = vpop.f32.mrf.mxu0
    %v199 = vadd.f32 0.0, %v198
    %200 = vmatmul.f32.gmra.mxu0 %v152
    %v201 = vpop.f32.mrf.mxu0
    %v202 = vadd.f32 0.0, %v201
    %203 = vdwg.mxu0
    %v204 = vld [vmem:[#allocation10] sm:$0xff]
    %v205 = vld [vmem:[#allocation10 + $0x8] sm:$0xff]
    %v206 = vld [vmem:[#allocation10 + $0x10] sm:$0xff]
    %v207 = vld [vmem:[#allocation10 + $0x18] sm:$0xff]
    %v209 = vsel %vm147, %v141, 0
    %v212 = vsel %vm147, %v142, 0
    %214 = vmatpush.msra.mxu0 0.0
    %215 = vmatpush.msra.mxu0 0.0
    %216 = vmatpush.msra.mxu0 0.0
    %217 = vmatpush.msra.mxu0 0.0
    %218 = vmatpush.msra.mxu0 0.0
    %219 = vmatpush.msra.mxu0 0.0
    %220 = vmatpush.msra.mxu0 0.0
    %221 = vmatpush.msra.mxu0 0.0
    %222 = vmatpush.msra.mxu0 0.0
    %223 = vmatpush.msra.mxu0 0.0
    %224 = vmatpush.msra.mxu0 0.0
    %225 = vmatpush.msra.mxu0 0.0
    %226 = vmatpush.msra.mxu0 %v207
    %227 = vmatpush.msra.mxu0 %v206
    %228 = vmatpush.msra.mxu0 %v205
    %229 = vmatpush.msra.mxu0 %v204
    %230 = vmatmul.f32.gmra.mxu0 %v209
    %v231 = vpop.f32.mrf.mxu0
    %v232 = vadd.f32 0.0, %v231
    %233 = vmatmul.f32.gmra.mxu0 %v212
    %v234 = vpop.f32.mrf.mxu0
    %v235 = vadd.f32 0.0, %v234
    %236 = vdwg.mxu0
    %v237 = vld [vmem:[#allocation13] sm:$0xff]
    %v238 = vld [vmem:[#allocation13 + $0x8] sm:$0xff]
    %v239 = vld [vmem:[#allocation13 + $0x10] sm:$0xff]
    %v240 = vld [vmem:[#allocation13 + $0x18] sm:$0xff]
    %241 = vmatpush.msra.mxu0 0.0
    %242 = vmatpush.msra.mxu0 0.0
    %243 = vmatpush.msra.mxu0 0.0
    %244 = vmatpush.msra.mxu0 0.0
    %245 = vmatpush.msra.mxu0 0.0
    %246 = vmatpush.msra.mxu0 0.0
    %247 = vmatpush.msra.mxu0 0.0
    %248 = vmatpush.msra.mxu0 0.0
    %249 = vmatpush.msra.mxu0 0.0
    %250 = vmatpush.msra.mxu0 0.0
    %251 = vmatpush.msra.mxu0 0.0
    %252 = vmatpush.msra.mxu0 0.0
    %253 = vmatpush.msra.mxu0 %v240
    %254 = vmatpush.msra.mxu0 %v239
    %255 = vmatpush.msra.mxu0 %v238
    %256 = vmatpush.msra.mxu0 %v237
    %257 = vmatmul.f32.gmra.mxu0 %v149
    %v258 = vpop.f32.mrf.mxu0
    %v259 = vadd.f32 0.0, %v258
    %260 = vmatmul.f32.gmra.mxu0 %v152
    %v261 = vpop.f32.mrf.mxu0
    %v262 = vadd.f32 0.0, %v261
    %263 = vdwg.mxu0
    %vm264 = vcmask 64512
    %v266 = vsel %vm264, %v172, 0
    %v269 = vsel %vm264, %v199, 0
    %271 = vmatpush.xpose.msra.mxu0 0.0
    %272 = vmatpush.xpose.msra.mxu0 0.0
    %273 = vmatpush.xpose.msra.mxu0 0.0
    %274 = vmatpush.xpose.msra.mxu0 0.0
    %275 = vmatpush.xpose.msra.mxu0 0.0
    %276 = vmatpush.xpose.msra.mxu0 0.0
    %277 = vmatpush.xpose.msra.mxu0 0.0
    %278 = vmatpush.xpose.msra.mxu0 0.0
    %279 = vmatpush.xpose.msra.mxu0 0.0
    %280 = vmatpush.xpose.msra.mxu0 0.0
    %281 = vmatpush.xpose.msra.mxu0 0.0
    %282 = vmatpush.xpose.msra.mxu0 0.0
    %283 = vmatpush.xpose.msra.mxu0 0.0
    %284 = vmatpush.xpose.msra.mxu0 0.0
    %285 = vmatpush.xpose.msra.mxu0 0.0
    %286 = vmatpush.xpose.msra.mxu0 %v269
    %287 = vmatmul.f32.gmra.mxu0 %v266
    %v288 = vpop.f32.mrf.mxu0
    %v289 = vadd.f32 0.0, %v288
    %290 = vdwg.mxu0
    %v292 = vsel %vm264, %v175, 0
    %v295 = vsel %vm264, %v202, 0
    %297 = vmatpush.xpose.msra.mxu0 0.0
    %298 = vmatpush.xpose.msra.mxu0 0.0
    %299 = vmatpush.xpose.msra.mxu0 0.0
    %300 = vmatpush.xpose.msra.mxu0 0.0
    %301 = vmatpush.xpose.msra.mxu0 0.0
    %302 = vmatpush.xpose.msra.mxu0 0.0
    %303 = vmatpush.xpose.msra.mxu0 0.0
    %304 = vmatpush.xpose.msra.mxu0 0.0
    %305 = vmatpush.xpose.msra.mxu0 0.0
    %306 = vmatpush.xpose.msra.mxu0 0.0
    %307 = vmatpush.xpose.msra.mxu0 0.0
    %308 = vmatpush.xpose.msra.mxu0 0.0
    %309 = vmatpush.xpose.msra.mxu0 0.0
    %310 = vmatpush.xpose.msra.mxu0 0.0
    %311 = vmatpush.xpose.msra.mxu0 0.0
    %312 = vmatpush.xpose.msra.mxu0 %v295
    %313 = vmatmul.f32.gmra.mxu0 %v292
    %v314 = vpop.f32.mrf.mxu0
    %v315 = vadd.f32 0.0, %v314
    %316 = vdwg.mxu0
    %v317 = vsel %vm264, %v289, -inf
    %318 = vmax.xlane.f32.xlu0 %v317
    %v319 = vpop.xlane.xlu0 %318
    %v320 = vsel %vm264, %v315, -inf
    %321 = vmax.xlane.f32.xlu0 %v320
    %v322 = vpop.xlane.xlu0 %321
    %v323 = vsub.f32 %v289, %v319
    %v324 = vsub.f32 %v315, %v322
    %v325 = vmul.f32 %v323, 1.442695
    %v326 = vpow.pop %v325
    %v327 = vmul.f32 %v324, 1.442695
    %v328 = vpow.pop %v327
    %v329 = vsel %vm264, %v326, 0.0
    %330 = vadd.xlane.f32.xlu0 %v329
    %v331 = vpop.xlane.xlu0 %330
    %v332 = vsel %vm264, %v328, 0.0
    %333 = vadd.xlane.f32.xlu0 %v332
    %v334 = vpop.xlane.xlu0 %333
    %v335 = vrcp.pop %v331
    %v336 = vmul.f32 %v331, %v335
    %v337 = vsub.f32 1.0, %v336
    %v338 = vmul.f32 %v335, %v337
    %v339 = vadd.f32 %v335, %v338
    %vm340 = vweird.f32 %v331
    %vm341 = vweird.f32 %v335
    %vm342 = vmor %vm340, %vm341
    %v343 = vsel %vm342, %v335, %v339
    %v344 = vand.u32 2147483647, %v331
    %vm345 = vcmp.eq.f32.partialorder %v344, 8.507059e+37
    %v346 = vand.u32 %v331, 2147483648
    %v347 = vor.u32 1.1754944e-38, %v346
    %v348 = vsel %vm345, %v347, %v343
    %v349 = vrcp.pop %v334
    %v350 = vmul.f32 %v334, %v349
    %v351 = vsub.f32 1.0, %v350
    %v352 = vmul.f32 %v349, %v351
    %v353 = vadd.f32 %v349, %v352
    %vm354 = vweird.f32 %v334
    %vm355 = vweird.f32 %v349
    %vm356 = vmor %vm354, %vm355
    %v357 = vsel %vm356, %v349, %v353
    %v358 = vand.u32 2147483647, %v334
    %vm359 = vcmp.eq.f32.partialorder %v358, 8.507059e+37
    %v360 = vand.u32 %v334, 2147483648
    %v361 = vor.u32 1.1754944e-38, %v360
    %v362 = vsel %vm359, %v361, %v357
    %v363 = vmul.f32 %v326, %v348
    %v364 = vmul.f32 %v328, %v362
    %v366 = vsel %vm264, %v363, 0
    %368 = vmatpush.msra.mxu0 0.0
    %369 = vmatpush.msra.mxu0 0.0
    %370 = vmatpush.msra.mxu0 0.0
    %371 = vmatpush.msra.mxu0 0.0
    %372 = vmatpush.msra.mxu0 0.0
    %373 = vmatpush.msra.mxu0 0.0
    %374 = vmatpush.msra.mxu0 0.0
    %375 = vmatpush.msra.mxu0 0.0
    %376 = vmatpush.msra.mxu0 0.0
    %377 = vmatpush.msra.mxu0 0.0
    %378 = vmatpush.msra.mxu0 0.0
    %379 = vmatpush.msra.mxu0 0.0
    %380 = vmatpush.msra.mxu0 0.0
    %381 = vmatpush.msra.mxu0 0.0
    %382 = vmatpush.msra.mxu0 0.0
    %383 = vmatpush.msra.mxu0 %v199
    %384 = vmatmul.f32.gmra.mxu0 %v366
    %v385 = vpop.f32.mrf.mxu0
    %v386 = vadd.f32 0.0, %v385
    %387 = vdwg.mxu0
    %v389 = vsel %vm264, %v364, 0
    %391 = vmatpush.msra.mxu0 0.0
    %392 = vmatpush.msra.mxu0 0.0
    %393 = vmatpush.msra.mxu0 0.0
    %394 = vmatpush.msra.mxu0 0.0
    %395 = vmatpush.msra.mxu0 0.0
    %396 = vmatpush.msra.mxu0 0.0
    %397 = vmatpush.msra.mxu0 0.0
    %398 = vmatpush.msra.mxu0 0.0
    %399 = vmatpush.msra.mxu0 0.0
    %400 = vmatpush.msra.mxu0 0.0
    %401 = vmatpush.msra.mxu0 0.0
    %402 = vmatpush.msra.mxu0 0.0
    %403 = vmatpush.msra.mxu0 0.0
    %404 = vmatpush.msra.mxu0 0.0
    %405 = vmatpush.msra.mxu0 0.0
    %406 = vmatpush.msra.mxu0 %v202
    %407 = vmatmul.f32.gmra.mxu0 %v389
    %v408 = vpop.f32.mrf.mxu0
    %v409 = vadd.f32 0.0, %v408
    %410 = vdwg.mxu0
    %v411 = vmul.f32 %v386, %v232
    %v412 = vmul.f32 %v409, %v235
    %v413 = vsel %vm264, %v411, -inf
    %414 = vmax.xlane.f32.xlu0 %v413
    %v415 = vpop.xlane.xlu0 %414
    %v416 = vsel %vm264, %v412, -inf
    %417 = vmax.xlane.f32.xlu0 %v416
    %v418 = vpop.xlane.xlu0 %417
    %v419 = vsub.f32 %v411, %v415
    %v420 = vsub.f32 %v412, %v418
    %v421 = vmul.f32 %v419, 1.442695
    %v422 = vpow.pop %v421
    %v423 = vmul.f32 %v420, 1.442695
    %v424 = vpow.pop %v423
    %v425 = vsel %vm264, %v422, 0.0
    %426 = vadd.xlane.f32.xlu0 %v425
    %v427 = vpop.xlane.xlu0 %426
    %v428 = vsel %vm264, %v424, 0.0
    %429 = vadd.xlane.f32.xlu0 %v428
    %v430 = vpop.xlane.xlu0 %429
    %v431 = vrcp.pop %v427
    %v432 = vmul.f32 %v427, %v431
    %v433 = vsub.f32 1.0, %v432
    %v434 = vmul.f32 %v431, %v433
    %v435 = vadd.f32 %v431, %v434
    %vm436 = vweird.f32 %v427
    %vm437 = vweird.f32 %v431
    %vm438 = vmor %vm436, %vm437
    %v439 = vsel %vm438, %v431, %v435
    %v440 = vand.u32 2147483647, %v427
    %vm441 = vcmp.eq.f32.partialorder %v440, 8.507059e+37
    %v442 = vand.u32 %v427, 2147483648
    %v443 = vor.u32 1.1754944e-38, %v442
    %v444 = vsel %vm441, %v443, %v439
    %v445 = vrcp.pop %v430
    %v446 = vmul.f32 %v430, %v445
    %v447 = vsub.f32 1.0, %v446
    %v448 = vmul.f32 %v445, %v447
    %v449 = vadd.f32 %v445, %v448
    %vm450 = vweird.f32 %v430
    %vm451 = vweird.f32 %v445
    %vm452 = vmor %vm450, %vm451
    %v453 = vsel %vm452, %v445, %v449
    %v454 = vand.u32 2147483647, %v430
    %vm455 = vcmp.eq.f32.partialorder %v454, 8.507059e+37
    %v456 = vand.u32 %v430, 2147483648
    %v457 = vor.u32 1.1754944e-38, %v456
    %v458 = vsel %vm455, %v457, %v453
    %v459 = vmul.f32 %v422, %v444
    %v460 = vmul.f32 %v424, %v458
    %v461 = vmul.f32 %v386, %v459
    %v462 = vmul.f32 %v409, %v460
    %463 = vrot.lane.b32.xlu0 %v172, 120
    %v464 = vpop.permute.xlu0 %463
    %465 = vrot.lane.b32.xlu0 %v199, 120
    %v466 = vpop.permute.xlu0 %465
    %v467 = vsel %vm264, %v464, 0
    %v469 = vsel %vm264, %v466, 0
    %471 = vmatpush.xpose.msra.mxu0 0.0
    %472 = vmatpush.xpose.msra.mxu0 0.0
    %473 = vmatpush.xpose.msra.mxu0 0.0
    %474 = vmatpush.xpose.msra.mxu0 0.0
    %475 = vmatpush.xpose.msra.mxu0 0.0
    %476 = vmatpush.xpose.msra.mxu0 0.0
    %477 = vmatpush.xpose.msra.mxu0 0.0
    %478 = vmatpush.xpose.msra.mxu0 0.0
    %479 = vmatpush.xpose.msra.mxu0 0.0
    %480 = vmatpush.xpose.msra.mxu0 0.0
    %481 = vmatpush.xpose.msra.mxu0 0.0
    %482 = vmatpush.xpose.msra.mxu0 0.0
    %483 = vmatpush.xpose.msra.mxu0 0.0
    %484 = vmatpush.xpose.msra.mxu0 0.0
    %485 = vmatpush.xpose.msra.mxu0 0.0
    %486 = vmatpush.xpose.msra.mxu0 %v469
    %487 = vmatmul.f32.gmra.mxu0 %v467
    %v488 = vpop.f32.mrf.mxu0
    %v489 = vadd.f32 0.0, %v488
    %490 = vdwg.mxu0
    %491 = vrot.lane.b32.xlu0 %v175, 120
    %v492 = vpop.permute.xlu0 %491
    %493 = vrot.lane.b32.xlu0 %v202, 120
    %v494 = vpop.permute.xlu0 %493
    %v495 = vsel %vm264, %v492, 0
    %v497 = vsel %vm264, %v494, 0
    %499 = vmatpush.xpose.msra.mxu0 0.0
    %500 = vmatpush.xpose.msra.mxu0 0.0
    %501 = vmatpush.xpose.msra.mxu0 0.0
    %502 = vmatpush.xpose.msra.mxu0 0.0
    %503 = vmatpush.xpose.msra.mxu0 0.0
    %504 = vmatpush.xpose.msra.mxu0 0.0
    %505 = vmatpush.xpose.msra.mxu0 0.0
    %506 = vmatpush.xpose.msra.mxu0 0.0
    %507 = vmatpush.xpose.msra.mxu0 0.0
    %508 = vmatpush.xpose.msra.mxu0 0.0
    %509 = vmatpush.xpose.msra.mxu0 0.0
    %510 = vmatpush.xpose.msra.mxu0 0.0
    %511 = vmatpush.xpose.msra.mxu0 0.0
    %512 = vmatpush.xpose.msra.mxu0 0.0
    %513 = vmatpush.xpose.msra.mxu0 0.0
    %514 = vmatpush.xpose.msra.mxu0 %v497
    %515 = vmatmul.f32.gmra.mxu0 %v495
    %v516 = vpop.f32.mrf.mxu0
    %v517 = vadd.f32 0.0, %v516
    %518 = vdwg.mxu0
    %v519 = vsel %vm264, %v489, -inf
    %520 = vmax.xlane.f32.xlu0 %v519
    %v521 = vpop.xlane.xlu0 %520
    %v522 = vsel %vm264, %v517, -inf
    %523 = vmax.xlane.f32.xlu0 %v522
    %v524 = vpop.xlane.xlu0 %523
    %v525 = vsub.f32 %v489, %v521
    %v526 = vsub.f32 %v517, %v524
    %v527 = vmul.f32 %v525, 1.442695
    %v528 = vpow.pop %v527
    %v529 = vmul.f32 %v526, 1.442695
    %v530 = vpow.pop %v529
    %v531 = vsel %vm264, %v528, 0.0
    %532 = vadd.xlane.f32.xlu0 %v531
    %v533 = vpop.xlane.xlu0 %532
    %v534 = vsel %vm264, %v530, 0.0
    %535 = vadd.xlane.f32.xlu0 %v534
    %v536 = vpop.xlane.xlu0 %535
    %v537 = vrcp.pop %v533
    %v538 = vmul.f32 %v533, %v537
    %v539 = vsub.f32 1.0, %v538
    %v540 = vmul.f32 %v537, %v539
    %v541 = vadd.f32 %v537, %v540
    %vm542 = vweird.f32 %v533
    %vm543 = vweird.f32 %v537
    %vm544 = vmor %vm542, %vm543
    %v545 = vsel %vm544, %v537, %v541
    %v546 = vand.u32 2147483647, %v533
    %vm547 = vcmp.eq.f32.partialorder %v546, 8.507059e+37
    %v548 = vand.u32 %v533, 2147483648
    %v549 = vor.u32 1.1754944e-38, %v548
    %v550 = vsel %vm547, %v549, %v545
    %v551 = vrcp.pop %v536
    %v552 = vmul.f32 %v536, %v551
    %v553 = vsub.f32 1.0, %v552
    %v554 = vmul.f32 %v551, %v553
    %v555 = vadd.f32 %v551, %v554
    %vm556 = vweird.f32 %v536
    %vm557 = vweird.f32 %v551
    %vm558 = vmor %vm556, %vm557
    %v559 = vsel %vm558, %v551, %v555
    %v560 = vand.u32 2147483647, %v536
    %vm561 = vcmp.eq.f32.partialorder %v560, 8.507059e+37
    %v562 = vand.u32 %v536, 2147483648
    %v563 = vor.u32 1.1754944e-38, %v562
    %v564 = vsel %vm561, %v563, %v559
    %v565 = vmul.f32 %v528, %v550
    %v566 = vmul.f32 %v530, %v564
    %v569 = vsel %vm264, %v565, 0
    %571 = vmatpush.msra.mxu0 0.0
    %572 = vmatpush.msra.mxu0 0.0
    %573 = vmatpush.msra.mxu0 0.0
    %574 = vmatpush.msra.mxu0 0.0
    %575 = vmatpush.msra.mxu0 0.0
    %576 = vmatpush.msra.mxu0 0.0
    %577 = vmatpush.msra.mxu0 0.0
    %578 = vmatpush.msra.mxu0 0.0
    %579 = vmatpush.msra.mxu0 0.0
    %580 = vmatpush.msra.mxu0 0.0
    %581 = vmatpush.msra.mxu0 0.0
    %582 = vmatpush.msra.mxu0 0.0
    %583 = vmatpush.msra.mxu0 0.0
    %584 = vmatpush.msra.mxu0 0.0
    %585 = vmatpush.msra.mxu0 0.0
    %586 = vmatpush.msra.mxu0 %v466
    %587 = vmatmul.f32.gmra.mxu0 %v569
    %v588 = vpop.f32.mrf.mxu0
    %v589 = vadd.f32 0.0, %v588
    %590 = vdwg.mxu0
    %v593 = vsel %vm264, %v566, 0
    %595 = vmatpush.msra.mxu0 0.0
    %596 = vmatpush.msra.mxu0 0.0
    %597 = vmatpush.msra.mxu0 0.0
    %598 = vmatpush.msra.mxu0 0.0
    %599 = vmatpush.msra.mxu0 0.0
    %600 = vmatpush.msra.mxu0 0.0
    %601 = vmatpush.msra.mxu0 0.0
    %602 = vmatpush.msra.mxu0 0.0
    %603 = vmatpush.msra.mxu0 0.0
    %604 = vmatpush.msra.mxu0 0.0
    %605 = vmatpush.msra.mxu0 0.0
    %606 = vmatpush.msra.mxu0 0.0
    %607 = vmatpush.msra.mxu0 0.0
    %608 = vmatpush.msra.mxu0 0.0
    %609 = vmatpush.msra.mxu0 0.0
    %610 = vmatpush.msra.mxu0 %v494
    %611 = vmatmul.f32.gmra.mxu0 %v593
    %v612 = vpop.f32.mrf.mxu0
    %v613 = vadd.f32 0.0, %v612
    %614 = vdwg.mxu0
    %617 = vrot.lane.b32.xlu0 %v232, 120
    %v618 = vpop.permute.xlu0 %617
    %619 = vrot.lane.b32.xlu0 %v235, 120
    %v620 = vpop.permute.xlu0 %619
    %v623 = vmul.f32 %v589, %v618
    %v624 = vmul.f32 %v613, %v620
    %v625 = vsel %vm264, %v623, -inf
    %626 = vmax.xlane.f32.xlu0 %v625
    %v627 = vpop.xlane.xlu0 %626
    %v628 = vsel %vm264, %v624, -inf
    %629 = vmax.xlane.f32.xlu0 %v628
    %v630 = vpop.xlane.xlu0 %629
    %v631 = vsub.f32 %v623, %v627
    %v632 = vsub.f32 %v624, %v630
    %v633 = vmul.f32 %v631, 1.442695
    %v634 = vpow.pop %v633
    %v635 = vmul.f32 %v632, 1.442695
    %v636 = vpow.pop %v635
    %v637 = vsel %vm264, %v634, 0.0
    %638 = vadd.xlane.f32.xlu0 %v637
    %v639 = vpop.xlane.xlu0 %638
    %v640 = vsel %vm264, %v636, 0.0
    %641 = vadd.xlane.f32.xlu0 %v640
    %v642 = vpop.xlane.xlu0 %641
    %v643 = vrcp.pop %v639
    %v644 = vmul.f32 %v639, %v643
    %v645 = vsub.f32 1.0, %v644
    %v646 = vmul.f32 %v643, %v645
    %v647 = vadd.f32 %v643, %v646
    %vm648 = vweird.f32 %v639
    %vm649 = vweird.f32 %v643
    %vm650 = vmor %vm648, %vm649
    %v651 = vsel %vm650, %v643, %v647
    %v652 = vand.u32 2147483647, %v639
    %vm653 = vcmp.eq.f32.partialorder %v652, 8.507059e+37
    %v654 = vand.u32 %v639, 2147483648
    %v655 = vor.u32 1.1754944e-38, %v654
    %v656 = vsel %vm653, %v655, %v651
    %v657 = vrcp.pop %v642
    %v658 = vmul.f32 %v642, %v657
    %v659 = vsub.f32 1.0, %v658
    %v660 = vmul.f32 %v657, %v659
    %v661 = vadd.f32 %v657, %v660
    %vm662 = vweird.f32 %v642
    %vm663 = vweird.f32 %v657
    %vm664 = vmor %vm662, %vm663
    %v665 = vsel %vm664, %v657, %v661
    %v666 = vand.u32 2147483647, %v642
    %vm667 = vcmp.eq.f32.partialorder %v666, 8.507059e+37
    %v668 = vand.u32 %v642, 2147483648
    %v669 = vor.u32 1.1754944e-38, %v668
    %v670 = vsel %vm667, %v669, %v665
    %v671 = vmul.f32 %v634, %v656
    %v672 = vmul.f32 %v636, %v670
    %v673 = vmul.f32 %v589, %v671
    %v674 = vmul.f32 %v613, %v672
    %675 = vrot.lane.b32.xlu0 %v172, 112
    %v676 = vpop.permute.xlu0 %675
    %677 = vrot.lane.b32.xlu0 %v199, 112
    %v678 = vpop.permute.xlu0 %677
    %v679 = vsel %vm264, %v676, 0
    %v681 = vsel %vm264, %v678, 0
    %683 = vmatpush.xpose.msra.mxu0 0.0
    %684 = vmatpush.xpose.msra.mxu0 0.0
    %685 = vmatpush.xpose.msra.mxu0 0.0
    %686 = vmatpush.xpose.msra.mxu0 0.0
    %687 = vmatpush.xpose.msra.mxu0 0.0
    %688 = vmatpush.xpose.msra.mxu0 0.0
    %689 = vmatpush.xpose.msra.mxu0 0.0
    %690 = vmatpush.xpose.msra.mxu0 0.0
    %691 = vmatpush.xpose.msra.mxu0 0.0
    %692 = vmatpush.xpose.msra.mxu0 0.0
    %693 = vmatpush.xpose.msra.mxu0 0.0
    %694 = vmatpush.xpose.msra.mxu0 0.0
    %695 = vmatpush.xpose.msra.mxu0 0.0
    %696 = vmatpush.xpose.msra.mxu0 0.0
    %697 = vmatpush.xpose.msra.mxu0 0.0
    %698 = vmatpush.xpose.msra.mxu0 %v681
    %699 = vmatmul.f32.gmra.mxu0 %v679
    %v700 = vpop.f32.mrf.mxu0
    %v701 = vadd.f32 0.0, %v700
    %702 = vdwg.mxu0
    %703 = vrot.lane.b32.xlu0 %v175, 112
    %v704 = vpop.permute.xlu0 %703
    %705 = vrot.lane.b32.xlu0 %v202, 112
    %v706 = vpop.permute.xlu0 %705
    %v707 = vsel %vm264, %v704, 0
    %v709 = vsel %vm264, %v706, 0
    %711 = vmatpush.xpose.msra.mxu0 0.0
    %712 = vmatpush.xpose.msra.mxu0 0.0
    %713 = vmatpush.xpose.msra.mxu0 0.0
    %714 = vmatpush.xpose.msra.mxu0 0.0
    %715 = vmatpush.xpose.msra.mxu0 0.0
    %716 = vmatpush.xpose.msra.mxu0 0.0
    %717 = vmatpush.xpose.msra.mxu0 0.0
    %718 = vmatpush.xpose.msra.mxu0 0.0
    %719 = vmatpush.xpose.msra.mxu0 0.0
    %720 = vmatpush.xpose.msra.mxu0 0.0
    %721 = vmatpush.xpose.msra.mxu0 0.0
    %722 = vmatpush.xpose.msra.mxu0 0.0
    %723 = vmatpush.xpose.msra.mxu0 0.0
    %724 = vmatpush.xpose.msra.mxu0 0.0
    %725 = vmatpush.xpose.msra.mxu0 0.0
    %726 = vmatpush.xpose.msra.mxu0 %v709
    %727 = vmatmul.f32.gmra.mxu0 %v707
    %v728 = vpop.f32.mrf.mxu0
    %v729 = vadd.f32 0.0, %v728
    %730 = vdwg.mxu0
    %v731 = vsel %vm264, %v701, -inf
    %732 = vmax.xlane.f32.xlu0 %v731
    %v733 = vpop.xlane.xlu0 %732
    %v734 = vsel %vm264, %v729, -inf
    %735 = vmax.xlane.f32.xlu0 %v734
    %v736 = vpop.xlane.xlu0 %735
    %v737 = vsub.f32 %v701, %v733
    %v738 = vsub.f32 %v729, %v736
    %v739 = vmul.f32 %v737, 1.442695
    %v740 = vpow.pop %v739
    %v741 = vmul.f32 %v738, 1.442695
    %v742 = vpow.pop %v741
    %v743 = vsel %vm264, %v740, 0.0
    %744 = vadd.xlane.f32.xlu0 %v743
    %v745 = vpop.xlane.xlu0 %744
    %v746 = vsel %vm264, %v742, 0.0
    %747 = vadd.xlane.f32.xlu0 %v746
    %v748 = vpop.xlane.xlu0 %747
    %v749 = vrcp.pop %v745
    %v750 = vmul.f32 %v745, %v749
    %v751 = vsub.f32 1.0, %v750
    %v752 = vmul.f32 %v749, %v751
    %v753 = vadd.f32 %v749, %v752
    %vm754 = vweird.f32 %v745
    %vm755 = vweird.f32 %v749
    %vm756 = vmor %vm754, %vm755
    %v757 = vsel %vm756, %v749, %v753
    %v758 = vand.u32 2147483647, %v745
    %vm759 = vcmp.eq.f32.partialorder %v758, 8.507059e+37
    %v760 = vand.u32 %v745, 2147483648
    %v761 = vor.u32 1.1754944e-38, %v760
    %v762 = vsel %vm759, %v761, %v757
    %v763 = vrcp.pop %v748
    %v764 = vmul.f32 %v748, %v763
    %v765 = vsub.f32 1.0, %v764
    %v766 = vmul.f32 %v763, %v765
    %v767 = vadd.f32 %v763, %v766
    %vm768 = vweird.f32 %v748
    %vm769 = vweird.f32 %v763
    %vm770 = vmor %vm768, %vm769
    %v771 = vsel %vm770, %v763, %v767
    %v772 = vand.u32 2147483647, %v748
    %vm773 = vcmp.eq.f32.partialorder %v772, 8.507059e+37
    %v774 = vand.u32 %v748, 2147483648
    %v775 = vor.u32 1.1754944e-38, %v774
    %v776 = vsel %vm773, %v775, %v771
    %v777 = vmul.f32 %v740, %v762
    %v778 = vmul.f32 %v742, %v776
    %v781 = vsel %vm264, %v777, 0
    %783 = vmatpush.msra.mxu0 0.0
    %784 = vmatpush.msra.mxu0 0.0
    %785 = vmatpush.msra.mxu0 0.0
    %786 = vmatpush.msra.mxu0 0.0
    %787 = vmatpush.msra.mxu0 0.0
    %788 = vmatpush.msra.mxu0 0.0
    %789 = vmatpush.msra.mxu0 0.0
    %790 = vmatpush.msra.mxu0 0.0
    %791 = vmatpush.msra.mxu0 0.0
    %792 = vmatpush.msra.mxu0 0.0
    %793 = vmatpush.msra.mxu0 0.0
    %794 = vmatpush.msra.mxu0 0.0
    %795 = vmatpush.msra.mxu0 0.0
    %796 = vmatpush.msra.mxu0 0.0
    %797 = vmatpush.msra.mxu0 0.0
    %798 = vmatpush.msra.mxu0 %v678
    %799 = vmatmul.f32.gmra.mxu0 %v781
    %v800 = vpop.f32.mrf.mxu0
    %v801 = vadd.f32 0.0, %v800
    %802 = vdwg.mxu0
    %v805 = vsel %vm264, %v778, 0
    %807 = vmatpush.msra.mxu0 0.0
    %808 = vmatpush.msra.mxu0 0.0
    %809 = vmatpush.msra.mxu0 0.0
    %810 = vmatpush.msra.mxu0 0.0
    %811 = vmatpush.msra.mxu0 0.0
    %812 = vmatpush.msra.mxu0 0.0
    %813 = vmatpush.msra.mxu0 0.0
    %814 = vmatpush.msra.mxu0 0.0
    %815 = vmatpush.msra.mxu0 0.0
    %816 = vmatpush.msra.mxu0 0.0
    %817 = vmatpush.msra.mxu0 0.0
    %818 = vmatpush.msra.mxu0 0.0
    %819 = vmatpush.msra.mxu0 0.0
    %820 = vmatpush.msra.mxu0 0.0
    %821 = vmatpush.msra.mxu0 0.0
    %822 = vmatpush.msra.mxu0 %v706
    %823 = vmatmul.f32.gmra.mxu0 %v805
    %v824 = vpop.f32.mrf.mxu0
    %v825 = vadd.f32 0.0, %v824
    %826 = vdwg.mxu0
    %827 = vrot.lane.b32.xlu0 %v232, 112
    %v828 = vpop.permute.xlu0 %827
    %829 = vrot.lane.b32.xlu0 %v235, 112
    %v830 = vpop.permute.xlu0 %829
    %v833 = vmul.f32 %v801, %v828
    %v834 = vmul.f32 %v825, %v830
    %v835 = vsel %vm264, %v833, -inf
    %836 = vmax.xlane.f32.xlu0 %v835
    %v837 = vpop.xlane.xlu0 %836
    %v838 = vsel %vm264, %v834, -inf
    %839 = vmax.xlane.f32.xlu0 %v838
    %v840 = vpop.xlane.xlu0 %839
    %v841 = vsub.f32 %v833, %v837
    %v842 = vsub.f32 %v834, %v840
    %v843 = vmul.f32 %v841, 1.442695
    %v844 = vpow.pop %v843
    %v845 = vmul.f32 %v842, 1.442695
    %v846 = vpow.pop %v845
    %v847 = vsel %vm264, %v844, 0.0
    %848 = vadd.xlane.f32.xlu0 %v847
    %v849 = vpop.xlane.xlu0 %848
    %v850 = vsel %vm264, %v846, 0.0
    %851 = vadd.xlane.f32.xlu0 %v850
    %v852 = vpop.xlane.xlu0 %851
    %v853 = vrcp.pop %v849
    %v854 = vmul.f32 %v849, %v853
    %v855 = vsub.f32 1.0, %v854
    %v856 = vmul.f32 %v853, %v855
    %v857 = vadd.f32 %v853, %v856
    %vm858 = vweird.f32 %v849
    %vm859 = vweird.f32 %v853
    %vm860 = vmor %vm858, %vm859
    %v861 = vsel %vm860, %v853, %v857
    %v862 = vand.u32 2147483647, %v849
    %vm863 = vcmp.eq.f32.partialorder %v862, 8.507059e+37
    %v864 = vand.u32 %v849, 2147483648
    %v865 = vor.u32 1.1754944e-38, %v864
    %v866 = vsel %vm863, %v865, %v861
    %v867 = vrcp.pop %v852
    %v868 = vmul.f32 %v852, %v867
    %v869 = vsub.f32 1.0, %v868
    %v870 = vmul.f32 %v867, %v869
    %v871 = vadd.f32 %v867, %v870
    %vm872 = vweird.f32 %v852
    %vm873 = vweird.f32 %v867
    %vm874 = vmor %vm872, %vm873
    %v875 = vsel %vm874, %v867, %v871
    %v876 = vand.u32 2147483647, %v852
    %vm877 = vcmp.eq.f32.partialorder %v876, 8.507059e+37
    %v878 = vand.u32 %v852, 2147483648
    %v879 = vor.u32 1.1754944e-38, %v878
    %v880 = vsel %vm877, %v879, %v875
    %v881 = vmul.f32 %v844, %v866
    %v882 = vmul.f32 %v846, %v880
    %v883 = vmul.f32 %v801, %v881
    %v884 = vmul.f32 %v825, %v882
    %885 = vrot.lane.b32.xlu0 %v172, 104
    %v886 = vpop.permute.xlu0 %885
    %887 = vrot.lane.b32.xlu0 %v199, 104
    %v888 = vpop.permute.xlu0 %887
    %v889 = vsel %vm264, %v886, 0
    %v891 = vsel %vm264, %v888, 0
    %893 = vmatpush.xpose.msra.mxu0 0.0
    %894 = vmatpush.xpose.msra.mxu0 0.0
    %895 = vmatpush.xpose.msra.mxu0 0.0
    %896 = vmatpush.xpose.msra.mxu0 0.0
    %897 = vmatpush.xpose.msra.mxu0 0.0
    %898 = vmatpush.xpose.msra.mxu0 0.0
    %899 = vmatpush.xpose.msra.mxu0 0.0
    %900 = vmatpush.xpose.msra.mxu0 0.0
    %901 = vmatpush.xpose.msra.mxu0 0.0
    %902 = vmatpush.xpose.msra.mxu0 0.0
    %903 = vmatpush.xpose.msra.mxu0 0.0
    %904 = vmatpush.xpose.msra.mxu0 0.0
    %905 = vmatpush.xpose.msra.mxu0 0.0
    %906 = vmatpush.xpose.msra.mxu0 0.0
    %907 = vmatpush.xpose.msra.mxu0 0.0
    %908 = vmatpush.xpose.msra.mxu0 %v891
    %909 = vmatmul.f32.gmra.mxu0 %v889
    %v910 = vpop.f32.mrf.mxu0
    %v911 = vadd.f32 0.0, %v910
    %912 = vdwg.mxu0
    %913 = vrot.lane.b32.xlu0 %v175, 104
    %v914 = vpop.permute.xlu0 %913
    %915 = vrot.lane.b32.xlu0 %v202, 104
    %v916 = vpop.permute.xlu0 %915
    %v917 = vsel %vm264, %v914, 0
    %v919 = vsel %vm264, %v916, 0
    %921 = vmatpush.xpose.msra.mxu0 0.0
    %922 = vmatpush.xpose.msra.mxu0 0.0
    %923 = vmatpush.xpose.msra.mxu0 0.0
    %924 = vmatpush.xpose.msra.mxu0 0.0
    %925 = vmatpush.xpose.msra.mxu0 0.0
    %926 = vmatpush.xpose.msra.mxu0 0.0
    %927 = vmatpush.xpose.msra.mxu0 0.0
    %928 = vmatpush.xpose.msra.mxu0 0.0
    %929 = vmatpush.xpose.msra.mxu0 0.0
    %930 = vmatpush.xpose.msra.mxu0 0.0
    %931 = vmatpush.xpose.msra.mxu0 0.0
    %932 = vmatpush.xpose.msra.mxu0 0.0
    %933 = vmatpush.xpose.msra.mxu0 0.0
    %934 = vmatpush.xpose.msra.mxu0 0.0
    %935 = vmatpush.xpose.msra.mxu0 0.0
    %936 = vmatpush.xpose.msra.mxu0 %v919
    %937 = vmatmul.f32.gmra.mxu0 %v917
    %v938 = vpop.f32.mrf.mxu0
    %v939 = vadd.f32 0.0, %v938
    %940 = vdwg.mxu0
    %v941 = vsel %vm264, %v911, -inf
    %942 = vmax.xlane.f32.xlu0 %v941
    %v943 = vpop.xlane.xlu0 %942
    %v944 = vsel %vm264, %v939, -inf
    %945 = vmax.xlane.f32.xlu0 %v944
    %v946 = vpop.xlane.xlu0 %945
    %v947 = vsub.f32 %v911, %v943
    %v948 = vsub.f32 %v939, %v946
    %v949 = vmul.f32 %v947, 1.442695
    %v950 = vpow.pop %v949
    %v951 = vmul.f32 %v948, 1.442695
    %v952 = vpow.pop %v951
    %v953 = vsel %vm264, %v950, 0.0
    %954 = vadd.xlane.f32.xlu0 %v953
    %v955 = vpop.xlane.xlu0 %954
    %v956 = vsel %vm264, %v952, 0.0
    %957 = vadd.xlane.f32.xlu0 %v956
    %v958 = vpop.xlane.xlu0 %957
    %v959 = vrcp.pop %v955
    %v960 = vmul.f32 %v955, %v959
    %v961 = vsub.f32 1.0, %v960
    %v962 = vmul.f32 %v959, %v961
    %v963 = vadd.f32 %v959, %v962
    %vm964 = vweird.f32 %v955
    %vm965 = vweird.f32 %v959
    %vm966 = vmor %vm964, %vm965
    %v967 = vsel %vm966, %v959, %v963
    %v968 = vand.u32 2147483647, %v955
    %vm969 = vcmp.eq.f32.partialorder %v968, 8.507059e+37
    %v970 = vand.u32 %v955, 2147483648
    %v971 = vor.u32 1.1754944e-38, %v970
    %v972 = vsel %vm969, %v971, %v967
    %v973 = vrcp.pop %v958
    %v974 = vmul.f32 %v958, %v973
    %v975 = vsub.f32 1.0, %v974
    %v976 = vmul.f32 %v973, %v975
    %v977 = vadd.f32 %v973, %v976
    %vm978 = vweird.f32 %v958
    %vm979 = vweird.f32 %v973
    %vm980 = vmor %vm978, %vm979
    %v981 = vsel %vm980, %v973, %v977
    %v982 = vand.u32 2147483647, %v958
    %vm983 = vcmp.eq.f32.partialorder %v982, 8.507059e+37
    %v984 = vand.u32 %v958, 2147483648
    %v985 = vor.u32 1.1754944e-38, %v984
    %v986 = vsel %vm983, %v985, %v981
    %v987 = vmul.f32 %v950, %v972
    %v988 = vmul.f32 %v952, %v986
    %v991 = vsel %vm264, %v987, 0
    %993 = vmatpush.msra.mxu0 0.0
    %994 = vmatpush.msra.mxu0 0.0
    %995 = vmatpush.msra.mxu0 0.0
    %996 = vmatpush.msra.mxu0 0.0
    %997 = vmatpush.msra.mxu0 0.0
    %998 = vmatpush.msra.mxu0 0.0
    %999 = vmatpush.msra.mxu0 0.0
    %1000 = vmatpush.msra.mxu0 0.0
    %1001 = vmatpush.msra.mxu0 0.0
    %1002 = vmatpush.msra.mxu0 0.0
    %1003 = vmatpush.msra.mxu0 0.0
    %1004 = vmatpush.msra.mxu0 0.0
    %1005 = vmatpush.msra.mxu0 0.0
    %1006 = vmatpush.msra.mxu0 0.0
    %1007 = vmatpush.msra.mxu0 0.0
    %1008 = vmatpush.msra.mxu0 %v888
    %1009 = vmatmul.f32.gmra.mxu0 %v991
    %v1010 = vpop.f32.mrf.mxu0
    %v1011 = vadd.f32 0.0, %v1010
    %1012 = vdwg.mxu0
    %v1015 = vsel %vm264, %v988, 0
    %1017 = vmatpush.msra.mxu0 0.0
    %1018 = vmatpush.msra.mxu0 0.0
    %1019 = vmatpush.msra.mxu0 0.0
    %1020 = vmatpush.msra.mxu0 0.0
    %1021 = vmatpush.msra.mxu0 0.0
    %1022 = vmatpush.msra.mxu0 0.0
    %1023 = vmatpush.msra.mxu0 0.0
    %1024 = vmatpush.msra.mxu0 0.0
    %1025 = vmatpush.msra.mxu0 0.0
    %1026 = vmatpush.msra.mxu0 0.0
    %1027 = vmatpush.msra.mxu0 0.0
    %1028 = vmatpush.msra.mxu0 0.0
    %1029 = vmatpush.msra.mxu0 0.0
    %1030 = vmatpush.msra.mxu0 0.0
    %1031 = vmatpush.msra.mxu0 0.0
    %1032 = vmatpush.msra.mxu0 %v916
    %1033 = vmatmul.f32.gmra.mxu0 %v1015
    %v1034 = vpop.f32.mrf.mxu0
    %v1035 = vadd.f32 0.0, %v1034
    %1036 = vdwg.mxu0
    %1037 = vrot.lane.b32.xlu0 %v232, 104
    %v1038 = vpop.permute.xlu0 %1037
    %1039 = vrot.lane.b32.xlu0 %v235, 104
    %v1040 = vpop.permute.xlu0 %1039
    %v1043 = vmul.f32 %v1011, %v1038
    %v1044 = vmul.f32 %v1035, %v1040
    %v1045 = vsel %vm264, %v1043, -inf
    %1046 = vmax.xlane.f32.xlu0 %v1045
    %v1047 = vpop.xlane.xlu0 %1046
    %v1048 = vsel %vm264, %v1044, -inf
    %1049 = vmax.xlane.f32.xlu0 %v1048
    %v1050 = vpop.xlane.xlu0 %1049
    %v1051 = vsub.f32 %v1043, %v1047
    %v1052 = vsub.f32 %v1044, %v1050
    %v1053 = vmul.f32 %v1051, 1.442695
    %v1054 = vpow.pop %v1053
    %v1055 = vmul.f32 %v1052, 1.442695
    %v1056 = vpow.pop %v1055
    %v1057 = vsel %vm264, %v1054, 0.0
    %1058 = vadd.xlane.f32.xlu0 %v1057
    %v1059 = vpop.xlane.xlu0 %1058
    %v1060 = vsel %vm264, %v1056, 0.0
    %1061 = vadd.xlane.f32.xlu0 %v1060
    %v1062 = vpop.xlane.xlu0 %1061
    %v1063 = vrcp.pop %v1059
    %v1064 = vmul.f32 %v1059, %v1063
    %v1065 = vsub.f32 1.0, %v1064
    %v1066 = vmul.f32 %v1063, %v1065
    %v1067 = vadd.f32 %v1063, %v1066
    %vm1068 = vweird.f32 %v1059
    %vm1069 = vweird.f32 %v1063
    %vm1070 = vmor %vm1068, %vm1069
    %v1071 = vsel %vm1070, %v1063, %v1067
    %v1072 = vand.u32 2147483647, %v1059
    %vm1073 = vcmp.eq.f32.partialorder %v1072, 8.507059e+37
    %v1074 = vand.u32 %v1059, 2147483648
    %v1075 = vor.u32 1.1754944e-38, %v1074
    %v1076 = vsel %vm1073, %v1075, %v1071
    %v1077 = vrcp.pop %v1062
    %v1078 = vmul.f32 %v1062, %v1077
    %v1079 = vsub.f32 1.0, %v1078
    %v1080 = vmul.f32 %v1077, %v1079
    %v1081 = vadd.f32 %v1077, %v1080
    %vm1082 = vweird.f32 %v1062
    %vm1083 = vweird.f32 %v1077
    %vm1084 = vmor %vm1082, %vm1083
    %v1085 = vsel %vm1084, %v1077, %v1081
    %v1086 = vand.u32 2147483647, %v1062
    %vm1087 = vcmp.eq.f32.partialorder %v1086, 8.507059e+37
    %v1088 = vand.u32 %v1062, 2147483648
    %v1089 = vor.u32 1.1754944e-38, %v1088
    %v1090 = vsel %vm1087, %v1089, %v1085
    %v1091 = vmul.f32 %v1054, %v1076
    %v1092 = vmul.f32 %v1056, %v1090
    %v1093 = vmul.f32 %v1011, %v1091
    %v1094 = vmul.f32 %v1035, %v1092
    %1097 = vrot.lane.b32.xlu0 %v673, 8
    %v1098 = vpop.permute.xlu0 %1097
    %1099 = vrot.lane.b32.xlu0 %v674, 8
    %v1100 = vpop.permute.xlu0 %1099
    %1105 = vrot.lane.b32.xlu0 %v883, 16
    %v1106 = vpop.permute.xlu0 %1105
    %1107 = vrot.lane.b32.xlu0 %v884, 16
    %v1108 = vpop.permute.xlu0 %1107
    %1113 = vrot.lane.b32.xlu0 %v1093, 24
    %v1114 = vpop.permute.xlu0 %1113
    %1115 = vrot.lane.b32.xlu0 %v1094, 24
    %v1116 = vpop.permute.xlu0 %1115
    %v1119 = vsel %vm264, %v461, %v1098
    %v1120 = vsel %vm264, %v462, %v1100
    %vm1121 = vcmask 130048
    %v1122 = vsel %vm1121, %v1119, %v1106
    %v1123 = vsel %vm1121, %v1120, %v1108
    %vm1124 = vcmask 195584
    %v1125 = vsel %vm1124, %v1122, %v1114
    %v1126 = vsel %vm1124, %v1123, %v1116
    %v1127 = vld [vmem:[#allocation11] sm:$0xff]
    %v1128 = vld [vmem:[#allocation11 + $0x8] sm:$0xff]
    %v1129 = vld [vmem:[#allocation11 + $0x10] sm:$0xff]
    %v1130 = vld [vmem:[#allocation11 + $0x18] sm:$0xff]
    %v1131 = vld [vmem:[%s6] sm:$0x1]
    %v1133 = vperm.slane %v1131, 0
    %v1136 = vsel %vm147, %v1125, 0
    %v1139 = vsel %vm147, %v1126, 0
    %1141 = vmatpush.msra.mxu0 0.0
    %1142 = vmatpush.msra.mxu0 0.0
    %1143 = vmatpush.msra.mxu0 0.0
    %1144 = vmatpush.msra.mxu0 0.0
    %1145 = vmatpush.msra.mxu0 0.0
    %1146 = vmatpush.msra.mxu0 0.0
    %1147 = vmatpush.msra.mxu0 0.0
    %1148 = vmatpush.msra.mxu0 0.0
    %1149 = vmatpush.msra.mxu0 0.0
    %1150 = vmatpush.msra.mxu0 0.0
    %1151 = vmatpush.msra.mxu0 0.0
    %1152 = vmatpush.msra.mxu0 0.0
    %1153 = vmatpush.msra.mxu0 %v1130
    %1154 = vmatpush.msra.mxu0 %v1129
    %1155 = vmatpush.msra.mxu0 %v1128
    %1156 = vmatpush.msra.mxu0 %v1127
    %1157 = vmatmul.f32.gmra.mxu0 %v1136
    %v1158 = vpop.f32.mrf.mxu0
    %v1159 = vadd.f32 %v1133, %v1158
    %1160 = vmatmul.f32.gmra.mxu0 %v1139
    %v1161 = vpop.f32.mrf.mxu0
    %v1162 = vadd.f32 %v1133, %v1161
    %1163 = vdwg.mxu0
    %1164 = vxpose.xlu0.b32.start [1/16] %v259, 128
    %1165 = vxpose.xlu0.b32.cont [2/16] 0.0, 128
    %1166 = vxpose.xlu0.b32.cont [3/16] 0.0, 128
    %1167 = vxpose.xlu0.b32.cont [4/16] 0.0, 128
    %1168 = vxpose.xlu0.b32.cont [5/16] 0.0, 128
    %1169 = vxpose.xlu0.b32.cont [6/16] 0.0, 128
    %1170 = vxpose.xlu0.b32.cont [7/16] 0.0, 128
    %1171 = vxpose.xlu0.b32.cont [8/16] 0.0, 128
    %1172 = vxpose.xlu0.b32.cont [9/16] 0.0, 128
    %1173 = vxpose.xlu0.b32.cont [10/16] 0.0, 128
    %1174 = vxpose.xlu0.b32.cont [11/16] 0.0, 128
    %1175 = vxpose.xlu0.b32.cont [12/16] 0.0, 128
    %1176 = vxpose.xlu0.b32.cont [13/16] 0.0, 128
    %1177 = vxpose.xlu0.b32.cont [14/16] 0.0, 128
    %1178 = vxpose.xlu0.b32.cont [15/16] 0.0, 128
    %1179 = vxpose.xlu0.b32.end [16/16] 0.0, 128
    %v1180 = vpop.trf.xlu0
    %v1181 = vpop.trf.xlu0
    %v1182 = vpop.trf.xlu0
    %v1183 = vpop.trf.xlu0
    %v1184 = vpop.trf.xlu0
    %v1185 = vpop.trf.xlu0
    %v1186 = vpop.trf.xlu0
    %v1187 = vpop.trf.xlu0
    %v1188 = vpop.trf.xlu0
    %v1189 = vpop.trf.xlu0
    %v1190 = vpop.trf.xlu0
    %v1191 = vpop.trf.xlu0
    %v1192 = vpop.trf.xlu0
    %v1193 = vpop.trf.xlu0
    %v1194 = vpop.trf.xlu0
    %v1195 = vpop.trf.xlu0
    %v1197 = vsel %vm264, %v1180, 0
    %v1200 = vsel %vm264, %v1181, 0
    %v1203 = vsel %vm264, %v1182, 0
    %v1206 = vsel %vm264, %v1183, 0
    %1208 = vmatpush.msra.mxu0 0.0
    %1209 = vmatpush.msra.mxu0 0.0
    %1210 = vmatpush.msra.mxu0 0.0
    %1211 = vmatpush.msra.mxu0 0.0
    %1212 = vmatpush.msra.mxu0 0.0
    %1213 = vmatpush.msra.mxu0 0.0
    %1214 = vmatpush.msra.mxu0 0.0
    %1215 = vmatpush.msra.mxu0 0.0
    %1216 = vmatpush.msra.mxu0 0.0
    %1217 = vmatpush.msra.mxu0 0.0
    %1218 = vmatpush.msra.mxu0 0.0
    %1219 = vmatpush.msra.mxu0 0.0
    %1220 = vmatpush.msra.mxu0 0.0
    %1221 = vmatpush.msra.mxu0 0.0
    %1222 = vmatpush.msra.mxu0 0.0
    %1223 = vmatpush.msra.mxu0 %v259
    %1224 = vmatmul.f32.gmra.mxu0 %v1197
    %v1225 = vpop.f32.mrf.mxu0
    %v1226 = vadd.f32 0.0, %v1225
    %1227 = vmatmul.f32.gmra.mxu0 %v1200
    %v1228 = vpop.f32.mrf.mxu0
    %v1229 = vadd.f32 0.0, %v1228
    %1230 = vmatmul.f32.gmra.mxu0 %v1203
    %v1231 = vpop.f32.mrf.mxu0
    %v1232 = vadd.f32 0.0, %v1231
    %1233 = vmatmul.f32.gmra.mxu0 %v1206
    %v1234 = vpop.f32.mrf.mxu0
    %v1235 = vadd.f32 0.0, %v1234
    %1236 = vdwg.mxu0
    %v1237 = vmul.f32 %v1226, 0.35355338
    %v1238 = vmul.f32 %v1229, 0.35355338
    %v1239 = vmul.f32 %v1232, 0.35355338
    %v1240 = vmul.f32 %v1235, 0.35355338
    %v1241 = vxor.u32 %v1237, 2147483648
    %v1242 = vxor.u32 %v1238, 2147483648
    %v1243 = vxor.u32 %v1239, 2147483648
    %v1244 = vxor.u32 %v1240, 2147483648
    %v1245 = vmul.f32 %v1241, 1.442695
    %v1246 = vpow.pop %v1245
    %v1247 = vmul.f32 %v1242, 1.442695
    %v1248 = vpow.pop %v1247
    %v1249 = vmul.f32 %v1243, 1.442695
    %v1250 = vpow.pop %v1249
    %v1251 = vmul.f32 %v1244, 1.442695
    %v1252 = vpow.pop %v1251
    %v1253 = vadd.f32 %v1246, 1.0
    %v1254 = vadd.f32 %v1248, 1.0
    %v1255 = vadd.f32 %v1250, 1.0
    %v1256 = vadd.f32 %v1252, 1.0
    %v1257 = vrcp.pop %v1253
    %v1258 = vmul.f32 %v1253, %v1257
    %v1259 = vsub.f32 1.0, %v1258
    %v1260 = vmul.f32 %v1257, %v1259
    %v1261 = vadd.f32 %v1257, %v1260
    %vm1262 = vweird.f32 %v1253
    %vm1263 = vweird.f32 %v1257
    %vm1264 = vmor %vm1262, %vm1263
    %v1265 = vsel %vm1264, %v1257, %v1261
    %v1266 = vand.u32 2147483647, %v1253
    %vm1267 = vcmp.eq.f32.partialorder %v1266, 8.507059e+37
    %v1268 = vand.u32 %v1253, 2147483648
    %v1269 = vor.u32 1.1754944e-38, %v1268
    %v1270 = vsel %vm1267, %v1269, %v1265
    %v1271 = vmul.f32 1.0, %v1270
    %v1272 = vrcp.pop %v1254
    %v1273 = vmul.f32 %v1254, %v1272
    %v1274 = vsub.f32 1.0, %v1273
    %v1275 = vmul.f32 %v1272, %v1274
    %v1276 = vadd.f32 %v1272, %v1275
    %vm1277 = vweird.f32 %v1254
    %vm1278 = vweird.f32 %v1272
    %vm1279 = vmor %vm1277, %vm1278
    %v1280 = vsel %vm1279, %v1272, %v1276
    %v1281 = vand.u32 2147483647, %v1254
    %vm1282 = vcmp.eq.f32.partialorder %v1281, 8.507059e+37
    %v1283 = vand.u32 %v1254, 2147483648
    %v1284 = vor.u32 1.1754944e-38, %v1283
    %v1285 = vsel %vm1282, %v1284, %v1280
    %v1286 = vmul.f32 1.0, %v1285
    %v1287 = vrcp.pop %v1255
    %v1288 = vmul.f32 %v1255, %v1287
    %v1289 = vsub.f32 1.0, %v1288
    %v1290 = vmul.f32 %v1287, %v1289
    %v1291 = vadd.f32 %v1287, %v1290
    %vm1292 = vweird.f32 %v1255
    %vm1293 = vweird.f32 %v1287
    %vm1294 = vmor %vm1292, %vm1293
    %v1295 = vsel %vm1294, %v1287, %v1291
    %v1296 = vand.u32 2147483647, %v1255
    %vm1297 = vcmp.eq.f32.partialorder %v1296, 8.507059e+37
    %v1298 = vand.u32 %v1255, 2147483648
    %v1299 = vor.u32 1.1754944e-38, %v1298
    %v1300 = vsel %vm1297, %v1299, %v1295
    %v1301 = vmul.f32 1.0, %v1300
    %v1302 = vrcp.pop %v1256
    %v1303 = vmul.f32 %v1256, %v1302
    %v1304 = vsub.f32 1.0, %v1303
    %v1305 = vmul.f32 %v1302, %v1304
    %v1306 = vadd.f32 %v1302, %v1305
    %vm1307 = vweird.f32 %v1256
    %vm1308 = vweird.f32 %v1302
    %vm1309 = vmor %vm1307, %vm1308
    %v1310 = vsel %vm1309, %v1302, %v1306
    %v1311 = vand.u32 2147483647, %v1256
    %vm1312 = vcmp.eq.f32.partialorder %v1311, 8.507059e+37
    %v1313 = vand.u32 %v1256, 2147483648
    %v1314 = vor.u32 1.1754944e-38, %v1313
    %v1315 = vsel %vm1312, %v1314, %v1310
    %v1316 = vmul.f32 1.0, %v1315
    %v1318 = vsel %vm147, %v1159, 0
    %1320 = vmatpush.msra.mxu0 0.0
    %1321 = vmatpush.msra.mxu0 0.0
    %1322 = vmatpush.msra.mxu0 0.0
    %1323 = vmatpush.msra.mxu0 0.0
    %1324 = vmatpush.msra.mxu0 0.0
    %1325 = vmatpush.msra.mxu0 0.0
    %1326 = vmatpush.msra.mxu0 0.0
    %1327 = vmatpush.msra.mxu0 0.0
    %1328 = vmatpush.msra.mxu0 0.0
    %1329 = vmatpush.msra.mxu0 0.0
    %1330 = vmatpush.msra.mxu0 0.0
    %1331 = vmatpush.msra.mxu0 0.0
    %1332 = vmatpush.msra.mxu0 %v1316
    %1333 = vmatpush.msra.mxu0 %v1301
    %1334 = vmatpush.msra.mxu0 %v1286
    %1335 = vmatpush.msra.mxu0 %v1271
    %1336 = vmatmul.f32.gmra.mxu0 %v1318
    %v1337 = vpop.f32.mrf.mxu0
    %v1338 = vadd.f32 0.0, %v1337
    %1339 = vdwg.mxu0
    %1340 = vst [vmem:[#allocation14] sm:$0xff] %v1338
    %1341 = vxpose.xlu0.b32.start [1/16] %v262, 128
    %1342 = vxpose.xlu0.b32.cont [2/16] 0.0, 128
    %1343 = vxpose.xlu0.b32.cont [3/16] 0.0, 128
    %1344 = vxpose.xlu0.b32.cont [4/16] 0.0, 128
    %1345 = vxpose.xlu0.b32.cont [5/16] 0.0, 128
    %1346 = vxpose.xlu0.b32.cont [6/16] 0.0, 128
    %1347 = vxpose.xlu0.b32.cont [7/16] 0.0, 128
    %1348 = vxpose.xlu0.b32.cont [8/16] 0.0, 128
    %1349 = vxpose.xlu0.b32.cont [9/16] 0.0, 128
    %1350 = vxpose.xlu0.b32.cont [10/16] 0.0, 128
    %1351 = vxpose.xlu0.b32.cont [11/16] 0.0, 128
    %1352 = vxpose.xlu0.b32.cont [12/16] 0.0, 128
    %1353 = vxpose.xlu0.b32.cont [13/16] 0.0, 128
    %1354 = vxpose.xlu0.b32.cont [14/16] 0.0, 128
    %1355 = vxpose.xlu0.b32.cont [15/16] 0.0, 128
    %1356 = vxpose.xlu0.b32.end [16/16] 0.0, 128
    %v1357 = vpop.trf.xlu0
    %v1358 = vpop.trf.xlu0
    %v1359 = vpop.trf.xlu0
    %v1360 = vpop.trf.xlu0
    %v1361 = vpop.trf.xlu0
    %v1362 = vpop.trf.xlu0
    %v1363 = vpop.trf.xlu0
    %v1364 = vpop.trf.xlu0
    %v1365 = vpop.trf.xlu0
    %v1366 = vpop.trf.xlu0
    %v1367 = vpop.trf.xlu0
    %v1368 = vpop.trf.xlu0
    %v1369 = vpop.trf.xlu0
    %v1370 = vpop.trf.xlu0
    %v1371 = vpop.trf.xlu0
    %v1372 = vpop.trf.xlu0
    %v1374 = vsel %vm264, %v1357, 0
    %v1377 = vsel %vm264, %v1358, 0
    %v1380 = vsel %vm264, %v1359, 0
    %v1383 = vsel %vm264, %v1360, 0
    %1385 = vmatpush.msra.mxu0 0.0
    %1386 = vmatpush.msra.mxu0 0.0
    %1387 = vmatpush.msra.mxu0 0.0
    %1388 = vmatpush.msra.mxu0 0.0
    %1389 = vmatpush.msra.mxu0 0.0
    %1390 = vmatpush.msra.mxu0 0.0
    %1391 = vmatpush.msra.mxu0 0.0
    %1392 = vmatpush.msra.mxu0 0.0
    %1393 = vmatpush.msra.mxu0 0.0
    %1394 = vmatpush.msra.mxu0 0.0
    %1395 = vmatpush.msra.mxu0 0.0
    %1396 = vmatpush.msra.mxu0 0.0
    %1397 = vmatpush.msra.mxu0 0.0
    %1398 = vmatpush.msra.mxu0 0.0
    %1399 = vmatpush.msra.mxu0 0.0
    %1400 = vmatpush.msra.mxu0 %v262
    %1401 = vmatmul.f32.gmra.mxu0 %v1374
    %v1402 = vpop.f32.mrf.mxu0
    %v1403 = vadd.f32 0.0, %v1402
    %1404 = vmatmul.f32.gmra.mxu0 %v1377
    %v1405 = vpop.f32.mrf.mxu0
    %v1406 = vadd.f32 0.0, %v1405
    %1407 = vmatmul.f32.gmra.mxu0 %v1380
    %v1408 = vpop.f32.mrf.mxu0
    %v1409 = vadd.f32 0.0, %v1408
    %1410 = vmatmul.f32.gmra.mxu0 %v1383
    %v1411 = vpop.f32.mrf.mxu0
    %v1412 = vadd.f32 0.0, %v1411
    %1413 = vdwg.mxu0
    %v1414 = vmul.f32 %v1403, 0.35355338
    %v1415 = vmul.f32 %v1406, 0.35355338
    %v1416 = vmul.f32 %v1409, 0.35355338
    %v1417 = vmul.f32 %v1412, 0.35355338
    %v1418 = vxor.u32 %v1414, 2147483648
    %v1419 = vxor.u32 %v1415, 2147483648
    %v1420 = vxor.u32 %v1416, 2147483648
    %v1421 = vxor.u32 %v1417, 2147483648
    %v1422 = vmul.f32 %v1418, 1.442695
    %v1423 = vpow.pop %v1422
    %v1424 = vmul.f32 %v1419, 1.442695
    %v1425 = vpow.pop %v1424
    %v1426 = vmul.f32 %v1420, 1.442695
    %v1427 = vpow.pop %v1426
    %v1428 = vmul.f32 %v1421, 1.442695
    %v1429 = vpow.pop %v1428
    %v1430 = vadd.f32 %v1423, 1.0
    %v1431 = vadd.f32 %v1425, 1.0
    %v1432 = vadd.f32 %v1427, 1.0
    %v1433 = vadd.f32 %v1429, 1.0
    %v1434 = vrcp.pop %v1430
    %v1435 = vmul.f32 %v1430, %v1434
    %v1436 = vsub.f32 1.0, %v1435
    %v1437 = vmul.f32 %v1434, %v1436
    %v1438 = vadd.f32 %v1434, %v1437
    %vm1439 = vweird.f32 %v1430
    %vm1440 = vweird.f32 %v1434
    %vm1441 = vmor %vm1439, %vm1440
    %v1442 = vsel %vm1441, %v1434, %v1438
    %v1443 = vand.u32 2147483647, %v1430
    %vm1444 = vcmp.eq.f32.partialorder %v1443, 8.507059e+37
    %v1445 = vand.u32 %v1430, 2147483648
    %v1446 = vor.u32 1.1754944e-38, %v1445
    %v1447 = vsel %vm1444, %v1446, %v1442
    %v1448 = vmul.f32 1.0, %v1447
    %v1449 = vrcp.pop %v1431
    %v1450 = vmul.f32 %v1431, %v1449
    %v1451 = vsub.f32 1.0, %v1450
    %v1452 = vmul.f32 %v1449, %v1451
    %v1453 = vadd.f32 %v1449, %v1452
    %vm1454 = vweird.f32 %v1431
    %vm1455 = vweird.f32 %v1449
    %vm1456 = vmor %vm1454, %vm1455
    %v1457 = vsel %vm1456, %v1449, %v1453
    %v1458 = vand.u32 2147483647, %v1431
    %vm1459 = vcmp.eq.f32.partialorder %v1458, 8.507059e+37
    %v1460 = vand.u32 %v1431, 2147483648
    %v1461 = vor.u32 1.1754944e-38, %v1460
    %v1462 = vsel %vm1459, %v1461, %v1457
    %v1463 = vmul.f32 1.0, %v1462
    %v1464 = vrcp.pop %v1432
    %v1465 = vmul.f32 %v1432, %v1464
    %v1466 = vsub.f32 1.0, %v1465
    %v1467 = vmul.f32 %v1464, %v1466
    %v1468 = vadd.f32 %v1464, %v1467
    %vm1469 = vweird.f32 %v1432
    %vm1470 = vweird.f32 %v1464
    %vm1471 = vmor %vm1469, %vm1470
    %v1472 = vsel %vm1471, %v1464, %v1468
    %v1473 = vand.u32 2147483647, %v1432
    %vm1474 = vcmp.eq.f32.partialorder %v1473, 8.507059e+37
    %v1475 = vand.u32 %v1432, 2147483648
    %v1476 = vor.u32 1.1754944e-38, %v1475
    %v1477 = vsel %vm1474, %v1476, %v1472
    %v1478 = vmul.f32 1.0, %v1477
    %v1479 = vrcp.pop %v1433
    %v1480 = vmul.f32 %v1433, %v1479
    %v1481 = vsub.f32 1.0, %v1480
    %v1482 = vmul.f32 %v1479, %v1481
    %v1483 = vadd.f32 %v1479, %v1482
    %vm1484 = vweird.f32 %v1433
    %vm1485 = vweird.f32 %v1479
    %vm1486 = vmor %vm1484, %vm1485
    %v1487 = vsel %vm1486, %v1479, %v1483
    %v1488 = vand.u32 2147483647, %v1433
    %vm1489 = vcmp.eq.f32.partialorder %v1488, 8.507059e+37
    %v1490 = vand.u32 %v1433, 2147483648
    %v1491 = vor.u32 1.1754944e-38, %v1490
    %v1492 = vsel %vm1489, %v1491, %v1487
    %v1493 = vmul.f32 1.0, %v1492
    %v1495 = vsel %vm147, %v1162, 0
    %1497 = vmatpush.msra.mxu0 0.0
    %1498 = vmatpush.msra.mxu0 0.0
    %1499 = vmatpush.msra.mxu0 0.0
    %1500 = vmatpush.msra.mxu0 0.0
    %1501 = vmatpush.msra.mxu0 0.0
    %1502 = vmatpush.msra.mxu0 0.0
    %1503 = vmatpush.msra.mxu0 0.0
    %1504 = vmatpush.msra.mxu0 0.0
    %1505 = vmatpush.msra.mxu0 0.0
    %1506 = vmatpush.msra.mxu0 0.0
    %1507 = vmatpush.msra.mxu0 0.0
    %1508 = vmatpush.msra.mxu0 0.0
    %1509 = vmatpush.msra.mxu0 %v1493
    %1510 = vmatpush.msra.mxu0 %v1478
    %1511 = vmatpush.msra.mxu0 %v1463
    %1512 = vmatpush.msra.mxu0 %v1448
    %1513 = vmatmul.f32.gmra.mxu0 %v1495
    %v1514 = vpop.f32.mrf.mxu0
    %v1515 = vadd.f32 0.0, %v1514
    %1516 = vdwg.mxu0
    %s1517 = scalar_lea.vmem [#allocation14], 8
    %1518 = vst [vmem:[%s1517] sm:$0xff] %v1515
    // Predicated region
    $region62: #{tpu_custom_call.1} parent=1 // pred_check
      _
    $region63: #{tpu_custom_call.1} parent=1 // pred_check_branch
      %1520 = sbr.rel (0) target = $region65
    $region64: #{tpu_custom_call.1} parent=1 // pred_region
      %1522 = vsyncadd [#allocation4], 0
      %s1523 = sshll.u32 [#allocation14], 4
      %s1524 = int_to_ptr.vmem [resolvable:$true] %s1523
      %s1525 = sshll.u32 %s8, 4
      %s1526 = int_to_ptr.hbm [resolvable:$true] %s1525
      %1531 = dma.vmem_to_hbm [thread:$0]  %s1524, 256, %s1526, [#allocation4], 128, 128, 8
    $region65: #{tpu_custom_call.1} parent=1 // pred_fallthru
      _
    // Predicated region
    $region66: #{tpu_custom_call.1} parent=1 // pred_check
      _
    $region67: #{tpu_custom_call.1} parent=1 // pred_check_branch
      %1533 = sbr.rel (0) target = $region69
    $region68: #{tpu_custom_call.1} parent=1 // pred_region
      %1535 = dma.done [#allocation4], 256
    $region69: #{tpu_custom_call.1} parent=1 // pred_fallthru
      _
    %1536 = vsyncpa [#allocation3], 1
    %1537 = vsyncpa [#allocation6], 1
    %1538 = vsyncpa [#allocation9], 1
    %1539 = vsyncpa [#allocation12], 1
    %1540 = vsyncpa [#allocation4], 1

</llo_original>
